<compile_context>
chip_gen: v6e
topology: v6e:2x2x1
jax: 0.10.0
libtpu: 0.0.40
codegen_flags: <defaults>
</compile_context>

<pallas_src>
import jax
import jax.numpy as jnp
from jax import lax
from jax.experimental import pallas as pl
from jax.experimental.pallas import tpu as pltpu


def _round128(n):
    return ((n + 127) // 128) * 128


# ------------------------------ Pallas kernel ------------------------------ #
def _attn_rnn_decode_kernel(
    h_enc_ref,   # (B, N, A)     enc @ w_enc + b_enc   (t-invariant, precomputed)
    enc_ref,     # (B, N, Denc)  encoder_out
    hid0_ref,    # (B, A)        initial hidden
    gx_emb_ref,  # (T, B, 3A)    emb[ids] @ w_ih_emb + b_ih  (precomputed)
    wA_ref,      # (A, c0+c1+c2) 128-aligned slab [w_dec|w_hh | w_fc1 | w_fc3]
    w_ihc_ref,   # (Denc, 3A)    context part of w_ih
    bias_ref,    # (8, Wb)       rows: b_dec, b_hh, b_fc1, b_fc3, v_att, b_att
    logits_ref,  # (T, B, Vout)  output
    hidden_ref,  # (T, B, A)     output
    attw_ref,    # (T, B, N)     output
):
    B, N, A = h_enc_ref.shape
    Denc = enc_ref.shape[2]
    T = gx_emb_ref.shape[0]
    Vout = logits_ref.shape[2]
    c0 = _round128(4 * A)        # [w_dec | w_hh] block, lane-aligned
    c1 = _round128(A)            # w_fc1 block
    c2 = _round128(Vout)         # w_fc3 block

    # t-invariant operands, loaded once for the whole decode
    h_enc = h_enc_ref[...]
    enc = enc_ref[...]
    wA = wA_ref[...]
    w_ihc = w_ihc_ref[...]
    b_dec = bias_ref[0:1, 0:A]
    b_hh = bias_ref[1:2, 0:3 * A]
    b_fc1 = bias_ref[2:3, 0:A]
    b_fc3 = bias_ref[3:4, 0:Vout]
    v_att = bias_ref[4:5, 0:A].reshape(1, 1, A)
    b_att = bias_ref[5:6, 0:1]

    def step(t, hidden):
        # ---- Bahdanau attention (encoder projection precomputed outside) ----
        # fused hidden @ [w_dec | w_hh] in one 128-aligned MXU call
        hg = jnp.dot(hidden, wA[:, 0:c0], preferred_element_type=jnp.float32)
        h_dec = hg[:, 0:A] + b_dec                                   # (B, A)
        gh = hg[:, A:4 * A] + b_hh                                   # (B, 3A)

        att_h = jnp.tanh(h_enc + h_dec[:, None, :])                  # (B, N, A)
        scores = jnp.sum(att_h * v_att, axis=-1) + b_att             # (B, N)
        scores = scores - jnp.max(scores, axis=1, keepdims=True)
        e = jnp.exp(scores)
        attn_w = e * pl.reciprocal(jnp.sum(e, axis=1, keepdims=True),
                                   approx=False)                     # softmax over N
        context = jnp.einsum('bqn,bnd->bqd', attn_w.reshape(B, 1, N), enc,
                             preferred_element_type=jnp.float32
                             ).reshape(B, Denc)

        # ---- GRU cell (torch.nn.GRUCell gate order: r, z, n) ----------------
        gx = jnp.dot(context, w_ihc,
                     preferred_element_type=jnp.float32) + gx_emb_ref[t]
        r = jax.nn.sigmoid(gx[:, 0:A] + gh[:, 0:A])
        z = jax.nn.sigmoid(gx[:, A:2 * A] + gh[:, A:2 * A])
        n = jnp.tanh(gx[:, 2 * A:3 * A] + r * gh[:, 2 * A:3 * A])
        h_new = (1.0 - z) * n + z * hidden                           # (B, A)

        # ---- output head: fc1 -> ReLU -> Dropout(eval) -> fc3[level] --------
        f1 = jnp.dot(h_new, wA[:, c0:c0 + c1],
                     preferred_element_type=jnp.float32)
        f1 = jnp.maximum(f1[:, 0:A] + b_fc1, 0.0)
        lg = jnp.dot(f1, wA[:, c0 + c1:c0 + c1 + c2],
                     preferred_element_type=jnp.float32)
        logits = lg[:, 0:Vout] + b_fc3                               # (B, Vout)

        logits_ref[t] = logits
        hidden_ref[t] = h_new
        attw_ref[t] = attn_w
        return h_new

    if T <= 16:
        # small T: fully unrolled at trace time, hidden carried as a value
        h = hid0_ref[...]
        for t in range(T):
            h = step(t, h)
    else:
        # long decodes: compiled loop, hidden still carried as a value
        lax.fori_loop(0, T, step, hid0_ref[...], unroll=False)


# ------------------------------ param packing ------------------------------- #
def prepare_level_params(params, level, param_dtype=jnp.float32):
    """One-time packing of per-level weights into kernel-friendly slabs.

    Call this once per (params, level); its outputs are reused across decode
    calls so the concat / pad / .at[].set() work is not on the per-call path.
    """
    A = params["w_dec"].shape[0]
    Denc = params["w_enc"].shape[0]
    w_fc3, b_fc3 = params["fc3"][level]
    Vout = w_fc3.shape[1]
    c0, c1, c2 = _round128(4 * A), _round128(A), _round128(Vout)

    # 128-lane-aligned weight slab: [w_dec|w_hh (4A)] pad | [w_fc1 (A)] pad | [w_fc3 (Vout)] pad
    wA = jnp.zeros((A, c0 + c1 + c2), param_dtype)
    wA = wA.at[:, 0:A].set(params["w_dec"].astype(param_dtype))
    wA = wA.at[:, A:4 * A].set(params["w_hh"].astype(param_dtype))
    wA = wA.at[:, c0:c0 + A].set(params["w_fc1"].astype(param_dtype))
    wA = wA.at[:, c0 + c1:c0 + c1 + Vout].set(w_fc3.astype(param_dtype))

    Wb = _round128(max(3 * A, A, Vout))
    bias = jnp.zeros((8, Wb), jnp.float32)
    bias = bias.at[0, :A].set(params["b_dec"][0])
    bias = bias.at[1, :3 * A].set(params["b_hh"][0])
    bias = bias.at[2, :A].set(params["b_fc1"][0])
    bias = bias.at[3, :Vout].set(b_fc3[0])
    bias = bias.at[4, :A].set(params["v_att"][:, 0])
    bias = bias.at[5, 0].set(params["b_att"][0, 0])

    return {
        "A": A, "Denc": Denc, "Vout": Vout,
        "wA": wA,
        "w_ih_ctx": params["w_ih"][:Denc, :].astype(param_dtype),
        "w_ih_emb": params["w_ih"][Denc:, :],   # used by XLA precompute only
        "b_ih": params["b_ih"],                 # folded into gx_emb precompute
        "w_enc": params["w_enc"],               # used by XLA precompute only
        "b_enc": params["b_enc"],
        "emb_tab": params["embedding"][level],  # never enters the kernel
        "bias": bias,
    }


# ------------------------------ wrapper ------------------------------------ #
def attn_rnn_levelwise_decode(x_ids_seq, encoder_out, hidden0, prep):
    """Run T steps of AttnRNNLevelWise.forward inside ONE Pallas call.

    x_ids_seq: (T, B) int32 token ids.  `prep` comes from prepare_level_params.
    Returns (logits, hiddens, attn_weights), each with a leading T axis.
    """
    T, B = x_ids_seq.shape
    _, N, Denc = encoder_out.shape
    A, Vout = prep["A"], prep["Vout"]

    # t-invariant encoder projection: once per decode, plain XLA matmul
    h_enc = (encoder_out @ prep["w_enc"] + prep["b_enc"]).astype(jnp.float32)   # (B,N,A)

    # per-step embedding contribution (ids known before launch); clamping XLA gather
    emb = prep["emb_tab"][x_ids_seq.astype(jnp.int32)]                          # (T,B,E)
    gx_emb = (emb @ prep["w_ih_emb"] + prep["b_ih"]).astype(jnp.float32)        # (T,B,3A)

    grid_spec = pltpu.PrefetchScalarGridSpec(
        num_scalar_prefetch=0,
        grid=(1,),
        in_specs=[
            pl.BlockSpec((B, N, A), lambda i: (0, 0, 0)),        # h_enc (resident)
            pl.BlockSpec((B, N, Denc), lambda i: (0, 0, 0)),     # encoder_out
            pl.BlockSpec((B, A), lambda i: (0, 0)),              # hidden0
            pl.BlockSpec((T, B, 3 * A), lambda i: (0, 0, 0)),    # gx_emb
            pl.BlockSpec(prep["wA"].shape, lambda i: (0, 0)),    # packed weight slab
            pl.BlockSpec((Denc, 3 * A), lambda i: (0, 0)),       # w_ih (context part)
            pl.BlockSpec(prep["bias"].shape, lambda i: (0, 0)),  # bias slab
        ],
        out_specs=[
            pl.BlockSpec((T, B, Vout), lambda i: (0, 0, 0)),
            pl.BlockSpec((T, B, A), lambda i: (0, 0, 0)),
            pl.BlockSpec((T, B, N), lambda i: (0, 0, 0)),
        ],
    )

    logits, hiddens, attw = pl.pallas_call(
        _attn_rnn_decode_kernel,
        grid_spec=grid_spec,
        out_shape=(
            jax.ShapeDtypeStruct((T, B, Vout), jnp.float32),
            jax.ShapeDtypeStruct((T, B, A), jnp.float32),
            jax.ShapeDtypeStruct((T, B, N), jnp.float32),
        ),
        compiler_params=pltpu.CompilerParams(dimension_semantics=("arbitrary",)),
    )(h_enc, encoder_out.astype(jnp.float32), hidden0.astype(jnp.float32),
      gx_emb, prep["wA"], prep["w_ih_ctx"], prep["bias"])
    return logits, hiddens, attw


def attn_rnn_levelwise(x_ids, encoder_out, hidden, prep):
    """Single-step interface matching AttnRNNLevelWise.forward."""
    logits, hiddens, attw = attn_rnn_levelwise_decode(
        x_ids.reshape(1, -1), encoder_out, hidden, prep)
    return logits[0], hiddens[0], attw[0]


# ------------------------------ reference ----------------------------------- #
def reference_step(x_ids, enc, hidden, params, level):
    A = hidden.shape[1]
    h_enc = enc @ params["w_enc"] + params["b_enc"]
    h_dec = hidden @ params["w_dec"] + params["b_dec"]
    att_h = jnp.tanh(h_enc + h_dec[:, None, :])
    scores = (att_h @ params["v_att"] + params["b_att"])[..., 0]
    w = jax.nn.softmax(scores, axis=1)
    context = jnp.sum(enc * w[:, :, None], axis=1)
    emb = params["embedding"][level][x_ids]
    xc = jnp.concatenate([context, emb], axis=1)
    gx = xc @ params["w_ih"] + params["b_ih"]
    gh = hidden @ params["w_hh"] + params["b_hh"]
    r = jax.nn.sigmoid(gx[:, :A] + gh[:, :A])
    z = jax.nn.sigmoid(gx[:, A:2 * A] + gh[:, A:2 * A])
    n = jnp.tanh(gx[:, 2 * A:] + r * gh[:, 2 * A:])
    h_new = (1.0 - z) * n + z * hidden
    w_fc3, b_fc3 = params["fc3"][level]
    f1 = jnp.maximum(h_new @ params["w_fc1"] + params["b_fc1"], 0.0)
    logits = f1 @ w_fc3 + b_fc3
    return logits, h_new, w


def reference_decode(ids_TB, enc, hidden0, params, level):
    h = hidden0
    lg_l, h_l, w_l = [], [], []
    for t in range(ids_TB.shape[0]):
        lg, h, w = reference_step(ids_TB[t], enc, h, params, level)
        lg_l.append(lg); h_l.append(h); w_l.append(w)
    return jnp.stack(lg_l), jnp.stack(h_l), jnp.stack(w_l)


# ------------------------------ param init ---------------------------------- #
def make_params(key, embedding_size, E, A, Denc, vocab_sizes):
    def nxt():
        nonlocal key
        key, sub = jax.random.split(key)
        return sub

    def rnd(shape, scale=0.1):
        return (scale * jax.random.normal(nxt(), shape)).astype(jnp.float32)

    return {
        "embedding": [rnd((embedding_size, E)) for _ in vocab_sizes],
        "w_enc": rnd((Denc, A)), "b_enc": rnd((1, A)),
        "w_dec": rnd((A, A)),    "b_dec": rnd((1, A)),
        "v_att": rnd((A, 1)),    "b_att": rnd((1, 1)),
        "w_ih": rnd((Denc + E, 3 * A)), "b_ih": rnd((1, 3 * A)),
        "w_hh": rnd((A, 3 * A)),        "b_hh": rnd((1, 3 * A)),
        "w_fc1": rnd((A, A)),    "b_fc1": rnd((1, A)),
        "fc3": [(rnd((A, v)), rnd((1, v))) for v in vocab_sizes],
    }


# ------------------------------ main ---------------------------------------- #
if __name__ == "__main__":
    B, N, Denc, A, E = 2, 16, 32, 32, 16
    embedding_size = 20
    vocab_sizes = [20, 24]
    level = 1
    T = 4

    key = jax.random.PRNGKey(0)
    k_ids, k_enc, k_hid, k_par = jax.random.split(key, 4)

    x_ids = jax.random.randint(k_ids, (T, B), 0, embedding_size, dtype=jnp.int32)
    encoder_out = jax.random.normal(k_enc, (B, N, Denc), dtype=jnp.float32)
    hidden0 = jax.random.normal(k_hid, (B, A), dtype=jnp.float32)
    params = make_params(k_par, embedding_size, E, A, Denc, vocab_sizes)

    # one-time weight packing (hoisted out of the per-call path)
    prep = prepare_level_params(params, level)

    # multi-step decode (whole timestep loop inside one pallas_call)
    logits, hiddens, attw = attn_rnn_levelwise_decode(x_ids, encoder_out, hidden0, prep)
    jax.block_until_ready((logits, hiddens, attw))

    ref_logits, ref_hiddens, ref_w = reference_decode(
        x_ids, encoder_out, hidden0, params, level)
    assert jnp.allclose(logits, ref_logits, atol=2e-4, rtol=2e-4)
    assert jnp.allclose(hiddens, ref_hiddens, atol=2e-4, rtol=2e-4)
    assert jnp.allclose(attw, ref_w, atol=2e-4, rtol=2e-4)

    # single-step interface (matches the PyTorch module's forward signature)
    lg1, h1, w1 = attn_rnn_levelwise(x_ids[0], encoder_out, hidden0, prep)
    jax.block_until_ready((lg1, h1, w1))
    r_lg1, r_h1, r_w1 = reference_step(x_ids[0], encoder_out, hidden0, params, level)
    assert jnp.allclose(lg1, r_lg1, atol=2e-4, rtol=2e-4)
    assert jnp.allclose(h1, r_h1, atol=2e-4, rtol=2e-4)
    assert jnp.allclose(w1, r_w1, atol=2e-4, rtol=2e-4)

    print("KERNEL_OK")
</pallas_src>

<mosaic_0001>
module attributes {stable_mosaic.version = 11 : i64} {
  func.func @_attn_rnn_decode_kernel(%arg0: i32, %arg1: memref<2x16x32xf32, #tpu.memory_space<vmem>>, %arg2: memref<2x16x32xf32, #tpu.memory_space<vmem>>, %arg3: memref<2x32xf32, #tpu.memory_space<vmem>>, %arg4: memref<4x2x96xf32, #tpu.memory_space<vmem>>, %arg5: memref<32x384xf32, #tpu.memory_space<vmem>>, %arg6: memref<32x96xf32, #tpu.memory_space<vmem>>, %arg7: memref<8x128xf32, #tpu.memory_space<vmem>>, %arg8: memref<4x2x24xf32, #tpu.memory_space<vmem>>, %arg9: memref<4x2x32xf32, #tpu.memory_space<vmem>>, %arg10: memref<4x2x16xf32, #tpu.memory_space<vmem>>) attributes {dimension_semantics = [#tpu.dimension_semantics<arbitrary>], iteration_bounds = array<i64: 1>, scalar_prefetch = 0 : i64, scratch_operands = 0 : i64, tpu.core_type = #tpu.core_type<tc>, window_params = [{pipeline_mode = #tpu.pipeline_mode<synchronous>, transform_indices = @transform_0, window_bounds = array<i64: 2, 16, 32>}, {pipeline_mode = #tpu.pipeline_mode<synchronous>, transform_indices = @transform_1, window_bounds = array<i64: 2, 16, 32>}, {pipeline_mode = #tpu.pipeline_mode<synchronous>, transform_indices = @transform_2, window_bounds = array<i64: 2, 32>}, {pipeline_mode = #tpu.pipeline_mode<synchronous>, transform_indices = @transform_3, window_bounds = array<i64: 4, 2, 96>}, {pipeline_mode = #tpu.pipeline_mode<synchronous>, transform_indices = @transform_4, window_bounds = array<i64: 32, 384>}, {pipeline_mode = #tpu.pipeline_mode<synchronous>, transform_indices = @transform_5, window_bounds = array<i64: 32, 96>}, {pipeline_mode = #tpu.pipeline_mode<synchronous>, transform_indices = @transform_6, window_bounds = array<i64: 8, 128>}, {pipeline_mode = #tpu.pipeline_mode<synchronous>, transform_indices = @transform_7, window_bounds = array<i64: 4, 2, 24>}, {pipeline_mode = #tpu.pipeline_mode<synchronous>, transform_indices = @transform_8, window_bounds = array<i64: 4, 2, 32>}, {pipeline_mode = #tpu.pipeline_mode<synchronous>, transform_indices = @transform_9, window_bounds = array<i64: 4, 2, 16>}]} {
    %c0 = arith.constant 0 : index
    %c0_0 = arith.constant 0 : index
    %c0_1 = arith.constant 0 : index
    %0 = vector.load %arg1[%c0, %c0_0, %c0_1] : memref<2x16x32xf32, #tpu.memory_space<vmem>>, vector<2x16x32xf32>
    %c0_2 = arith.constant 0 : index
    %c0_3 = arith.constant 0 : index
    %c0_4 = arith.constant 0 : index
    %1 = vector.load %arg2[%c0_2, %c0_3, %c0_4] : memref<2x16x32xf32, #tpu.memory_space<vmem>>, vector<2x16x32xf32>
    %c0_5 = arith.constant 0 : index
    %c0_6 = arith.constant 0 : index
    %2 = vector.load %arg5[%c0_5, %c0_6] : memref<32x384xf32, #tpu.memory_space<vmem>>, vector<32x384xf32>
    %c0_7 = arith.constant 0 : index
    %c0_8 = arith.constant 0 : index
    %3 = vector.load %arg6[%c0_7, %c0_8] : memref<32x96xf32, #tpu.memory_space<vmem>>, vector<32x96xf32>
    %c0_9 = arith.constant 0 : index
    %c0_10 = arith.constant 0 : index
    %4 = vector.load %arg7[%c0_9, %c0_10] : memref<8x128xf32, #tpu.memory_space<vmem>>, vector<1x32xf32>
    %c1 = arith.constant 1 : index
    %c0_11 = arith.constant 0 : index
    %5 = vector.load %arg7[%c1, %c0_11] : memref<8x128xf32, #tpu.memory_space<vmem>>, vector<1x96xf32>
    %c2 = arith.constant 2 : index
    %c0_12 = arith.constant 0 : index
    %6 = vector.load %arg7[%c2, %c0_12] : memref<8x128xf32, #tpu.memory_space<vmem>>, vector<1x32xf32>
    %c3 = arith.constant 3 : index
    %c0_13 = arith.constant 0 : index
    %7 = vector.load %arg7[%c3, %c0_13] : memref<8x128xf32, #tpu.memory_space<vmem>>, vector<1x24xf32>
    %c4 = arith.constant 4 : index
    %c0_14 = arith.constant 0 : index
    %8 = vector.load %arg7[%c4, %c0_14] : memref<8x128xf32, #tpu.memory_space<vmem>>, vector<1x32xf32>
    %9 = vector.shape_cast %8 : vector<1x32xf32> to vector<1x1x32xf32>
    %c5 = arith.constant 5 : index
    %c0_15 = arith.constant 0 : index
    %10 = vector.load %arg7[%c5, %c0_15] : memref<8x128xf32, #tpu.memory_space<vmem>>, vector<1x1xf32>
    %c0_16 = arith.constant 0 : index
    %c0_17 = arith.constant 0 : index
    %11 = vector.load %arg3[%c0_16, %c0_17] : memref<2x32xf32, #tpu.memory_space<vmem>>, vector<2x32xf32>
    %12 = vector.extract_strided_slice %2 {offsets = [0, 0], sizes = [32, 128], strides = [1, 1]} : vector<32x384xf32> to vector<32x128xf32>
    %cst = arith.constant dense<0.000000e+00> : vector<2x128xf32>
    %13 = tpu.matmul %11, %12, %cst {dimension_numbers = #tpu.dot_dimension_numbers<[1], [0], [0], [1], [0, 0, 1, 1], [], []>} : vector<2x32xf32>, vector<32x128xf32>, vector<2x128xf32> -> vector<2x128xf32>
    %14 = vector.extract_strided_slice %13 {offsets = [0, 0], sizes = [2, 32], strides = [1, 1]} : vector<2x128xf32> to vector<2x32xf32>
    %15 = vector.broadcast %4 : vector<1x32xf32> to vector<2x32xf32>
    %16 = arith.addf %14, %15 : vector<2x32xf32>
    %17 = vector.extract_strided_slice %13 {offsets = [0, 32], sizes = [2, 96], strides = [1, 1]} : vector<2x128xf32> to vector<2x96xf32>
    %18 = vector.broadcast %5 : vector<1x96xf32> to vector<2x96xf32>
    %19 = arith.addf %17, %18 : vector<2x96xf32>
    %20 = vector.shape_cast %16 : vector<2x32xf32> to vector<2x1x32xf32>
    %21 = vector.broadcast %20 : vector<2x1x32xf32> to vector<2x16x32xf32>
    %22 = arith.addf %0, %21 : vector<2x16x32xf32>
    %23 = math.tanh %22 : vector<2x16x32xf32>
    %24 = vector.broadcast %9 : vector<1x1x32xf32> to vector<2x16x32xf32>
    %25 = arith.mulf %23, %24 : vector<2x16x32xf32>
    %cst_18 = arith.constant dense<0.000000e+00> : vector<2x16xf32>
    %26 = vector.multi_reduction <add>, %25, %cst_18 [2] : vector<2x16x32xf32> to vector<2x16xf32>
    %27 = vector.broadcast %10 : vector<1x1xf32> to vector<2x16xf32>
    %28 = arith.addf %26, %27 : vector<2x16xf32>
    %cst_19 = arith.constant dense<0xFF800000> : vector<2xf32>
    %29 = vector.multi_reduction <maximumf>, %28, %cst_19 [1] : vector<2x16xf32> to vector<2xf32>
    %30 = vector.shape_cast %29 : vector<2xf32> to vector<2x1xf32>
    %31 = vector.broadcast %30 : vector<2x1xf32> to vector<2x16xf32>
    %32 = arith.subf %28, %31 : vector<2x16xf32>
    %33 = math.exp %32 : vector<2x16xf32>
    %cst_20 = arith.constant dense<0.000000e+00> : vector<2xf32>
    %34 = vector.multi_reduction <add>, %33, %cst_20 [1] : vector<2x16xf32> to vector<2xf32>
    %35 = vector.shape_cast %34 : vector<2xf32> to vector<2x1xf32>
    %36 = tpu.reciprocal %35 : vector<2x1xf32> -> vector<2x1xf32>
    %37 = vector.broadcast %36 : vector<2x1xf32> to vector<2x16xf32>
    %38 = arith.mulf %33, %37 : vector<2x16xf32>
    %39 = vector.shape_cast %38 : vector<2x16xf32> to vector<2x1x16xf32>
    "tpu.trace_start"() <{level = 10 : i32, message = "bqn,bnd->bqd"}> : () -> ()
    %cst_21 = arith.constant dense<0.000000e+00> : vector<2x1x32xf32>
    %40 = tpu.matmul %39, %1, %cst_21 {dimension_numbers = #tpu.dot_dimension_numbers<[2], [1], [1], [2], [0, 0, 0, 1, 1, 2], [0], [0]>} : vector<2x1x16xf32>, vector<2x16x32xf32>, vector<2x1x32xf32> -> vector<2x1x32xf32>
    "tpu.trace_stop"() : () -> ()
    %41 = vector.shape_cast %40 : vector<2x1x32xf32> to vector<2x32xf32>
    %cst_22 = arith.constant dense<0.000000e+00> : vector<2x96xf32>
    %42 = tpu.matmul %41, %3, %cst_22 {dimension_numbers = #tpu.dot_dimension_numbers<[1], [0], [0], [1], [0, 0, 1, 1], [], []>} : vector<2x32xf32>, vector<32x96xf32>, vector<2x96xf32> -> vector<2x96xf32>
    %c0_23 = arith.constant 0 : index
    %c0_24 = arith.constant 0 : index
    %c0_25 = arith.constant 0 : index
    %43 = vector.load %arg4[%c0_23, %c0_24, %c0_25] : memref<4x2x96xf32, #tpu.memory_space<vmem>>, vector<1x2x96xf32>
    %44 = vector.shape_cast %43 : vector<1x2x96xf32> to vector<2x96xf32>
    %45 = arith.addf %42, %44 : vector<2x96xf32>
    %46 = vector.extract_strided_slice %45 {offsets = [0, 0], sizes = [2, 32], strides = [1, 1]} : vector<2x96xf32> to vector<2x32xf32>
    %47 = vector.extract_strided_slice %19 {offsets = [0, 0], sizes = [2, 32], strides = [1, 1]} : vector<2x96xf32> to vector<2x32xf32>
    %48 = arith.addf %46, %47 : vector<2x32xf32>
    %49 = arith.negf %48 : vector<2x32xf32>
    %50 = math.exp %49 : vector<2x32xf32>
    %cst_26 = arith.constant 1.000000e+00 : f32
    %51 = vector.broadcast %cst_26 : f32 to vector<2x32xf32>
    %52 = arith.addf %51, %50 : vector<2x32xf32>
    %53 = arith.divf %51, %52 : vector<2x32xf32>
    %54 = vector.extract_strided_slice %45 {offsets = [0, 32], sizes = [2, 32], strides = [1, 1]} : vector<2x96xf32> to vector<2x32xf32>
    %55 = vector.extract_strided_slice %19 {offsets = [0, 32], sizes = [2, 32], strides = [1, 1]} : vector<2x96xf32> to vector<2x32xf32>
    %56 = arith.addf %54, %55 : vector<2x32xf32>
    %57 = arith.negf %56 : vector<2x32xf32>
    %58 = math.exp %57 : vector<2x32xf32>
    %cst_27 = arith.constant 1.000000e+00 : f32
    %59 = vector.broadcast %cst_27 : f32 to vector<2x32xf32>
    %60 = arith.addf %59, %58 : vector<2x32xf32>
    %61 = arith.divf %59, %60 : vector<2x32xf32>
    %62 = vector.extract_strided_slice %45 {offsets = [0, 64], sizes = [2, 32], strides = [1, 1]} : vector<2x96xf32> to vector<2x32xf32>
    %63 = vector.extract_strided_slice %19 {offsets = [0, 64], sizes = [2, 32], strides = [1, 1]} : vector<2x96xf32> to vector<2x32xf32>
    %64 = arith.mulf %53, %63 : vector<2x32xf32>
    %65 = arith.addf %62, %64 : vector<2x32xf32>
    %66 = math.tanh %65 : vector<2x32xf32>
    %cst_28 = arith.constant 1.000000e+00 : f32
    %67 = vector.broadcast %cst_28 : f32 to vector<2x32xf32>
    %68 = arith.subf %67, %61 : vector<2x32xf32>
    %69 = arith.mulf %68, %66 : vector<2x32xf32>
    %70 = arith.mulf %61, %11 : vector<2x32xf32>
    %71 = arith.addf %69, %70 : vector<2x32xf32>
    %72 = vector.extract_strided_slice %2 {offsets = [0, 128], sizes = [32, 128], strides = [1, 1]} : vector<32x384xf32> to vector<32x128xf32>
    %cst_29 = arith.constant dense<0.000000e+00> : vector<2x128xf32>
    %73 = tpu.matmul %71, %72, %cst_29 {dimension_numbers = #tpu.dot_dimension_numbers<[1], [0], [0], [1], [0, 0, 1, 1], [], []>} : vector<2x32xf32>, vector<32x128xf32>, vector<2x128xf32> -> vector<2x128xf32>
    %74 = vector.extract_strided_slice %73 {offsets = [0, 0], sizes = [2, 32], strides = [1, 1]} : vector<2x128xf32> to vector<2x32xf32>
    %75 = vector.broadcast %6 : vector<1x32xf32> to vector<2x32xf32>
    %76 = arith.addf %74, %75 : vector<2x32xf32>
    %cst_30 = arith.constant 0.000000e+00 : f32
    %77 = vector.broadcast %cst_30 : f32 to vector<2x32xf32>
    %78 = arith.maximumf %76, %77 : vector<2x32xf32>
    %79 = vector.extract_strided_slice %2 {offsets = [0, 256], sizes = [32, 128], strides = [1, 1]} : vector<32x384xf32> to vector<32x128xf32>
    %cst_31 = arith.constant dense<0.000000e+00> : vector<2x128xf32>
    %80 = tpu.matmul %78, %79, %cst_31 {dimension_numbers = #tpu.dot_dimension_numbers<[1], [0], [0], [1], [0, 0, 1, 1], [], []>} : vector<2x32xf32>, vector<32x128xf32>, vector<2x128xf32> -> vector<2x128xf32>
    %81 = vector.extract_strided_slice %80 {offsets = [0, 0], sizes = [2, 24], strides = [1, 1]} : vector<2x128xf32> to vector<2x24xf32>
    %82 = vector.broadcast %7 : vector<1x24xf32> to vector<2x24xf32>
    %83 = arith.addf %81, %82 : vector<2x24xf32>
    %c0_32 = arith.constant 0 : index
    %c0_33 = arith.constant 0 : index
    %c0_34 = arith.constant 0 : index
    %84 = vector.load %arg8[%c0_32, %c0_33, %c0_34] : memref<4x2x24xf32, #tpu.memory_space<vmem>>, vector<1x2x24xf32>
    %85 = vector.shape_cast %84 : vector<1x2x24xf32> to vector<2x24xf32>
    %86 = vector.shape_cast %83 : vector<2x24xf32> to vector<1x2x24xf32>
    tpu.vector_store %arg8[%c0_32, %c0_33, %c0_34], %86 {strides = array<i32>} : memref<4x2x24xf32, #tpu.memory_space<vmem>>, vector<1x2x24xf32>,
    %c0_35 = arith.constant 0 : index
    %c0_36 = arith.constant 0 : index
    %c0_37 = arith.constant 0 : index
    %87 = vector.load %arg9[%c0_35, %c0_36, %c0_37] : memref<4x2x32xf32, #tpu.memory_space<vmem>>, vector<1x2x32xf32>
    %88 = vector.shape_cast %87 : vector<1x2x32xf32> to vector<2x32xf32>
    %89 = vector.shape_cast %71 : vector<2x32xf32> to vector<1x2x32xf32>
    tpu.vector_store %arg9[%c0_35, %c0_36, %c0_37], %89 {strides = array<i32>} : memref<4x2x32xf32, #tpu.memory_space<vmem>>, vector<1x2x32xf32>,
    %c0_38 = arith.constant 0 : index
    %c0_39 = arith.constant 0 : index
    %c0_40 = arith.constant 0 : index
    %90 = vector.load %arg10[%c0_38, %c0_39, %c0_40] : memref<4x2x16xf32, #tpu.memory_space<vmem>>, vector<1x2x16xf32>
    %91 = vector.shape_cast %90 : vector<1x2x16xf32> to vector<2x16xf32>
    %92 = vector.shape_cast %38 : vector<2x16xf32> to vector<1x2x16xf32>
    tpu.vector_store %arg10[%c0_38, %c0_39, %c0_40], %92 {strides = array<i32>} : memref<4x2x16xf32, #tpu.memory_space<vmem>>, vector<1x2x16xf32>,
    %93 = vector.extract_strided_slice %2 {offsets = [0, 0], sizes = [32, 128], strides = [1, 1]} : vector<32x384xf32> to vector<32x128xf32>
    %cst_41 = arith.constant dense<0.000000e+00> : vector<2x128xf32>
    %94 = tpu.matmul %71, %93, %cst_41 {dimension_numbers = #tpu.dot_dimension_numbers<[1], [0], [0], [1], [0, 0, 1, 1], [], []>} : vector<2x32xf32>, vector<32x128xf32>, vector<2x128xf32> -> vector<2x128xf32>
    %95 = vector.extract_strided_slice %94 {offsets = [0, 0], sizes = [2, 32], strides = [1, 1]} : vector<2x128xf32> to vector<2x32xf32>
    %96 = vector.broadcast %4 : vector<1x32xf32> to vector<2x32xf32>
    %97 = arith.addf %95, %96 : vector<2x32xf32>
    %98 = vector.extract_strided_slice %94 {offsets = [0, 32], sizes = [2, 96], strides = [1, 1]} : vector<2x128xf32> to vector<2x96xf32>
    %99 = vector.broadcast %5 : vector<1x96xf32> to vector<2x96xf32>
    %100 = arith.addf %98, %99 : vector<2x96xf32>
    %101 = vector.shape_cast %97 : vector<2x32xf32> to vector<2x1x32xf32>
    %102 = vector.broadcast %101 : vector<2x1x32xf32> to vector<2x16x32xf32>
    %103 = arith.addf %0, %102 : vector<2x16x32xf32>
    %104 = math.tanh %103 : vector<2x16x32xf32>
    %105 = vector.broadcast %9 : vector<1x1x32xf32> to vector<2x16x32xf32>
    %106 = arith.mulf %104, %105 : vector<2x16x32xf32>
    %cst_42 = arith.constant dense<0.000000e+00> : vector<2x16xf32>
    %107 = vector.multi_reduction <add>, %106, %cst_42 [2] : vector<2x16x32xf32> to vector<2x16xf32>
    %108 = vector.broadcast %10 : vector<1x1xf32> to vector<2x16xf32>
    %109 = arith.addf %107, %108 : vector<2x16xf32>
    %cst_43 = arith.constant dense<0xFF800000> : vector<2xf32>
    %110 = vector.multi_reduction <maximumf>, %109, %cst_43 [1] : vector<2x16xf32> to vector<2xf32>
    %111 = vector.shape_cast %110 : vector<2xf32> to vector<2x1xf32>
    %112 = vector.broadcast %111 : vector<2x1xf32> to vector<2x16xf32>
    %113 = arith.subf %109, %112 : vector<2x16xf32>
    %114 = math.exp %113 : vector<2x16xf32>
    %cst_44 = arith.constant dense<0.000000e+00> : vector<2xf32>
    %115 = vector.multi_reduction <add>, %114, %cst_44 [1] : vector<2x16xf32> to vector<2xf32>
    %116 = vector.shape_cast %115 : vector<2xf32> to vector<2x1xf32>
    %117 = tpu.reciprocal %116 : vector<2x1xf32> -> vector<2x1xf32>
    %118 = vector.broadcast %117 : vector<2x1xf32> to vector<2x16xf32>
    %119 = arith.mulf %114, %118 : vector<2x16xf32>
    %120 = vector.shape_cast %119 : vector<2x16xf32> to vector<2x1x16xf32>
    "tpu.trace_start"() <{level = 10 : i32, message = "bqn,bnd->bqd"}> : () -> ()
    %cst_45 = arith.constant dense<0.000000e+00> : vector<2x1x32xf32>
    %121 = tpu.matmul %120, %1, %cst_45 {dimension_numbers = #tpu.dot_dimension_numbers<[2], [1], [1], [2], [0, 0, 0, 1, 1, 2], [0], [0]>} : vector<2x1x16xf32>, vector<2x16x32xf32>, vector<2x1x32xf32> -> vector<2x1x32xf32>
    "tpu.trace_stop"() : () -> ()
    %122 = vector.shape_cast %121 : vector<2x1x32xf32> to vector<2x32xf32>
    %cst_46 = arith.constant dense<0.000000e+00> : vector<2x96xf32>
    %123 = tpu.matmul %122, %3, %cst_46 {dimension_numbers = #tpu.dot_dimension_numbers<[1], [0], [0], [1], [0, 0, 1, 1], [], []>} : vector<2x32xf32>, vector<32x96xf32>, vector<2x96xf32> -> vector<2x96xf32>
    %c1_47 = arith.constant 1 : index
    %c0_48 = arith.constant 0 : index
    %c0_49 = arith.constant 0 : index
    %124 = vector.load %arg4[%c1_47, %c0_48, %c0_49] : memref<4x2x96xf32, #tpu.memory_space<vmem>>, vector<1x2x96xf32>
    %125 = vector.shape_cast %124 : vector<1x2x96xf32> to vector<2x96xf32>
    %126 = arith.addf %123, %125 : vector<2x96xf32>
    %127 = vector.extract_strided_slice %126 {offsets = [0, 0], sizes = [2, 32], strides = [1, 1]} : vector<2x96xf32> to vector<2x32xf32>
    %128 = vector.extract_strided_slice %100 {offsets = [0, 0], sizes = [2, 32], strides = [1, 1]} : vector<2x96xf32> to vector<2x32xf32>
    %129 = arith.addf %127, %128 : vector<2x32xf32>
    %130 = arith.negf %129 : vector<2x32xf32>
    %131 = math.exp %130 : vector<2x32xf32>
    %cst_50 = arith.constant 1.000000e+00 : f32
    %132 = vector.broadcast %cst_50 : f32 to vector<2x32xf32>
    %133 = arith.addf %132, %131 : vector<2x32xf32>
    %134 = arith.divf %132, %133 : vector<2x32xf32>
    %135 = vector.extract_strided_slice %126 {offsets = [0, 32], sizes = [2, 32], strides = [1, 1]} : vector<2x96xf32> to vector<2x32xf32>
    %136 = vector.extract_strided_slice %100 {offsets = [0, 32], sizes = [2, 32], strides = [1, 1]} : vector<2x96xf32> to vector<2x32xf32>
    %137 = arith.addf %135, %136 : vector<2x32xf32>
    %138 = arith.negf %137 : vector<2x32xf32>
    %139 = math.exp %138 : vector<2x32xf32>
    %cst_51 = arith.constant 1.000000e+00 : f32
    %140 = vector.broadcast %cst_51 : f32 to vector<2x32xf32>
    %141 = arith.addf %140, %139 : vector<2x32xf32>
    %142 = arith.divf %140, %141 : vector<2x32xf32>
    %143 = vector.extract_strided_slice %126 {offsets = [0, 64], sizes = [2, 32], strides = [1, 1]} : vector<2x96xf32> to vector<2x32xf32>
    %144 = vector.extract_strided_slice %100 {offsets = [0, 64], sizes = [2, 32], strides = [1, 1]} : vector<2x96xf32> to vector<2x32xf32>
    %145 = arith.mulf %134, %144 : vector<2x32xf32>
    %146 = arith.addf %143, %145 : vector<2x32xf32>
    %147 = math.tanh %146 : vector<2x32xf32>
    %cst_52 = arith.constant 1.000000e+00 : f32
    %148 = vector.broadcast %cst_52 : f32 to vector<2x32xf32>
    %149 = arith.subf %148, %142 : vector<2x32xf32>
    %150 = arith.mulf %149, %147 : vector<2x32xf32>
    %151 = arith.mulf %142, %71 : vector<2x32xf32>
    %152 = arith.addf %150, %151 : vector<2x32xf32>
    %153 = vector.extract_strided_slice %2 {offsets = [0, 128], sizes = [32, 128], strides = [1, 1]} : vector<32x384xf32> to vector<32x128xf32>
    %cst_53 = arith.constant dense<0.000000e+00> : vector<2x128xf32>
    %154 = tpu.matmul %152, %153, %cst_53 {dimension_numbers = #tpu.dot_dimension_numbers<[1], [0], [0], [1], [0, 0, 1, 1], [], []>} : vector<2x32xf32>, vector<32x128xf32>, vector<2x128xf32> -> vector<2x128xf32>
    %155 = vector.extract_strided_slice %154 {offsets = [0, 0], sizes = [2, 32], strides = [1, 1]} : vector<2x128xf32> to vector<2x32xf32>
    %156 = vector.broadcast %6 : vector<1x32xf32> to vector<2x32xf32>
    %157 = arith.addf %155, %156 : vector<2x32xf32>
    %cst_54 = arith.constant 0.000000e+00 : f32
    %158 = vector.broadcast %cst_54 : f32 to vector<2x32xf32>
    %159 = arith.maximumf %157, %158 : vector<2x32xf32>
    %160 = vector.extract_strided_slice %2 {offsets = [0, 256], sizes = [32, 128], strides = [1, 1]} : vector<32x384xf32> to vector<32x128xf32>
    %cst_55 = arith.constant dense<0.000000e+00> : vector<2x128xf32>
    %161 = tpu.matmul %159, %160, %cst_55 {dimension_numbers = #tpu.dot_dimension_numbers<[1], [0], [0], [1], [0, 0, 1, 1], [], []>} : vector<2x32xf32>, vector<32x128xf32>, vector<2x128xf32> -> vector<2x128xf32>
    %162 = vector.extract_strided_slice %161 {offsets = [0, 0], sizes = [2, 24], strides = [1, 1]} : vector<2x128xf32> to vector<2x24xf32>
    %163 = vector.broadcast %7 : vector<1x24xf32> to vector<2x24xf32>
    %164 = arith.addf %162, %163 : vector<2x24xf32>
    %c1_56 = arith.constant 1 : index
    %c0_57 = arith.constant 0 : index
    %c0_58 = arith.constant 0 : index
    %165 = vector.load %arg8[%c1_56, %c0_57, %c0_58] : memref<4x2x24xf32, #tpu.memory_space<vmem>>, vector<1x2x24xf32>
    %166 = vector.shape_cast %165 : vector<1x2x24xf32> to vector<2x24xf32>
    %167 = vector.shape_cast %164 : vector<2x24xf32> to vector<1x2x24xf32>
    tpu.vector_store %arg8[%c1_56, %c0_57, %c0_58], %167 {strides = array<i32>} : memref<4x2x24xf32, #tpu.memory_space<vmem>>, vector<1x2x24xf32>,
    %c1_59 = arith.constant 1 : index
    %c0_60 = arith.constant 0 : index
    %c0_61 = arith.constant 0 : index
    %168 = vector.load %arg9[%c1_59, %c0_60, %c0_61] : memref<4x2x32xf32, #tpu.memory_space<vmem>>, vector<1x2x32xf32>
    %169 = vector.shape_cast %168 : vector<1x2x32xf32> to vector<2x32xf32>
    %170 = vector.shape_cast %152 : vector<2x32xf32> to vector<1x2x32xf32>
    tpu.vector_store %arg9[%c1_59, %c0_60, %c0_61], %170 {strides = array<i32>} : memref<4x2x32xf32, #tpu.memory_space<vmem>>, vector<1x2x32xf32>,
    %c1_62 = arith.constant 1 : index
    %c0_63 = arith.constant 0 : index
    %c0_64 = arith.constant 0 : index
    %171 = vector.load %arg10[%c1_62, %c0_63, %c0_64] : memref<4x2x16xf32, #tpu.memory_space<vmem>>, vector<1x2x16xf32>
    %172 = vector.shape_cast %171 : vector<1x2x16xf32> to vector<2x16xf32>
    %173 = vector.shape_cast %119 : vector<2x16xf32> to vector<1x2x16xf32>
    tpu.vector_store %arg10[%c1_62, %c0_63, %c0_64], %173 {strides = array<i32>} : memref<4x2x16xf32, #tpu.memory_space<vmem>>, vector<1x2x16xf32>,
    %174 = vector.extract_strided_slice %2 {offsets = [0, 0], sizes = [32, 128], strides = [1, 1]} : vector<32x384xf32> to vector<32x128xf32>
    %cst_65 = arith.constant dense<0.000000e+00> : vector<2x128xf32>
    %175 = tpu.matmul %152, %174, %cst_65 {dimension_numbers = #tpu.dot_dimension_numbers<[1], [0], [0], [1], [0, 0, 1, 1], [], []>} : vector<2x32xf32>, vector<32x128xf32>, vector<2x128xf32> -> vector<2x128xf32>
    %176 = vector.extract_strided_slice %175 {offsets = [0, 0], sizes = [2, 32], strides = [1, 1]} : vector<2x128xf32> to vector<2x32xf32>
    %177 = vector.broadcast %4 : vector<1x32xf32> to vector<2x32xf32>
    %178 = arith.addf %176, %177 : vector<2x32xf32>
    %179 = vector.extract_strided_slice %175 {offsets = [0, 32], sizes = [2, 96], strides = [1, 1]} : vector<2x128xf32> to vector<2x96xf32>
    %180 = vector.broadcast %5 : vector<1x96xf32> to vector<2x96xf32>
    %181 = arith.addf %179, %180 : vector<2x96xf32>
    %182 = vector.shape_cast %178 : vector<2x32xf32> to vector<2x1x32xf32>
    %183 = vector.broadcast %182 : vector<2x1x32xf32> to vector<2x16x32xf32>
    %184 = arith.addf %0, %183 : vector<2x16x32xf32>
    %185 = math.tanh %184 : vector<2x16x32xf32>
    %186 = vector.broadcast %9 : vector<1x1x32xf32> to vector<2x16x32xf32>
    %187 = arith.mulf %185, %186 : vector<2x16x32xf32>
    %cst_66 = arith.constant dense<0.000000e+00> : vector<2x16xf32>
    %188 = vector.multi_reduction <add>, %187, %cst_66 [2] : vector<2x16x32xf32> to vector<2x16xf32>
    %189 = vector.broadcast %10 : vector<1x1xf32> to vector<2x16xf32>
    %190 = arith.addf %188, %189 : vector<2x16xf32>
    %cst_67 = arith.constant dense<0xFF800000> : vector<2xf32>
    %191 = vector.multi_reduction <maximumf>, %190, %cst_67 [1] : vector<2x16xf32> to vector<2xf32>
    %192 = vector.shape_cast %191 : vector<2xf32> to vector<2x1xf32>
    %193 = vector.broadcast %192 : vector<2x1xf32> to vector<2x16xf32>
    %194 = arith.subf %190, %193 : vector<2x16xf32>
    %195 = math.exp %194 : vector<2x16xf32>
    %cst_68 = arith.constant dense<0.000000e+00> : vector<2xf32>
    %196 = vector.multi_reduction <add>, %195, %cst_68 [1] : vector<2x16xf32> to vector<2xf32>
    %197 = vector.shape_cast %196 : vector<2xf32> to vector<2x1xf32>
    %198 = tpu.reciprocal %197 : vector<2x1xf32> -> vector<2x1xf32>
    %199 = vector.broadcast %198 : vector<2x1xf32> to vector<2x16xf32>
    %200 = arith.mulf %195, %199 : vector<2x16xf32>
    %201 = vector.shape_cast %200 : vector<2x16xf32> to vector<2x1x16xf32>
    "tpu.trace_start"() <{level = 10 : i32, message = "bqn,bnd->bqd"}> : () -> ()
    %cst_69 = arith.constant dense<0.000000e+00> : vector<2x1x32xf32>
    %202 = tpu.matmul %201, %1, %cst_69 {dimension_numbers = #tpu.dot_dimension_numbers<[2], [1], [1], [2], [0, 0, 0, 1, 1, 2], [0], [0]>} : vector<2x1x16xf32>, vector<2x16x32xf32>, vector<2x1x32xf32> -> vector<2x1x32xf32>
    "tpu.trace_stop"() : () -> ()
    %203 = vector.shape_cast %202 : vector<2x1x32xf32> to vector<2x32xf32>
    %cst_70 = arith.constant dense<0.000000e+00> : vector<2x96xf32>
    %204 = tpu.matmul %203, %3, %cst_70 {dimension_numbers = #tpu.dot_dimension_numbers<[1], [0], [0], [1], [0, 0, 1, 1], [], []>} : vector<2x32xf32>, vector<32x96xf32>, vector<2x96xf32> -> vector<2x96xf32>
    %c2_71 = arith.constant 2 : index
    %c0_72 = arith.constant 0 : index
    %c0_73 = arith.constant 0 : index
    %205 = vector.load %arg4[%c2_71, %c0_72, %c0_73] : memref<4x2x96xf32, #tpu.memory_space<vmem>>, vector<1x2x96xf32>
    %206 = vector.shape_cast %205 : vector<1x2x96xf32> to vector<2x96xf32>
    %207 = arith.addf %204, %206 : vector<2x96xf32>
    %208 = vector.extract_strided_slice %207 {offsets = [0, 0], sizes = [2, 32], strides = [1, 1]} : vector<2x96xf32> to vector<2x32xf32>
    %209 = vector.extract_strided_slice %181 {offsets = [0, 0], sizes = [2, 32], strides = [1, 1]} : vector<2x96xf32> to vector<2x32xf32>
    %210 = arith.addf %208, %209 : vector<2x32xf32>
    %211 = arith.negf %210 : vector<2x32xf32>
    %212 = math.exp %211 : vector<2x32xf32>
    %cst_74 = arith.constant 1.000000e+00 : f32
    %213 = vector.broadcast %cst_74 : f32 to vector<2x32xf32>
    %214 = arith.addf %213, %212 : vector<2x32xf32>
    %215 = arith.divf %213, %214 : vector<2x32xf32>
    %216 = vector.extract_strided_slice %207 {offsets = [0, 32], sizes = [2, 32], strides = [1, 1]} : vector<2x96xf32> to vector<2x32xf32>
    %217 = vector.extract_strided_slice %181 {offsets = [0, 32], sizes = [2, 32], strides = [1, 1]} : vector<2x96xf32> to vector<2x32xf32>
    %218 = arith.addf %216, %217 : vector<2x32xf32>
    %219 = arith.negf %218 : vector<2x32xf32>
    %220 = math.exp %219 : vector<2x32xf32>
    %cst_75 = arith.constant 1.000000e+00 : f32
    %221 = vector.broadcast %cst_75 : f32 to vector<2x32xf32>
    %222 = arith.addf %221, %220 : vector<2x32xf32>
    %223 = arith.divf %221, %222 : vector<2x32xf32>
    %224 = vector.extract_strided_slice %207 {offsets = [0, 64], sizes = [2, 32], strides = [1, 1]} : vector<2x96xf32> to vector<2x32xf32>
    %225 = vector.extract_strided_slice %181 {offsets = [0, 64], sizes = [2, 32], strides = [1, 1]} : vector<2x96xf32> to vector<2x32xf32>
    %226 = arith.mulf %215, %225 : vector<2x32xf32>
    %227 = arith.addf %224, %226 : vector<2x32xf32>
    %228 = math.tanh %227 : vector<2x32xf32>
    %cst_76 = arith.constant 1.000000e+00 : f32
    %229 = vector.broadcast %cst_76 : f32 to vector<2x32xf32>
    %230 = arith.subf %229, %223 : vector<2x32xf32>
    %231 = arith.mulf %230, %228 : vector<2x32xf32>
    %232 = arith.mulf %223, %152 : vector<2x32xf32>
    %233 = arith.addf %231, %232 : vector<2x32xf32>
    %234 = vector.extract_strided_slice %2 {offsets = [0, 128], sizes = [32, 128], strides = [1, 1]} : vector<32x384xf32> to vector<32x128xf32>
    %cst_77 = arith.constant dense<0.000000e+00> : vector<2x128xf32>
    %235 = tpu.matmul %233, %234, %cst_77 {dimension_numbers = #tpu.dot_dimension_numbers<[1], [0], [0], [1], [0, 0, 1, 1], [], []>} : vector<2x32xf32>, vector<32x128xf32>, vector<2x128xf32> -> vector<2x128xf32>
    %236 = vector.extract_strided_slice %235 {offsets = [0, 0], sizes = [2, 32], strides = [1, 1]} : vector<2x128xf32> to vector<2x32xf32>
    %237 = vector.broadcast %6 : vector<1x32xf32> to vector<2x32xf32>
    %238 = arith.addf %236, %237 : vector<2x32xf32>
    %cst_78 = arith.constant 0.000000e+00 : f32
    %239 = vector.broadcast %cst_78 : f32 to vector<2x32xf32>
    %240 = arith.maximumf %238, %239 : vector<2x32xf32>
    %241 = vector.extract_strided_slice %2 {offsets = [0, 256], sizes = [32, 128], strides = [1, 1]} : vector<32x384xf32> to vector<32x128xf32>
    %cst_79 = arith.constant dense<0.000000e+00> : vector<2x128xf32>
    %242 = tpu.matmul %240, %241, %cst_79 {dimension_numbers = #tpu.dot_dimension_numbers<[1], [0], [0], [1], [0, 0, 1, 1], [], []>} : vector<2x32xf32>, vector<32x128xf32>, vector<2x128xf32> -> vector<2x128xf32>
    %243 = vector.extract_strided_slice %242 {offsets = [0, 0], sizes = [2, 24], strides = [1, 1]} : vector<2x128xf32> to vector<2x24xf32>
    %244 = vector.broadcast %7 : vector<1x24xf32> to vector<2x24xf32>
    %245 = arith.addf %243, %244 : vector<2x24xf32>
    %c2_80 = arith.constant 2 : index
    %c0_81 = arith.constant 0 : index
    %c0_82 = arith.constant 0 : index
    %246 = vector.load %arg8[%c2_80, %c0_81, %c0_82] : memref<4x2x24xf32, #tpu.memory_space<vmem>>, vector<1x2x24xf32>
    %247 = vector.shape_cast %246 : vector<1x2x24xf32> to vector<2x24xf32>
    %248 = vector.shape_cast %245 : vector<2x24xf32> to vector<1x2x24xf32>
    tpu.vector_store %arg8[%c2_80, %c0_81, %c0_82], %248 {strides = array<i32>} : memref<4x2x24xf32, #tpu.memory_space<vmem>>, vector<1x2x24xf32>,
    %c2_83 = arith.constant 2 : index
    %c0_84 = arith.constant 0 : index
    %c0_85 = arith.constant 0 : index
    %249 = vector.load %arg9[%c2_83, %c0_84, %c0_85] : memref<4x2x32xf32, #tpu.memory_space<vmem>>, vector<1x2x32xf32>
    %250 = vector.shape_cast %249 : vector<1x2x32xf32> to vector<2x32xf32>
    %251 = vector.shape_cast %233 : vector<2x32xf32> to vector<1x2x32xf32>
    tpu.vector_store %arg9[%c2_83, %c0_84, %c0_85], %251 {strides = array<i32>} : memref<4x2x32xf32, #tpu.memory_space<vmem>>, vector<1x2x32xf32>,
    %c2_86 = arith.constant 2 : index
    %c0_87 = arith.constant 0 : index
    %c0_88 = arith.constant 0 : index
    %252 = vector.load %arg10[%c2_86, %c0_87, %c0_88] : memref<4x2x16xf32, #tpu.memory_space<vmem>>, vector<1x2x16xf32>
    %253 = vector.shape_cast %252 : vector<1x2x16xf32> to vector<2x16xf32>
    %254 = vector.shape_cast %200 : vector<2x16xf32> to vector<1x2x16xf32>
    tpu.vector_store %arg10[%c2_86, %c0_87, %c0_88], %254 {strides = array<i32>} : memref<4x2x16xf32, #tpu.memory_space<vmem>>, vector<1x2x16xf32>,
    %255 = vector.extract_strided_slice %2 {offsets = [0, 0], sizes = [32, 128], strides = [1, 1]} : vector<32x384xf32> to vector<32x128xf32>
    %cst_89 = arith.constant dense<0.000000e+00> : vector<2x128xf32>
    %256 = tpu.matmul %233, %255, %cst_89 {dimension_numbers = #tpu.dot_dimension_numbers<[1], [0], [0], [1], [0, 0, 1, 1], [], []>} : vector<2x32xf32>, vector<32x128xf32>, vector<2x128xf32> -> vector<2x128xf32>
    %257 = vector.extract_strided_slice %256 {offsets = [0, 0], sizes = [2, 32], strides = [1, 1]} : vector<2x128xf32> to vector<2x32xf32>
    %258 = vector.broadcast %4 : vector<1x32xf32> to vector<2x32xf32>
    %259 = arith.addf %257, %258 : vector<2x32xf32>
    %260 = vector.extract_strided_slice %256 {offsets = [0, 32], sizes = [2, 96], strides = [1, 1]} : vector<2x128xf32> to vector<2x96xf32>
    %261 = vector.broadcast %5 : vector<1x96xf32> to vector<2x96xf32>
    %262 = arith.addf %260, %261 : vector<2x96xf32>
    %263 = vector.shape_cast %259 : vector<2x32xf32> to vector<2x1x32xf32>
    %264 = vector.broadcast %263 : vector<2x1x32xf32> to vector<2x16x32xf32>
    %265 = arith.addf %0, %264 : vector<2x16x32xf32>
    %266 = math.tanh %265 : vector<2x16x32xf32>
    %267 = vector.broadcast %9 : vector<1x1x32xf32> to vector<2x16x32xf32>
    %268 = arith.mulf %266, %267 : vector<2x16x32xf32>
    %cst_90 = arith.constant dense<0.000000e+00> : vector<2x16xf32>
    %269 = vector.multi_reduction <add>, %268, %cst_90 [2] : vector<2x16x32xf32> to vector<2x16xf32>
    %270 = vector.broadcast %10 : vector<1x1xf32> to vector<2x16xf32>
    %271 = arith.addf %269, %270 : vector<2x16xf32>
    %cst_91 = arith.constant dense<0xFF800000> : vector<2xf32>
    %272 = vector.multi_reduction <maximumf>, %271, %cst_91 [1] : vector<2x16xf32> to vector<2xf32>
    %273 = vector.shape_cast %272 : vector<2xf32> to vector<2x1xf32>
    %274 = vector.broadcast %273 : vector<2x1xf32> to vector<2x16xf32>
    %275 = arith.subf %271, %274 : vector<2x16xf32>
    %276 = math.exp %275 : vector<2x16xf32>
    %cst_92 = arith.constant dense<0.000000e+00> : vector<2xf32>
    %277 = vector.multi_reduction <add>, %276, %cst_92 [1] : vector<2x16xf32> to vector<2xf32>
    %278 = vector.shape_cast %277 : vector<2xf32> to vector<2x1xf32>
    %279 = tpu.reciprocal %278 : vector<2x1xf32> -> vector<2x1xf32>
    %280 = vector.broadcast %279 : vector<2x1xf32> to vector<2x16xf32>
    %281 = arith.mulf %276, %280 : vector<2x16xf32>
    %282 = vector.shape_cast %281 : vector<2x16xf32> to vector<2x1x16xf32>
    "tpu.trace_start"() <{level = 10 : i32, message = "bqn,bnd->bqd"}> : () -> ()
    %cst_93 = arith.constant dense<0.000000e+00> : vector<2x1x32xf32>
    %283 = tpu.matmul %282, %1, %cst_93 {dimension_numbers = #tpu.dot_dimension_numbers<[2], [1], [1], [2], [0, 0, 0, 1, 1, 2], [0], [0]>} : vector<2x1x16xf32>, vector<2x16x32xf32>, vector<2x1x32xf32> -> vector<2x1x32xf32>
    "tpu.trace_stop"() : () -> ()
    %284 = vector.shape_cast %283 : vector<2x1x32xf32> to vector<2x32xf32>
    %cst_94 = arith.constant dense<0.000000e+00> : vector<2x96xf32>
    %285 = tpu.matmul %284, %3, %cst_94 {dimension_numbers = #tpu.dot_dimension_numbers<[1], [0], [0], [1], [0, 0, 1, 1], [], []>} : vector<2x32xf32>, vector<32x96xf32>, vector<2x96xf32> -> vector<2x96xf32>
    %c3_95 = arith.constant 3 : index
    %c0_96 = arith.constant 0 : index
    %c0_97 = arith.constant 0 : index
    %286 = vector.load %arg4[%c3_95, %c0_96, %c0_97] : memref<4x2x96xf32, #tpu.memory_space<vmem>>, vector<1x2x96xf32>
    %287 = vector.shape_cast %286 : vector<1x2x96xf32> to vector<2x96xf32>
    %288 = arith.addf %285, %287 : vector<2x96xf32>
    %289 = vector.extract_strided_slice %288 {offsets = [0, 0], sizes = [2, 32], strides = [1, 1]} : vector<2x96xf32> to vector<2x32xf32>
    %290 = vector.extract_strided_slice %262 {offsets = [0, 0], sizes = [2, 32], strides = [1, 1]} : vector<2x96xf32> to vector<2x32xf32>
    %291 = arith.addf %289, %290 : vector<2x32xf32>
    %292 = arith.negf %291 : vector<2x32xf32>
    %293 = math.exp %292 : vector<2x32xf32>
    %cst_98 = arith.constant 1.000000e+00 : f32
    %294 = vector.broadcast %cst_98 : f32 to vector<2x32xf32>
    %295 = arith.addf %294, %293 : vector<2x32xf32>
    %296 = arith.divf %294, %295 : vector<2x32xf32>
    %297 = vector.extract_strided_slice %288 {offsets = [0, 32], sizes = [2, 32], strides = [1, 1]} : vector<2x96xf32> to vector<2x32xf32>
    %298 = vector.extract_strided_slice %262 {offsets = [0, 32], sizes = [2, 32], strides = [1, 1]} : vector<2x96xf32> to vector<2x32xf32>
    %299 = arith.addf %297, %298 : vector<2x32xf32>
    %300 = arith.negf %299 : vector<2x32xf32>
    %301 = math.exp %300 : vector<2x32xf32>
    %cst_99 = arith.constant 1.000000e+00 : f32
    %302 = vector.broadcast %cst_99 : f32 to vector<2x32xf32>
    %303 = arith.addf %302, %301 : vector<2x32xf32>
    %304 = arith.divf %302, %303 : vector<2x32xf32>
    %305 = vector.extract_strided_slice %288 {offsets = [0, 64], sizes = [2, 32], strides = [1, 1]} : vector<2x96xf32> to vector<2x32xf32>
    %306 = vector.extract_strided_slice %262 {offsets = [0, 64], sizes = [2, 32], strides = [1, 1]} : vector<2x96xf32> to vector<2x32xf32>
    %307 = arith.mulf %296, %306 : vector<2x32xf32>
    %308 = arith.addf %305, %307 : vector<2x32xf32>
    %309 = math.tanh %308 : vector<2x32xf32>
    %cst_100 = arith.constant 1.000000e+00 : f32
    %310 = vector.broadcast %cst_100 : f32 to vector<2x32xf32>
    %311 = arith.subf %310, %304 : vector<2x32xf32>
    %312 = arith.mulf %311, %309 : vector<2x32xf32>
    %313 = arith.mulf %304, %233 : vector<2x32xf32>
    %314 = arith.addf %312, %313 : vector<2x32xf32>
    %315 = vector.extract_strided_slice %2 {offsets = [0, 128], sizes = [32, 128], strides = [1, 1]} : vector<32x384xf32> to vector<32x128xf32>
    %cst_101 = arith.constant dense<0.000000e+00> : vector<2x128xf32>
    %316 = tpu.matmul %314, %315, %cst_101 {dimension_numbers = #tpu.dot_dimension_numbers<[1], [0], [0], [1], [0, 0, 1, 1], [], []>} : vector<2x32xf32>, vector<32x128xf32>, vector<2x128xf32> -> vector<2x128xf32>
    %317 = vector.extract_strided_slice %316 {offsets = [0, 0], sizes = [2, 32], strides = [1, 1]} : vector<2x128xf32> to vector<2x32xf32>
    %318 = vector.broadcast %6 : vector<1x32xf32> to vector<2x32xf32>
    %319 = arith.addf %317, %318 : vector<2x32xf32>
    %cst_102 = arith.constant 0.000000e+00 : f32
    %320 = vector.broadcast %cst_102 : f32 to vector<2x32xf32>
    %321 = arith.maximumf %319, %320 : vector<2x32xf32>
    %322 = vector.extract_strided_slice %2 {offsets = [0, 256], sizes = [32, 128], strides = [1, 1]} : vector<32x384xf32> to vector<32x128xf32>
    %cst_103 = arith.constant dense<0.000000e+00> : vector<2x128xf32>
    %323 = tpu.matmul %321, %322, %cst_103 {dimension_numbers = #tpu.dot_dimension_numbers<[1], [0], [0], [1], [0, 0, 1, 1], [], []>} : vector<2x32xf32>, vector<32x128xf32>, vector<2x128xf32> -> vector<2x128xf32>
    %324 = vector.extract_strided_slice %323 {offsets = [0, 0], sizes = [2, 24], strides = [1, 1]} : vector<2x128xf32> to vector<2x24xf32>
    %325 = vector.broadcast %7 : vector<1x24xf32> to vector<2x24xf32>
    %326 = arith.addf %324, %325 : vector<2x24xf32>
    %c3_104 = arith.constant 3 : index
    %c0_105 = arith.constant 0 : index
    %c0_106 = arith.constant 0 : index
    %327 = vector.load %arg8[%c3_104, %c0_105, %c0_106] : memref<4x2x24xf32, #tpu.memory_space<vmem>>, vector<1x2x24xf32>
    %328 = vector.shape_cast %327 : vector<1x2x24xf32> to vector<2x24xf32>
    %329 = vector.shape_cast %326 : vector<2x24xf32> to vector<1x2x24xf32>
    tpu.vector_store %arg8[%c3_104, %c0_105, %c0_106], %329 {strides = array<i32>} : memref<4x2x24xf32, #tpu.memory_space<vmem>>, vector<1x2x24xf32>,
    %c3_107 = arith.constant 3 : index
    %c0_108 = arith.constant 0 : index
    %c0_109 = arith.constant 0 : index
    %330 = vector.load %arg9[%c3_107, %c0_108, %c0_109] : memref<4x2x32xf32, #tpu.memory_space<vmem>>, vector<1x2x32xf32>
    %331 = vector.shape_cast %330 : vector<1x2x32xf32> to vector<2x32xf32>
    %332 = vector.shape_cast %314 : vector<2x32xf32> to vector<1x2x32xf32>
    tpu.vector_store %arg9[%c3_107, %c0_108, %c0_109], %332 {strides = array<i32>} : memref<4x2x32xf32, #tpu.memory_space<vmem>>, vector<1x2x32xf32>,
    %c3_110 = arith.constant 3 : index
    %c0_111 = arith.constant 0 : index
    %c0_112 = arith.constant 0 : index
    %333 = vector.load %arg10[%c3_110, %c0_111, %c0_112] : memref<4x2x16xf32, #tpu.memory_space<vmem>>, vector<1x2x16xf32>
    %334 = vector.shape_cast %333 : vector<1x2x16xf32> to vector<2x16xf32>
    %335 = vector.shape_cast %281 : vector<2x16xf32> to vector<1x2x16xf32>
    tpu.vector_store %arg10[%c3_110, %c0_111, %c0_112], %335 {strides = array<i32>} : memref<4x2x16xf32, #tpu.memory_space<vmem>>, vector<1x2x16xf32>,
    return
  }
  func.func @transform_0(%arg0: i32) -> (i32, i32, i32) {
    %c0_i32 = arith.constant 0 : i32
    %c0_i32_0 = arith.constant 0 : i32
    %c0_i32_1 = arith.constant 0 : i32
    %c0_i32_2 = arith.constant 0 : i32
    return %c0_i32, %c0_i32_0, %c0_i32_1 : i32, i32, i32
  }
  func.func @transform_1(%arg0: i32) -> (i32, i32, i32) {
    %c0_i32 = arith.constant 0 : i32
    %c0_i32_0 = arith.constant 0 : i32
    %c0_i32_1 = arith.constant 0 : i32
    %c0_i32_2 = arith.constant 0 : i32
    return %c0_i32, %c0_i32_0, %c0_i32_1 : i32, i32, i32
  }
  func.func @transform_2(%arg0: i32) -> (i32, i32) {
    %c0_i32 = arith.constant 0 : i32
    %c0_i32_0 = arith.constant 0 : i32
    %c0_i32_1 = arith.constant 0 : i32
    return %c0_i32, %c0_i32_0 : i32, i32
  }
  func.func @transform_3(%arg0: i32) -> (i32, i32, i32) {
    %c0_i32 = arith.constant 0 : i32
    %c0_i32_0 = arith.constant 0 : i32
    %c0_i32_1 = arith.constant 0 : i32
    %c0_i32_2 = arith.constant 0 : i32
    return %c0_i32, %c0_i32_0, %c0_i32_1 : i32, i32, i32
  }
  func.func @transform_4(%arg0: i32) -> (i32, i32) {
    %c0_i32 = arith.constant 0 : i32
    %c0_i32_0 = arith.constant 0 : i32
    %c0_i32_1 = arith.constant 0 : i32
    return %c0_i32, %c0_i32_0 : i32, i32
  }
  func.func @transform_5(%arg0: i32) -> (i32, i32) {
    %c0_i32 = arith.constant 0 : i32
    %c0_i32_0 = arith.constant 0 : i32
    %c0_i32_1 = arith.constant 0 : i32
    return %c0_i32, %c0_i32_0 : i32, i32
  }
  func.func @transform_6(%arg0: i32) -> (i32, i32) {
    %c0_i32 = arith.constant 0 : i32
    %c0_i32_0 = arith.constant 0 : i32
    %c0_i32_1 = arith.constant 0 : i32
    return %c0_i32, %c0_i32_0 : i32, i32
  }
  func.func @transform_7(%arg0: i32) -> (i32, i32, i32) {
    %c0_i32 = arith.constant 0 : i32
    %c0_i32_0 = arith.constant 0 : i32
    %c0_i32_1 = arith.constant 0 : i32
    %c0_i32_2 = arith.constant 0 : i32
    return %c0_i32, %c0_i32_0, %c0_i32_1 : i32, i32, i32
  }
  func.func @transform_8(%arg0: i32) -> (i32, i32, i32) {
    %c0_i32 = arith.constant 0 : i32
    %c0_i32_0 = arith.constant 0 : i32
    %c0_i32_1 = arith.constant 0 : i32
    %c0_i32_2 = arith.constant 0 : i32
    return %c0_i32, %c0_i32_0, %c0_i32_1 : i32, i32, i32
  }
  func.func @transform_9(%arg0: i32) -> (i32, i32, i32) {
    %c0_i32 = arith.constant 0 : i32
    %c0_i32_0 = arith.constant 0 : i32
    %c0_i32_1 = arith.constant 0 : i32
    %c0_i32_2 = arith.constant 0 : i32
    return %c0_i32, %c0_i32_0, %c0_i32_1 : i32, i32, i32
  }
}

</mosaic_0001>

<llo_original>
// kernel: tpu_custom_call.1
$region0: #{tpu_custom_call.1}
  #allocation0 [shape = 'u32[]', space=smem, size = 0x4, offset = 0x4, fixed_abs, tag = 'smem constant byte address 0x4 - core index']
  #allocation1 [shape = 'u32[144,128]{1,0:T(1,128)}', space=vmem, size = 0x12000, scoped, tag = 'internal scratch']
  %s0 = inlined_call_operand.hbm [shape: f32[2,16,32], index: 0, kind: input, shape index: {}]
  %s1 = inlined_call_operand.hbm [shape: f32[2,16,32], index: 1, kind: input, shape index: {}]
  %s2 = inlined_call_operand.vmem [shape: f32[2,32], index: 2, kind: input, shape index: {}]
  %s3 = inlined_call_operand.hbm [shape: f32[4,2,96], index: 3, kind: input, shape index: {}]
  %s4 = inlined_call_operand.hbm [shape: f32[32,384], index: 4, kind: input, shape index: {}]
  %s5 = inlined_call_operand.hbm [shape: f32[32,96], index: 5, kind: input, shape index: {}]
  %s6 = inlined_call_operand.vmem [shape: f32[8,128], index: 6, kind: input, shape index: {}]
  %s7 = inlined_call_operand.hbm [shape: f32[4,2,24], index: 7, kind: output, shape index: {0}]
  %s8 = inlined_call_operand.hbm [shape: f32[4,2,32], index: 8, kind: output, shape index: {1}]
  %s9 = inlined_call_operand.hbm [shape: f32[4,2,16], index: 9, kind: output, shape index: {2}]
  %10 = xla_tuple %s7, %s8, %s9
  %s11 = sld [smem:[#allocation0]]
  $region74: #{tpu_custom_call.1} parent=0
    _
  %s13 = ssub.s32 1, %s11
  %s14 = scalar_select 0, %s13, %s11
  $region1: #{tpu_custom_call.1} parent=0
    #allocation2 [shape = 'u8[16384]{0}', space=vmem, size = 0x4000, scoped, tag = 'input window, operand 0, single buffered']
    #allocation3 [shape = 's32[1]{0}', space=sflag, size = 0x4, scoped, tag = 'scoped memory for tpu_custom_call.1']
    #allocation4 [shape = 's32[1]{0}', space=sflag, size = 0x4, scoped, tag = 'scoped memory for tpu_custom_call.1']
    #allocation5 [shape = 'u8[16384]{0}', space=vmem, size = 0x4000, scoped, tag = 'input window, operand 1, single buffered']
    #allocation6 [shape = 's32[1]{0}', space=sflag, size = 0x4, scoped, tag = 'scoped memory for tpu_custom_call.1']
    #allocation7 [shape = 'u8[4096]{0}', space=vmem, size = 0x1000, scoped, tag = 'input window, operand 3, single buffered']
    #allocation8 [shape = 'u8[49152]{0}', space=vmem, size = 0xc000, scoped, tag = 'input window, operand 4, single buffered']
    #allocation9 [shape = 's32[1]{0}', space=sflag, size = 0x4, scoped, tag = 'scoped memory for tpu_custom_call.1']
    #allocation10 [shape = 'u8[16384]{0}', space=vmem, size = 0x4000, scoped, tag = 'input window, operand 5, single buffered']
    #allocation11 [shape = 'u8[4096]{0}', space=vmem, size = 0x1000, scoped, tag = 'output window, operand 0, single buffered']
    #allocation12 [shape = 'u8[4096]{0}', space=vmem, size = 0x1000, scoped, tag = 'output window, operand 1, single buffered']
    #allocation13 [shape = 's32[1]{0}', space=sflag, size = 0x4, scoped, tag = 'scoped memory for tpu_custom_call.1']
    #allocation14 [shape = 'u8[4096]{0}', space=vmem, size = 0x1000, scoped, tag = 'output window, operand 2, single buffered']
    %15 = vsyncpa [#allocation3], 0
    %16 = vsyncpa [#allocation6], 0
    %17 = vsyncpa [#allocation9], 0
    %18 = vsyncpa [#allocation4], 0
    %19 = vsyncpa [#allocation13], 0
    // Predicated region
    $region2: #{tpu_custom_call.1} parent=1 // pred_check
      _
    $region3: #{tpu_custom_call.1} parent=1 // pred_check_branch
      %21 = sbr.rel (0) target = $region5
    $region4: #{tpu_custom_call.1} parent=1 // pred_region
      %s23 = ssub.s32 512, 512
      %24 = vsyncadd [#allocation3], %s23
      %s25 = sshll.u32 [#allocation2], 4
      %s26 = int_to_ptr.vmem [resolvable:$true] %s25
      %31 = dma.hbm_to_vmem [thread:$0]  %s0, 512, %s26, [#allocation3], 128, 128, 8
    $region5: #{tpu_custom_call.1} parent=1 // pred_fallthru
      _
    // Predicated region
    $region6: #{tpu_custom_call.1} parent=1 // pred_check
      _
    $region7: #{tpu_custom_call.1} parent=1 // pred_check_branch
      %33 = sbr.rel (0) target = $region9
    $region8: #{tpu_custom_call.1} parent=1 // pred_region
      %s35 = ssub.s32 512, 512
      %36 = vsyncadd [#allocation6], %s35
      %s37 = sshll.u32 [#allocation5], 4
      %s38 = int_to_ptr.vmem [resolvable:$true] %s37
      %43 = dma.hbm_to_vmem [thread:$0]  %s1, 512, %s38, [#allocation6], 128, 128, 8
    $region9: #{tpu_custom_call.1} parent=1 // pred_fallthru
      _
    // Predicated region
    $region10: #{tpu_custom_call.1} parent=1 // pred_check
      _
    $region11: #{tpu_custom_call.1} parent=1 // pred_check_branch
      %45 = sbr.rel (0) target = $region13
    $region12: #{tpu_custom_call.1} parent=1 // pred_region
      _
    $region13: #{tpu_custom_call.1} parent=1 // pred_fallthru
      _
    // Predicated region
    $region14: #{tpu_custom_call.1} parent=1 // pred_check
      _
    $region15: #{tpu_custom_call.1} parent=1 // pred_check_branch
      %47 = sbr.rel (0) target = $region17
    $region16: #{tpu_custom_call.1} parent=1 // pred_region
      %s49 = ssub.s32 128, 128
      %50 = vsyncadd [#allocation6], %s49
      %s51 = sshll.u32 [#allocation7], 4
      %s52 = int_to_ptr.vmem [resolvable:$true] %s51
      %57 = dma.hbm_to_vmem [thread:$0]  %s3, 128, %s52, [#allocation6], 32, 32, 2
    $region17: #{tpu_custom_call.1} parent=1 // pred_fallthru
      _
    // Predicated region
    $region18: #{tpu_custom_call.1} parent=1 // pred_check
      _
    $region19: #{tpu_custom_call.1} parent=1 // pred_check_branch
      %59 = sbr.rel (0) target = $region21
    $region20: #{tpu_custom_call.1} parent=1 // pred_region
      %s61 = ssub.s32 1536, 1536
      %62 = vsyncadd [#allocation9], %s61
      %s63 = sshll.u32 [#allocation8], 4
      %s64 = int_to_ptr.vmem [resolvable:$true] %s63
      %69 = dma.hbm_to_vmem [thread:$0]  %s4, 1536, %s64, [#allocation9], 384, 384, 24
    $region21: #{tpu_custom_call.1} parent=1 // pred_fallthru
      _
    // Predicated region
    $region22: #{tpu_custom_call.1} parent=1 // pred_check
      _
    $region23: #{tpu_custom_call.1} parent=1 // pred_check_branch
      %71 = sbr.rel (0) target = $region25
    $region24: #{tpu_custom_call.1} parent=1 // pred_region
      %s73 = ssub.s32 512, 512
      %74 = vsyncadd [#allocation9], %s73
      %s75 = sshll.u32 [#allocation10], 4
      %s76 = int_to_ptr.vmem [resolvable:$true] %s75
      %81 = dma.hbm_to_vmem [thread:$0]  %s5, 512, %s76, [#allocation9], 128, 128, 8
    $region25: #{tpu_custom_call.1} parent=1 // pred_fallthru
      _
    // Predicated region
    $region26: #{tpu_custom_call.1} parent=1 // pred_check
      _
    $region27: #{tpu_custom_call.1} parent=1 // pred_check_branch
      %83 = sbr.rel (0) target = $region29
    $region28: #{tpu_custom_call.1} parent=1 // pred_region
      _
    $region29: #{tpu_custom_call.1} parent=1 // pred_fallthru
      _
    // Predicated region
    $region30: #{tpu_custom_call.1} parent=1 // pred_check
      _
    $region31: #{tpu_custom_call.1} parent=1 // pred_check_branch
      %85 = sbr.rel (0) target = $region33
    $region32: #{tpu_custom_call.1} parent=1 // pred_region
      %86 = dma.done [#allocation3], 512
    $region33: #{tpu_custom_call.1} parent=1 // pred_fallthru
      _
    // Predicated region
    $region34: #{tpu_custom_call.1} parent=1 // pred_check
      _
    $region35: #{tpu_custom_call.1} parent=1 // pred_check_branch
      %88 = sbr.rel (0) target = $region37
    $region36: #{tpu_custom_call.1} parent=1 // pred_region
      %89 = dma.done [#allocation6], 512
    $region37: #{tpu_custom_call.1} parent=1 // pred_fallthru
      _
    // Predicated region
    $region38: #{tpu_custom_call.1} parent=1 // pred_check
      _
    $region39: #{tpu_custom_call.1} parent=1 // pred_check_branch
      %91 = sbr.rel (0) target = $region41
    $region40: #{tpu_custom_call.1} parent=1 // pred_region
      %92 = dma.done [#allocation6], 128
    $region41: #{tpu_custom_call.1} parent=1 // pred_fallthru
      _
    // Predicated region
    $region42: #{tpu_custom_call.1} parent=1 // pred_check
      _
    $region43: #{tpu_custom_call.1} parent=1 // pred_check_branch
      %94 = sbr.rel (0) target = $region45
    $region44: #{tpu_custom_call.1} parent=1 // pred_region
      %95 = dma.done [#allocation9], 1536
    $region45: #{tpu_custom_call.1} parent=1 // pred_fallthru
      _
    // Predicated region
    $region46: #{tpu_custom_call.1} parent=1 // pred_check
      _
    $region47: #{tpu_custom_call.1} parent=1 // pred_check_branch
      %97 = sbr.rel (0) target = $region49
    $region48: #{tpu_custom_call.1} parent=1 // pred_region
      %98 = dma.done [#allocation9], 512
    $region49: #{tpu_custom_call.1} parent=1 // pred_fallthru
      _
    %v99 = vld [vmem:[#allocation2] sm:$0xff]
    %v100 = vld [vmem:[#allocation2 + $0x8] sm:$0xff]
    %v101 = vld [vmem:[#allocation2 + $0x10] sm:$0xff]
    %v102 = vld [vmem:[#allocation2 + $0x18] sm:$0xff]
    %v103 = vld [vmem:[#allocation5] sm:$0xff]
    %v104 = vld [vmem:[#allocation5 + $0x8] sm:$0xff]
    %v105 = vld [vmem:[#allocation5 + $0x10] sm:$0xff]
    %v106 = vld [vmem:[#allocation5 + $0x18] sm:$0xff]
    %v107 = vld [vmem:[#allocation8] sm:$0xff]
    %v108 = vld [vmem:[#allocation8 + $0x8] sm:$0xff]
    %v109 = vld [vmem:[#allocation8 + $0x10] sm:$0xff]
    %v110 = vld [vmem:[#allocation8 + $0x18] sm:$0xff]
    %v111 = vld [vmem:[#allocation8 + $0x20] sm:$0xff]
    %v112 = vld [vmem:[#allocation8 + $0x28] sm:$0xff]
    %v113 = vld [vmem:[#allocation8 + $0x30] sm:$0xff]
    %v114 = vld [vmem:[#allocation8 + $0x38] sm:$0xff]
    %v115 = vld [vmem:[#allocation8 + $0x40] sm:$0xff]
    %v116 = vld [vmem:[#allocation8 + $0x48] sm:$0xff]
    %v117 = vld [vmem:[#allocation8 + $0x50] sm:$0xff]
    %v118 = vld [vmem:[#allocation8 + $0x58] sm:$0xff]
    %v119 = vld [vmem:[#allocation10] sm:$0xff]
    %v120 = vld [vmem:[#allocation10 + $0x8] sm:$0xff]
    %v121 = vld [vmem:[#allocation10 + $0x10] sm:$0xff]
    %v122 = vld [vmem:[#allocation10 + $0x18] sm:$0xff]
    %v123 = vld [vmem:[%s6] sm:$0x1]
    %v124 = vld [vmem:[%s6 + $0x1] sm:$0x1]
    %v125 = vld [vmem:[%s6 + $0x2] sm:$0x1]
    %v126 = vld [vmem:[%s6 + $0x3] sm:$0x1]
    %v127 = vld [vmem:[%s6 + $0x4] sm:$0x1]
    %v128 = vld [vmem:[%s6 + $0x5] sm:$0x1]
    %v129 = vld [vmem:[%s2] sm:$0x3]
    %vm130 = vcmask 261120
    %v132 = vsel %vm130, %v129, 0
    %134 = vmatprep.subr.mxu0 0.0
    %135 = vmatpush1.msra.mxu0 0.0
    %136 = vmatprep.subr.mxu0 0.0
    %137 = vmatpush1.msra.mxu0 0.0
    %138 = vmatprep.subr.mxu0 0.0
    %139 = vmatpush1.msra.mxu0 0.0
    %140 = vmatprep.subr.mxu0 0.0
    %141 = vmatpush1.msra.mxu0 0.0
    %142 = vmatprep.subr.mxu0 0.0
    %143 = vmatpush1.msra.mxu0 0.0
    %144 = vmatprep.subr.mxu0 0.0
    %145 = vmatpush1.msra.mxu0 0.0
    %146 = vmatprep.subr.mxu0 0.0
    %147 = vmatpush1.msra.mxu0 0.0
    %148 = vmatprep.subr.mxu0 0.0
    %149 = vmatpush1.msra.mxu0 0.0
    %150 = vmatprep.subr.mxu0 0.0
    %151 = vmatpush1.msra.mxu0 0.0
    %152 = vmatprep.subr.mxu0 0.0
    %153 = vmatpush1.msra.mxu0 0.0
    %154 = vmatprep.subr.mxu0 0.0
    %155 = vmatpush1.msra.mxu0 0.0
    %156 = vmatprep.subr.mxu0 0.0
    %157 = vmatpush1.msra.mxu0 0.0
    %158 = vmatprep.subr.mxu0 0.0
    %159 = vmatpush1.msra.mxu0 %v116
    %160 = vmatprep.subr.mxu0 0.0
    %161 = vmatpush1.msra.mxu0 %v113
    %162 = vmatprep.subr.mxu0 0.0
    %163 = vmatpush1.msra.mxu0 %v110
    %164 = vmatprep.subr.mxu0 0.0
    %165 = vmatpush1.msra.mxu0 %v107
    %166 = vmatprep.subr.mxu0 0.0
    %167 = vmatpush2.msra.mxu0 0.0
    %168 = vmatprep.subr.mxu0 0.0
    %169 = vmatpush2.msra.mxu0 0.0
    %170 = vmatprep.subr.mxu0 0.0
    %171 = vmatpush2.msra.mxu0 0.0
    %172 = vmatprep.subr.mxu0 0.0
    %173 = vmatpush2.msra.mxu0 0.0
    %174 = vmatprep.subr.mxu0 0.0
    %175 = vmatpush2.msra.mxu0 0.0
    %176 = vmatprep.subr.mxu0 0.0
    %177 = vmatpush2.msra.mxu0 0.0
    %178 = vmatprep.subr.mxu0 0.0
    %179 = vmatpush2.msra.mxu0 0.0
    %180 = vmatprep.subr.mxu0 0.0
    %181 = vmatpush2.msra.mxu0 0.0
    %182 = vmatprep.subr.mxu0 0.0
    %183 = vmatpush2.msra.mxu0 0.0
    %184 = vmatprep.subr.mxu0 0.0
    %185 = vmatpush2.msra.mxu0 0.0
    %186 = vmatprep.subr.mxu0 0.0
    %187 = vmatpush2.msra.mxu0 0.0
    %188 = vmatprep.subr.mxu0 0.0
    %189 = vmatpush2.msra.mxu0 0.0
    %190 = vmatprep.subr.mxu0 0.0
    %191 = vmatpush2.msra.mxu0 0.0
    %192 = vmatprep.subr.mxu0 0.0
    %193 = vmatpush2.msra.mxu0 0.0
    %194 = vmatprep.subr.mxu0 0.0
    %195 = vmatpush2.msra.mxu0 0.0
    %196 = vmatprep.subr.mxu0 0.0
    %197 = vmatpush2.msra.mxu0 0.0
    %198 = vmatprep.mubr.f32.mxu0 0.0
    %199 = vmatmul.mubr.f32.gmra.mxu0 %v132
    %v200 = vpop.f32.mrf.mxu0
    %v201 = vadd.f32 0.0, %v200
    %v202 = vpop.f32.mrf.mxu0
    %203 = vdwg.mxu0
    %v204 = vlaneseq
    %v205 = vshrl.u32 %v204, 7
    %v206 = vsub.s32 0, %v205
    %v207 = vrot.slane %v123, %v206
    %v208 = vadd.f32 %v201, %v207
    %v209 = vlaneseq
    %v210 = vshrl.u32 %v209, 7
    %v211 = vsub.s32 0, %v210
    %v212 = vrot.slane %v124, %v211
    %214 = vrot.lane.b32.xlu0 %v212, 32
    %v215 = vpop.permute.xlu0 %214
    %v217 = vadd.f32 %v201, %v215
    %v220 = vunpack.c.l.s4 1966171168
    %v221 = vunpack.c.0.s8 %v220
    %v222 = vlaneseq
    %v223 = vshrl.u32 %v222, 7
    %v224 = vsub.s32 %v221, %v223
    %v225 = vrot.slane %v208, %v224
    %v226 = vcombine.high %v225, %v225
    %v228 = vunpack.c.l.s4 1966171168
    %v229 = vunpack.c.0.s8 %v228
    %v230 = vlaneseq
    %v231 = vshrl.u32 %v230, 7
    %v232 = vsub.s32 %v229, %v231
    %v233 = vrot.slane %v225, %v232
    %v235 = vunpack.c.l.s4 1966171168
    %v236 = vunpack.c.0.s8 %v235
    %v237 = vlaneseq
    %v238 = vshrl.u32 %v237, 7
    %v239 = vsub.s32 %v236, %v238
    %v240 = vrot.slane %v226, %v239
    %v241 = vlaneseq
    %v242 = vshrl.u32 %v241, 7
    %v243 = vsub.s32 0, %v242
    %v244 = vrot.slane %v233, %v243
    %v245 = vlaneseq
    %v246 = vshrl.u32 %v245, 7
    %v247 = vsub.s32 0, %v246
    %v248 = vrot.slane %v240, %v247
    %v251 = vadd.f32 %v99, %v244
    %v252 = vadd.f32 %v100, %v244
    %v253 = vadd.f32 %v101, %v248
    %v254 = vadd.f32 %v102, %v248
    %v255 = vtanh.pop %v251
    %v256 = vtanh.pop %v252
    %v257 = vtanh.pop %v253
    %v258 = vtanh.pop %v254
    %v259 = vlaneseq
    %v260 = vshrl.u32 %v259, 7
    %v261 = vsub.s32 0, %v260
    %v262 = vrot.slane %v127, %v261
    %v263 = vmul.f32 %v255, %v262
    %v264 = vmul.f32 %v256, %v262
    %v265 = vmul.f32 %v257, %v262
    %v266 = vmul.f32 %v258, %v262
    %v267 = vsel %vm130, %v263, 0.0
    %268 = vadd.xlane.f32.xlu0 %v267
    %v269 = vpop.xlane.xlu0 %268
    %v270 = vsel %vm130, %v264, 0.0
    %271 = vadd.xlane.f32.xlu0 %v270
    %v272 = vpop.xlane.xlu0 %271
    %v273 = vsel %vm130, %v265, 0.0
    %274 = vadd.xlane.f32.xlu0 %v273
    %v275 = vpop.xlane.xlu0 %274
    %v276 = vsel %vm130, %v266, 0.0
    %277 = vadd.xlane.f32.xlu0 %v276
    %v278 = vpop.xlane.xlu0 %277
    %s280 = vtos %v128
    %v281 = vstv %s280
    %v283 = vadd.f32 %v269, %v281
    %v284 = vadd.f32 %v272, %v281
    %v285 = vadd.f32 %v275, %v281
    %v286 = vadd.f32 %v278, %v281
    %v291 = vlaneseq
    %v292 = vand.u32 %v291, 127
    %v293 = vlaneseq
    %v294 = vshrl.u32 %v293, 7
    %v295 = vsub.s32 %v292, %v294
    %v296 = vrot.slane %v283, %v295
    %v297 = vadd.s32 %v292, 4294967288
    %v298 = vlaneseq
    %v299 = vshrl.u32 %v298, 7
    %v300 = vsub.s32 %v297, %v299
    %v301 = vrot.slane %v284, %v300
    %vm302 = vcmask 130112
    %v303 = vsel %vm302, %v301, %v296
    %v304 = vlaneseq
    %v305 = vshrl.u32 %v304, 7
    %v306 = vsub.s32 %v292, %v305
    %v307 = vrot.slane %v285, %v306
    %v308 = vlaneseq
    %v309 = vshrl.u32 %v308, 7
    %v310 = vsub.s32 %v297, %v309
    %v311 = vrot.slane %v286, %v310
    %v312 = vsel %vm302, %v311, %v307
    %vm313 = vcmask 1041409
    %v314 = vsel %vm313, %v312, %v303
    %vm316 = vcmask 123904
    %v317 = vsel %vm316, %v314, -inf
    %318 = vmax.xlane.f32.xlu0 %v317
    %v319 = vpop.xlane.xlu0 %318
    %v321 = vlaneseq
    %v322 = vshrl.u32 %v321, 7
    %v323 = vsub.s32 0, %v322
    %v324 = vrot.slane %v319, %v323
    %v325 = vlaneseq
    %v326 = vshrl.u32 %v325, 7
    %v327 = vsub.s32 1, %v326
    %v328 = vrot.slane %v319, %v327
    %v331 = vsub.f32 %v283, %v324
    %v332 = vsub.f32 %v284, %v324
    %v333 = vsub.f32 %v285, %v328
    %v334 = vsub.f32 %v286, %v328
    %v335 = vmul.f32 %v331, 1.442695
    %v336 = vpow.pop %v335
    %v337 = vmul.f32 %v332, 1.442695
    %v338 = vpow.pop %v337
    %v339 = vmul.f32 %v333, 1.442695
    %v340 = vpow.pop %v339
    %v341 = vmul.f32 %v334, 1.442695
    %v342 = vpow.pop %v341
    %347 = vset.pattern.permute.xlu0 0
    %348 = vperm.xlu0 %347, %v336
    %v349 = vpop.permute.xlu0 %348
    %350 = vset.pattern.permute.xlu0 0
    %351 = vperm.xlu0 %350, %v338
    %v352 = vpop.permute.xlu0 %351
    %353 = vset.pattern.permute.xlu0 0
    %354 = vperm.xlu0 %353, %v340
    %v355 = vpop.permute.xlu0 %354
    %356 = vset.pattern.permute.xlu0 0
    %357 = vperm.xlu0 %356, %v342
    %v358 = vpop.permute.xlu0 %357
    %v359 = vlaneseq
    %v360 = vshrl.u32 %v359, 7
    %v361 = vsub.s32 %v292, %v360
    %v362 = vrot.slane %v349, %v361
    %v363 = vlaneseq
    %v364 = vshrl.u32 %v363, 7
    %v365 = vsub.s32 %v297, %v364
    %v366 = vrot.slane %v352, %v365
    %v367 = vsel %vm302, %v366, %v362
    %v368 = vlaneseq
    %v369 = vshrl.u32 %v368, 7
    %v370 = vsub.s32 %v292, %v369
    %v371 = vrot.slane %v355, %v370
    %v372 = vlaneseq
    %v373 = vshrl.u32 %v372, 7
    %v374 = vsub.s32 %v297, %v373
    %v375 = vrot.slane %v358, %v374
    %v376 = vsel %vm302, %v375, %v371
    %v377 = vsel %vm313, %v376, %v367
    %v379 = vsel %vm316, %v377, 0.0
    %380 = vadd.xlane.f32.xlu0 %v379
    %v381 = vpop.xlane.xlu0 %380
    %v382 = vrcp.pop %v381
    %v384 = vlaneseq
    %v385 = vshrl.u32 %v384, 7
    %v386 = vsub.s32 0, %v385
    %v387 = vrot.slane %v382, %v386
    %v388 = vlaneseq
    %v389 = vshrl.u32 %v388, 7
    %v390 = vsub.s32 1, %v389
    %v391 = vrot.slane %v382, %v390
    %v394 = vmul.f32 %v336, %v387
    %v395 = vmul.f32 %v338, %v387
    %v396 = vmul.f32 %v340, %v391
    %v397 = vmul.f32 %v342, %v391
    %400 = vset.pattern.permute.xlu0 0
    %401 = vperm.xlu0 %400, %v394
    %v402 = vpop.permute.xlu0 %401
    %403 = vset.pattern.permute.xlu0 0
    %404 = vperm.xlu0 %403, %v395
    %v405 = vpop.permute.xlu0 %404
    %v406 = vlaneseq
    %v407 = vshrl.u32 %v406, 7
    %v408 = vsub.s32 %v292, %v407
    %v409 = vrot.slane %v402, %v408
    %v410 = vlaneseq
    %v411 = vshrl.u32 %v410, 7
    %v412 = vsub.s32 %v297, %v411
    %v413 = vrot.slane %v405, %v412
    %v414 = vsel %vm302, %v413, %v409
    %vm415 = vcmask 130048
    %v416 = vsel %vm415, %v414, 0
    %418 = vmatprep.subr.mxu0 0.0
    %419 = vmatpush1.msra.mxu0 0.0
    %420 = vmatprep.subr.mxu0 0.0
    %421 = vmatpush1.msra.mxu0 0.0
    %422 = vmatprep.subr.mxu0 0.0
    %423 = vmatpush1.msra.mxu0 0.0
    %424 = vmatprep.subr.mxu0 0.0
    %425 = vmatpush1.msra.mxu0 0.0
    %426 = vmatprep.subr.mxu0 0.0
    %427 = vmatpush1.msra.mxu0 0.0
    %428 = vmatprep.subr.mxu0 0.0
    %429 = vmatpush1.msra.mxu0 0.0
    %430 = vmatprep.subr.mxu0 0.0
    %431 = vmatpush1.msra.mxu0 0.0
    %432 = vmatprep.subr.mxu0 0.0
    %433 = vmatpush1.msra.mxu0 0.0
    %434 = vmatprep.subr.mxu0 0.0
    %435 = vmatpush1.msra.mxu0 0.0
    %436 = vmatprep.subr.mxu0 0.0
    %437 = vmatpush1.msra.mxu0 0.0
    %438 = vmatprep.subr.mxu0 0.0
    %439 = vmatpush1.msra.mxu0 0.0
    %440 = vmatprep.subr.mxu0 0.0
    %441 = vmatpush1.msra.mxu0 0.0
    %442 = vmatprep.subr.mxu0 0.0
    %443 = vmatpush1.msra.mxu0 0.0
    %444 = vmatprep.subr.mxu0 0.0
    %445 = vmatpush1.msra.mxu0 0.0
    %446 = vmatprep.subr.mxu0 0.0
    %447 = vmatpush1.msra.mxu0 %v104
    %448 = vmatprep.subr.mxu0 0.0
    %449 = vmatpush1.msra.mxu0 %v103
    %450 = vmatprep.subr.mxu0 0.0
    %451 = vmatpush2.msra.mxu0 0.0
    %452 = vmatprep.subr.mxu0 0.0
    %453 = vmatpush2.msra.mxu0 0.0
    %454 = vmatprep.subr.mxu0 0.0
    %455 = vmatpush2.msra.mxu0 0.0
    %456 = vmatprep.subr.mxu0 0.0
    %457 = vmatpush2.msra.mxu0 0.0
    %458 = vmatprep.subr.mxu0 0.0
    %459 = vmatpush2.msra.mxu0 0.0
    %460 = vmatprep.subr.mxu0 0.0
    %461 = vmatpush2.msra.mxu0 0.0
    %462 = vmatprep.subr.mxu0 0.0
    %463 = vmatpush2.msra.mxu0 0.0
    %464 = vmatprep.subr.mxu0 0.0
    %465 = vmatpush2.msra.mxu0 0.0
    %466 = vmatprep.subr.mxu0 0.0
    %467 = vmatpush2.msra.mxu0 0.0
    %468 = vmatprep.subr.mxu0 0.0
    %469 = vmatpush2.msra.mxu0 0.0
    %470 = vmatprep.subr.mxu0 0.0
    %471 = vmatpush2.msra.mxu0 0.0
    %472 = vmatprep.subr.mxu0 0.0
    %473 = vmatpush2.msra.mxu0 0.0
    %474 = vmatprep.subr.mxu0 0.0
    %475 = vmatpush2.msra.mxu0 0.0
    %476 = vmatprep.subr.mxu0 0.0
    %477 = vmatpush2.msra.mxu0 0.0
    %478 = vmatprep.subr.mxu0 0.0
    %479 = vmatpush2.msra.mxu0 0.0
    %480 = vmatprep.subr.mxu0 0.0
    %481 = vmatpush2.msra.mxu0 0.0
    %482 = vmatprep.mubr.f32.mxu0 0.0
    %483 = vmatmul.mubr.f32.gmra.mxu0 %v416
    %v484 = vpop.f32.mrf.mxu0
    %v485 = vadd.f32 0.0, %v484
    %v486 = vpop.f32.mrf.mxu0
    %487 = vdwg.mxu0
    %490 = vset.pattern.permute.xlu0 0
    %491 = vperm.xlu0 %490, %v396
    %v492 = vpop.permute.xlu0 %491
    %493 = vset.pattern.permute.xlu0 0
    %494 = vperm.xlu0 %493, %v397
    %v495 = vpop.permute.xlu0 %494
    %v496 = vlaneseq
    %v497 = vshrl.u32 %v496, 7
    %v498 = vsub.s32 %v292, %v497
    %v499 = vrot.slane %v492, %v498
    %v500 = vlaneseq
    %v501 = vshrl.u32 %v500, 7
    %v502 = vsub.s32 %v297, %v501
    %v503 = vrot.slane %v495, %v502
    %v504 = vsel %vm302, %v503, %v499
    %v505 = vsel %vm415, %v504, 0
    %507 = vmatprep.subr.mxu0 0.0
    %508 = vmatpush1.msra.mxu0 0.0
    %509 = vmatprep.subr.mxu0 0.0
    %510 = vmatpush1.msra.mxu0 0.0
    %511 = vmatprep.subr.mxu0 0.0
    %512 = vmatpush1.msra.mxu0 0.0
    %513 = vmatprep.subr.mxu0 0.0
    %514 = vmatpush1.msra.mxu0 0.0
    %515 = vmatprep.subr.mxu0 0.0
    %516 = vmatpush1.msra.mxu0 0.0
    %517 = vmatprep.subr.mxu0 0.0
    %518 = vmatpush1.msra.mxu0 0.0
    %519 = vmatprep.subr.mxu0 0.0
    %520 = vmatpush1.msra.mxu0 0.0
    %521 = vmatprep.subr.mxu0 0.0
    %522 = vmatpush1.msra.mxu0 0.0
    %523 = vmatprep.subr.mxu0 0.0
    %524 = vmatpush1.msra.mxu0 0.0
    %525 = vmatprep.subr.mxu0 0.0
    %526 = vmatpush1.msra.mxu0 0.0
    %527 = vmatprep.subr.mxu0 0.0
    %528 = vmatpush1.msra.mxu0 0.0
    %529 = vmatprep.subr.mxu0 0.0
    %530 = vmatpush1.msra.mxu0 0.0
    %531 = vmatprep.subr.mxu0 0.0
    %532 = vmatpush1.msra.mxu0 0.0
    %533 = vmatprep.subr.mxu0 0.0
    %534 = vmatpush1.msra.mxu0 0.0
    %535 = vmatprep.subr.mxu0 0.0
    %536 = vmatpush1.msra.mxu0 %v106
    %537 = vmatprep.subr.mxu0 0.0
    %538 = vmatpush1.msra.mxu0 %v105
    %539 = vmatprep.subr.mxu0 0.0
    %540 = vmatpush2.msra.mxu0 0.0
    %541 = vmatprep.subr.mxu0 0.0
    %542 = vmatpush2.msra.mxu0 0.0
    %543 = vmatprep.subr.mxu0 0.0
    %544 = vmatpush2.msra.mxu0 0.0
    %545 = vmatprep.subr.mxu0 0.0
    %546 = vmatpush2.msra.mxu0 0.0
    %547 = vmatprep.subr.mxu0 0.0
    %548 = vmatpush2.msra.mxu0 0.0
    %549 = vmatprep.subr.mxu0 0.0
    %550 = vmatpush2.msra.mxu0 0.0
    %551 = vmatprep.subr.mxu0 0.0
    %552 = vmatpush2.msra.mxu0 0.0
    %553 = vmatprep.subr.mxu0 0.0
    %554 = vmatpush2.msra.mxu0 0.0
    %555 = vmatprep.subr.mxu0 0.0
    %556 = vmatpush2.msra.mxu0 0.0
    %557 = vmatprep.subr.mxu0 0.0
    %558 = vmatpush2.msra.mxu0 0.0
    %559 = vmatprep.subr.mxu0 0.0
    %560 = vmatpush2.msra.mxu0 0.0
    %561 = vmatprep.subr.mxu0 0.0
    %562 = vmatpush2.msra.mxu0 0.0
    %563 = vmatprep.subr.mxu0 0.0
    %564 = vmatpush2.msra.mxu0 0.0
    %565 = vmatprep.subr.mxu0 0.0
    %566 = vmatpush2.msra.mxu0 0.0
    %567 = vmatprep.subr.mxu0 0.0
    %568 = vmatpush2.msra.mxu0 0.0
    %569 = vmatprep.subr.mxu0 0.0
    %570 = vmatpush2.msra.mxu0 0.0
    %571 = vmatprep.mubr.f32.mxu0 0.0
    %572 = vmatmul.mubr.f32.gmra.mxu0 %v505
    %v573 = vpop.f32.mrf.mxu0
    %v574 = vadd.f32 0.0, %v573
    %v575 = vpop.f32.mrf.mxu0
    %576 = vdwg.mxu0
    %v577 = vld [vmem:[#allocation7] sm:$0x3]
    %v580 = vrot.slane %v574, 7
    %v581 = vsel %vm313, %v580, %v485
    %v582 = vsel %vm130, %v581, 0
    %584 = vmatprep.subr.mxu0 0.0
    %585 = vmatpush1.msra.mxu0 0.0
    %586 = vmatprep.subr.mxu0 0.0
    %587 = vmatpush1.msra.mxu0 0.0
    %588 = vmatprep.subr.mxu0 0.0
    %589 = vmatpush1.msra.mxu0 0.0
    %590 = vmatprep.subr.mxu0 0.0
    %591 = vmatpush1.msra.mxu0 0.0
    %592 = vmatprep.subr.mxu0 0.0
    %593 = vmatpush1.msra.mxu0 0.0
    %594 = vmatprep.subr.mxu0 0.0
    %595 = vmatpush1.msra.mxu0 0.0
    %596 = vmatprep.subr.mxu0 0.0
    %597 = vmatpush1.msra.mxu0 0.0
    %598 = vmatprep.subr.mxu0 0.0
    %599 = vmatpush1.msra.mxu0 0.0
    %600 = vmatprep.subr.mxu0 0.0
    %601 = vmatpush1.msra.mxu0 0.0
    %602 = vmatprep.subr.mxu0 0.0
    %603 = vmatpush1.msra.mxu0 0.0
    %604 = vmatprep.subr.mxu0 0.0
    %605 = vmatpush1.msra.mxu0 0.0
    %606 = vmatprep.subr.mxu0 0.0
    %607 = vmatpush1.msra.mxu0 0.0
    %608 = vmatprep.subr.mxu0 0.0
    %609 = vmatpush1.msra.mxu0 %v122
    %610 = vmatprep.subr.mxu0 0.0
    %611 = vmatpush1.msra.mxu0 %v121
    %612 = vmatprep.subr.mxu0 0.0
    %613 = vmatpush1.msra.mxu0 %v120
    %614 = vmatprep.subr.mxu0 0.0
    %615 = vmatpush1.msra.mxu0 %v119
    %616 = vmatprep.subr.mxu0 0.0
    %617 = vmatpush2.msra.mxu0 0.0
    %618 = vmatprep.subr.mxu0 0.0
    %619 = vmatpush2.msra.mxu0 0.0
    %620 = vmatprep.subr.mxu0 0.0
    %621 = vmatpush2.msra.mxu0 0.0
    %622 = vmatprep.subr.mxu0 0.0
    %623 = vmatpush2.msra.mxu0 0.0
    %624 = vmatprep.subr.mxu0 0.0
    %625 = vmatpush2.msra.mxu0 0.0
    %626 = vmatprep.subr.mxu0 0.0
    %627 = vmatpush2.msra.mxu0 0.0
    %628 = vmatprep.subr.mxu0 0.0
    %629 = vmatpush2.msra.mxu0 0.0
    %630 = vmatprep.subr.mxu0 0.0
    %631 = vmatpush2.msra.mxu0 0.0
    %632 = vmatprep.subr.mxu0 0.0
    %633 = vmatpush2.msra.mxu0 0.0
    %634 = vmatprep.subr.mxu0 0.0
    %635 = vmatpush2.msra.mxu0 0.0
    %636 = vmatprep.subr.mxu0 0.0
    %637 = vmatpush2.msra.mxu0 0.0
    %638 = vmatprep.subr.mxu0 0.0
    %639 = vmatpush2.msra.mxu0 0.0
    %640 = vmatprep.subr.mxu0 0.0
    %641 = vmatpush2.msra.mxu0 0.0
    %642 = vmatprep.subr.mxu0 0.0
    %643 = vmatpush2.msra.mxu0 0.0
    %644 = vmatprep.subr.mxu0 0.0
    %645 = vmatpush2.msra.mxu0 0.0
    %646 = vmatprep.subr.mxu0 0.0
    %647 = vmatpush2.msra.mxu0 0.0
    %648 = vmatprep.mubr.f32.mxu0 0.0
    %649 = vmatmul.mubr.f32.gmra.mxu0 %v582
    %v650 = vpop.f32.mrf.mxu0
    %v651 = vadd.f32 %v577, %v650
    %v652 = vpop.f32.mrf.mxu0
    %653 = vdwg.mxu0
    %655 = vrot.lane.b32.xlu0 %v217, 96
    %v656 = vpop.permute.xlu0 %655
    %v658 = vadd.f32 %v651, %v656
    %v659 = vxor.u32 %v658, 2147483648
    %v660 = vmul.f32 %v659, 1.442695
    %v661 = vpow.pop %v660
    %v662 = vadd.f32 %v661, 1.0
    %v663 = vrcp.pop %v662
    %v664 = vmul.f32 1.0, %v663
    %665 = vrot.lane.b32.xlu0 %v217, 32
    %v666 = vpop.permute.xlu0 %665
    %v668 = vmul.f32 %v664, %v666
    %670 = vrot.lane.b32.xlu0 %v668, 64
    %v671 = vpop.permute.xlu0 %670
    %v673 = vadd.f32 %v651, %v671
    %v674 = vtanh.pop %v673
    %v675 = vsub.f32 1.0, %v664
    %677 = vrot.lane.b32.xlu0 %v674, 96
    %v678 = vpop.permute.xlu0 %677
    %v680 = vmul.f32 %v675, %v678
    %681 = vrot.lane.b32.xlu0 %v129, 32
    %v682 = vpop.permute.xlu0 %681
    %v684 = vmul.f32 %v664, %v682
    %v685 = vadd.f32 %v680, %v684
    %687 = vrot.lane.b32.xlu0 %v685, 96
    %v688 = vpop.permute.xlu0 %687
    %v689 = vsel %vm130, %v688, 0
    %691 = vmatprep.subr.mxu0 0.0
    %692 = vmatpush1.msra.mxu0 0.0
    %693 = vmatprep.subr.mxu0 0.0
    %694 = vmatpush1.msra.mxu0 0.0
    %695 = vmatprep.subr.mxu0 0.0
    %696 = vmatpush1.msra.mxu0 0.0
    %697 = vmatprep.subr.mxu0 0.0
    %698 = vmatpush1.msra.mxu0 0.0
    %699 = vmatprep.subr.mxu0 0.0
    %700 = vmatpush1.msra.mxu0 0.0
    %701 = vmatprep.subr.mxu0 0.0
    %702 = vmatpush1.msra.mxu0 0.0
    %703 = vmatprep.subr.mxu0 0.0
    %704 = vmatpush1.msra.mxu0 0.0
    %705 = vmatprep.subr.mxu0 0.0
    %706 = vmatpush1.msra.mxu0 0.0
    %707 = vmatprep.subr.mxu0 0.0
    %708 = vmatpush1.msra.mxu0 0.0
    %709 = vmatprep.subr.mxu0 0.0
    %710 = vmatpush1.msra.mxu0 0.0
    %711 = vmatprep.subr.mxu0 0.0
    %712 = vmatpush1.msra.mxu0 0.0
    %713 = vmatprep.subr.mxu0 0.0
    %714 = vmatpush1.msra.mxu0 0.0
    %715 = vmatprep.subr.mxu0 0.0
    %716 = vmatpush1.msra.mxu0 %v117
    %717 = vmatprep.subr.mxu0 0.0
    %718 = vmatpush1.msra.mxu0 %v114
    %719 = vmatprep.subr.mxu0 0.0
    %720 = vmatpush1.msra.mxu0 %v111
    %721 = vmatprep.subr.mxu0 0.0
    %722 = vmatpush1.msra.mxu0 %v108
    %723 = vmatprep.subr.mxu0 0.0
    %724 = vmatpush2.msra.mxu0 0.0
    %725 = vmatprep.subr.mxu0 0.0
    %726 = vmatpush2.msra.mxu0 0.0
    %727 = vmatprep.subr.mxu0 0.0
    %728 = vmatpush2.msra.mxu0 0.0
    %729 = vmatprep.subr.mxu0 0.0
    %730 = vmatpush2.msra.mxu0 0.0
    %731 = vmatprep.subr.mxu0 0.0
    %732 = vmatpush2.msra.mxu0 0.0
    %733 = vmatprep.subr.mxu0 0.0
    %734 = vmatpush2.msra.mxu0 0.0
    %735 = vmatprep.subr.mxu0 0.0
    %736 = vmatpush2.msra.mxu0 0.0
    %737 = vmatprep.subr.mxu0 0.0
    %738 = vmatpush2.msra.mxu0 0.0
    %739 = vmatprep.subr.mxu0 0.0
    %740 = vmatpush2.msra.mxu0 0.0
    %741 = vmatprep.subr.mxu0 0.0
    %742 = vmatpush2.msra.mxu0 0.0
    %743 = vmatprep.subr.mxu0 0.0
    %744 = vmatpush2.msra.mxu0 0.0
    %745 = vmatprep.subr.mxu0 0.0
    %746 = vmatpush2.msra.mxu0 0.0
    %747 = vmatprep.subr.mxu0 0.0
    %748 = vmatpush2.msra.mxu0 0.0
    %749 = vmatprep.subr.mxu0 0.0
    %750 = vmatpush2.msra.mxu0 0.0
    %751 = vmatprep.subr.mxu0 0.0
    %752 = vmatpush2.msra.mxu0 0.0
    %753 = vmatprep.subr.mxu0 0.0
    %754 = vmatpush2.msra.mxu0 0.0
    %755 = vmatprep.mubr.f32.mxu0 0.0
    %756 = vmatmul.mubr.f32.gmra.mxu0 %v689
    %v757 = vpop.f32.mrf.mxu0
    %v758 = vadd.f32 0.0, %v757
    %v759 = vpop.f32.mrf.mxu0
    %760 = vdwg.mxu0
    %v761 = vlaneseq
    %v762 = vshrl.u32 %v761, 7
    %v763 = vsub.s32 0, %v762
    %v764 = vrot.slane %v125, %v763
    %v765 = vadd.f32 %v758, %v764
    %v766 = vmax.f32 %v765, 0.0
    %v768 = vsel %vm130, %v766, 0
    %770 = vmatprep.subr.mxu0 0.0
    %771 = vmatpush1.msra.mxu0 0.0
    %772 = vmatprep.subr.mxu0 0.0
    %773 = vmatpush1.msra.mxu0 0.0
    %774 = vmatprep.subr.mxu0 0.0
    %775 = vmatpush1.msra.mxu0 0.0
    %776 = vmatprep.subr.mxu0 0.0
    %777 = vmatpush1.msra.mxu0 0.0
    %778 = vmatprep.subr.mxu0 0.0
    %779 = vmatpush1.msra.mxu0 0.0
    %780 = vmatprep.subr.mxu0 0.0
    %781 = vmatpush1.msra.mxu0 0.0
    %782 = vmatprep.subr.mxu0 0.0
    %783 = vmatpush1.msra.mxu0 0.0
    %784 = vmatprep.subr.mxu0 0.0
    %785 = vmatpush1.msra.mxu0 0.0
    %786 = vmatprep.subr.mxu0 0.0
    %787 = vmatpush1.msra.mxu0 0.0
    %788 = vmatprep.subr.mxu0 0.0
    %789 = vmatpush1.msra.mxu0 0.0
    %790 = vmatprep.subr.mxu0 0.0
    %791 = vmatpush1.msra.mxu0 0.0
    %792 = vmatprep.subr.mxu0 0.0
    %793 = vmatpush1.msra.mxu0 0.0
    %794 = vmatprep.subr.mxu0 0.0
    %795 = vmatpush1.msra.mxu0 %v118
    %796 = vmatprep.subr.mxu0 0.0
    %797 = vmatpush1.msra.mxu0 %v115
    %798 = vmatprep.subr.mxu0 0.0
    %799 = vmatpush1.msra.mxu0 %v112
    %800 = vmatprep.subr.mxu0 0.0
    %801 = vmatpush1.msra.mxu0 %v109
    %802 = vmatprep.subr.mxu0 0.0
    %803 = vmatpush2.msra.mxu0 0.0
    %804 = vmatprep.subr.mxu0 0.0
    %805 = vmatpush2.msra.mxu0 0.0
    %806 = vmatprep.subr.mxu0 0.0
    %807 = vmatpush2.msra.mxu0 0.0
    %808 = vmatprep.subr.mxu0 0.0
    %809 = vmatpush2.msra.mxu0 0.0
    %810 = vmatprep.subr.mxu0 0.0
    %811 = vmatpush2.msra.mxu0 0.0
    %812 = vmatprep.subr.mxu0 0.0
    %813 = vmatpush2.msra.mxu0 0.0
    %814 = vmatprep.subr.mxu0 0.0
    %815 = vmatpush2.msra.mxu0 0.0
    %816 = vmatprep.subr.mxu0 0.0
    %817 = vmatpush2.msra.mxu0 0.0
    %818 = vmatprep.subr.mxu0 0.0
    %819 = vmatpush2.msra.mxu0 0.0
    %820 = vmatprep.subr.mxu0 0.0
    %821 = vmatpush2.msra.mxu0 0.0
    %822 = vmatprep.subr.mxu0 0.0
    %823 = vmatpush2.msra.mxu0 0.0
    %824 = vmatprep.subr.mxu0 0.0
    %825 = vmatpush2.msra.mxu0 0.0
    %826 = vmatprep.subr.mxu0 0.0
    %827 = vmatpush2.msra.mxu0 0.0
    %828 = vmatprep.subr.mxu0 0.0
    %829 = vmatpush2.msra.mxu0 0.0
    %830 = vmatprep.subr.mxu0 0.0
    %831 = vmatpush2.msra.mxu0 0.0
    %832 = vmatprep.subr.mxu0 0.0
    %833 = vmatpush2.msra.mxu0 0.0
    %834 = vmatprep.mubr.f32.mxu0 0.0
    %835 = vmatmul.mubr.f32.gmra.mxu0 %v768
    %v836 = vpop.f32.mrf.mxu0
    %v837 = vadd.f32 0.0, %v836
    %v838 = vpop.f32.mrf.mxu0
    %839 = vdwg.mxu0
    %v840 = vlaneseq
    %v841 = vshrl.u32 %v840, 7
    %v842 = vsub.s32 0, %v841
    %v843 = vrot.slane %v126, %v842
    %v844 = vadd.f32 %v837, %v843
    %vm845 = vcmask 189440
    %846 = vst.msk [vmem:[#allocation11] sm:$0x3] %vm845, %v844
    %vm848 = vcmask 254976
    %849 = vst.msk [vmem:[#allocation12] sm:$0x3] %vm848, %v688
    %v850 = vsel %vm313, %v504, %v414
    %852 = vst.msk [vmem:[#allocation14] sm:$0x3] %vm316, %v850
    %853 = vmatprep.subr.mxu0 0.0
    %854 = vmatpush1.msra.mxu0 0.0
    %855 = vmatprep.subr.mxu0 0.0
    %856 = vmatpush1.msra.mxu0 0.0
    %857 = vmatprep.subr.mxu0 0.0
    %858 = vmatpush1.msra.mxu0 0.0
    %859 = vmatprep.subr.mxu0 0.0
    %860 = vmatpush1.msra.mxu0 0.0
    %861 = vmatprep.subr.mxu0 0.0
    %862 = vmatpush1.msra.mxu0 0.0
    %863 = vmatprep.subr.mxu0 0.0
    %864 = vmatpush1.msra.mxu0 0.0
    %865 = vmatprep.subr.mxu0 0.0
    %866 = vmatpush1.msra.mxu0 0.0
    %867 = vmatprep.subr.mxu0 0.0
    %868 = vmatpush1.msra.mxu0 0.0
    %869 = vmatprep.subr.mxu0 0.0
    %870 = vmatpush1.msra.mxu0 0.0
    %871 = vmatprep.subr.mxu0 0.0
    %872 = vmatpush1.msra.mxu0 0.0
    %873 = vmatprep.subr.mxu0 0.0
    %874 = vmatpush1.msra.mxu0 0.0
    %875 = vmatprep.subr.mxu0 0.0
    %876 = vmatpush1.msra.mxu0 0.0
    %877 = vmatprep.subr.mxu0 0.0
    %878 = vmatpush1.msra.mxu0 %v116
    %879 = vmatprep.subr.mxu0 0.0
    %880 = vmatpush1.msra.mxu0 %v113
    %881 = vmatprep.subr.mxu0 0.0
    %882 = vmatpush1.msra.mxu0 %v110
    %883 = vmatprep.subr.mxu0 0.0
    %884 = vmatpush1.msra.mxu0 %v107
    %885 = vmatprep.subr.mxu0 0.0
    %886 = vmatpush2.msra.mxu0 0.0
    %887 = vmatprep.subr.mxu0 0.0
    %888 = vmatpush2.msra.mxu0 0.0
    %889 = vmatprep.subr.mxu0 0.0
    %890 = vmatpush2.msra.mxu0 0.0
    %891 = vmatprep.subr.mxu0 0.0
    %892 = vmatpush2.msra.mxu0 0.0
    %893 = vmatprep.subr.mxu0 0.0
    %894 = vmatpush2.msra.mxu0 0.0
    %895 = vmatprep.subr.mxu0 0.0
    %896 = vmatpush2.msra.mxu0 0.0
    %897 = vmatprep.subr.mxu0 0.0
    %898 = vmatpush2.msra.mxu0 0.0
    %899 = vmatprep.subr.mxu0 0.0
    %900 = vmatpush2.msra.mxu0 0.0
    %901 = vmatprep.subr.mxu0 0.0
    %902 = vmatpush2.msra.mxu0 0.0
    %903 = vmatprep.subr.mxu0 0.0
    %904 = vmatpush2.msra.mxu0 0.0
    %905 = vmatprep.subr.mxu0 0.0
    %906 = vmatpush2.msra.mxu0 0.0
    %907 = vmatprep.subr.mxu0 0.0
    %908 = vmatpush2.msra.mxu0 0.0
    %909 = vmatprep.subr.mxu0 0.0
    %910 = vmatpush2.msra.mxu0 0.0
    %911 = vmatprep.subr.mxu0 0.0
    %912 = vmatpush2.msra.mxu0 0.0
    %913 = vmatprep.subr.mxu0 0.0
    %914 = vmatpush2.msra.mxu0 0.0
    %915 = vmatprep.subr.mxu0 0.0
    %916 = vmatpush2.msra.mxu0 0.0
    %917 = vmatprep.mubr.f32.mxu0 0.0
    %918 = vmatmul.mubr.f32.gmra.mxu0 %v689
    %v919 = vpop.f32.mrf.mxu0
    %v920 = vadd.f32 0.0, %v919
    %v921 = vpop.f32.mrf.mxu0
    %922 = vdwg.mxu0
    %v923 = vadd.f32 %v920, %v207
    %v924 = vadd.f32 %v920, %v215
    %v927 = vunpack.c.l.s4 1966171168
    %v928 = vunpack.c.0.s8 %v927
    %v929 = vlaneseq
    %v930 = vshrl.u32 %v929, 7
    %v931 = vsub.s32 %v928, %v930
    %v932 = vrot.slane %v923, %v931
    %v933 = vcombine.high %v932, %v932
    %v935 = vunpack.c.l.s4 1966171168
    %v936 = vunpack.c.0.s8 %v935
    %v937 = vlaneseq
    %v938 = vshrl.u32 %v937, 7
    %v939 = vsub.s32 %v936, %v938
    %v940 = vrot.slane %v932, %v939
    %v942 = vunpack.c.l.s4 1966171168
    %v943 = vunpack.c.0.s8 %v942
    %v944 = vlaneseq
    %v945 = vshrl.u32 %v944, 7
    %v946 = vsub.s32 %v943, %v945
    %v947 = vrot.slane %v933, %v946
    %v948 = vlaneseq
    %v949 = vshrl.u32 %v948, 7
    %v950 = vsub.s32 0, %v949
    %v951 = vrot.slane %v940, %v950
    %v952 = vlaneseq
    %v953 = vshrl.u32 %v952, 7
    %v954 = vsub.s32 0, %v953
    %v955 = vrot.slane %v947, %v954
    %v958 = vadd.f32 %v99, %v951
    %v959 = vadd.f32 %v100, %v951
    %v960 = vadd.f32 %v101, %v955
    %v961 = vadd.f32 %v102, %v955
    %v962 = vtanh.pop %v958
    %v963 = vtanh.pop %v959
    %v964 = vtanh.pop %v960
    %v965 = vtanh.pop %v961
    %v966 = vmul.f32 %v962, %v262
    %v967 = vmul.f32 %v963, %v262
    %v968 = vmul.f32 %v964, %v262
    %v969 = vmul.f32 %v965, %v262
    %v970 = vsel %vm130, %v966, 0.0
    %971 = vadd.xlane.f32.xlu0 %v970
    %v972 = vpop.xlane.xlu0 %971
    %v973 = vsel %vm130, %v967, 0.0
    %974 = vadd.xlane.f32.xlu0 %v973
    %v975 = vpop.xlane.xlu0 %974
    %v976 = vsel %vm130, %v968, 0.0
    %977 = vadd.xlane.f32.xlu0 %v976
    %v978 = vpop.xlane.xlu0 %977
    %v979 = vsel %vm130, %v969, 0.0
    %980 = vadd.xlane.f32.xlu0 %v979
    %v981 = vpop.xlane.xlu0 %980
    %v982 = vadd.f32 %v972, %v281
    %v983 = vadd.f32 %v975, %v281
    %v984 = vadd.f32 %v978, %v281
    %v985 = vadd.f32 %v981, %v281
    %v990 = vlaneseq
    %v991 = vshrl.u32 %v990, 7
    %v992 = vsub.s32 %v292, %v991
    %v993 = vrot.slane %v982, %v992
    %v994 = vlaneseq
    %v995 = vshrl.u32 %v994, 7
    %v996 = vsub.s32 %v297, %v995
    %v997 = vrot.slane %v983, %v996
    %v998 = vsel %vm302, %v997, %v993
    %v999 = vlaneseq
    %v1000 = vshrl.u32 %v999, 7
    %v1001 = vsub.s32 %v292, %v1000
    %v1002 = vrot.slane %v984, %v1001
    %v1003 = vlaneseq
    %v1004 = vshrl.u32 %v1003, 7
    %v1005 = vsub.s32 %v297, %v1004
    %v1006 = vrot.slane %v985, %v1005
    %v1007 = vsel %vm302, %v1006, %v1002
    %v1008 = vsel %vm313, %v1007, %v998
    %v1010 = vsel %vm316, %v1008, -inf
    %1011 = vmax.xlane.f32.xlu0 %v1010
    %v1012 = vpop.xlane.xlu0 %1011
    %v1014 = vlaneseq
    %v1015 = vshrl.u32 %v1014, 7
    %v1016 = vsub.s32 0, %v1015
    %v1017 = vrot.slane %v1012, %v1016
    %v1018 = vlaneseq
    %v1019 = vshrl.u32 %v1018, 7
    %v1020 = vsub.s32 1, %v1019
    %v1021 = vrot.slane %v1012, %v1020
    %v1024 = vsub.f32 %v982, %v1017
    %v1025 = vsub.f32 %v983, %v1017
    %v1026 = vsub.f32 %v984, %v1021
    %v1027 = vsub.f32 %v985, %v1021
    %v1028 = vmul.f32 %v1024, 1.442695
    %v1029 = vpow.pop %v1028
    %v1030 = vmul.f32 %v1025, 1.442695
    %v1031 = vpow.pop %v1030
    %v1032 = vmul.f32 %v1026, 1.442695
    %v1033 = vpow.pop %v1032
    %v1034 = vmul.f32 %v1027, 1.442695
    %v1035 = vpow.pop %v1034
    %1040 = vset.pattern.permute.xlu0 0
    %1041 = vperm.xlu0 %1040, %v1029
    %v1042 = vpop.permute.xlu0 %1041
    %1043 = vset.pattern.permute.xlu0 0
    %1044 = vperm.xlu0 %1043, %v1031
    %v1045 = vpop.permute.xlu0 %1044
    %1046 = vset.pattern.permute.xlu0 0
    %1047 = vperm.xlu0 %1046, %v1033
    %v1048 = vpop.permute.xlu0 %1047
    %1049 = vset.pattern.permute.xlu0 0
    %1050 = vperm.xlu0 %1049, %v1035
    %v1051 = vpop.permute.xlu0 %1050
    %v1052 = vlaneseq
    %v1053 = vshrl.u32 %v1052, 7
    %v1054 = vsub.s32 %v292, %v1053
    %v1055 = vrot.slane %v1042, %v1054
    %v1056 = vlaneseq
    %v1057 = vshrl.u32 %v1056, 7
    %v1058 = vsub.s32 %v297, %v1057
    %v1059 = vrot.slane %v1045, %v1058
    %v1060 = vsel %vm302, %v1059, %v1055
    %v1061 = vlaneseq
    %v1062 = vshrl.u32 %v1061, 7
    %v1063 = vsub.s32 %v292, %v1062
    %v1064 = vrot.slane %v1048, %v1063
    %v1065 = vlaneseq
    %v1066 = vshrl.u32 %v1065, 7
    %v1067 = vsub.s32 %v297, %v1066
    %v1068 = vrot.slane %v1051, %v1067
    %v1069 = vsel %vm302, %v1068, %v1064
    %v1070 = vsel %vm313, %v1069, %v1060
    %v1072 = vsel %vm316, %v1070, 0.0
    %1073 = vadd.xlane.f32.xlu0 %v1072
    %v1074 = vpop.xlane.xlu0 %1073
    %v1075 = vrcp.pop %v1074
    %v1077 = vlaneseq
    %v1078 = vshrl.u32 %v1077, 7
    %v1079 = vsub.s32 0, %v1078
    %v1080 = vrot.slane %v1075, %v1079
    %v1081 = vlaneseq
    %v1082 = vshrl.u32 %v1081, 7
    %v1083 = vsub.s32 1, %v1082
    %v1084 = vrot.slane %v1075, %v1083
    %v1087 = vmul.f32 %v1029, %v1080
    %v1088 = vmul.f32 %v1031, %v1080
    %v1089 = vmul.f32 %v1033, %v1084
    %v1090 = vmul.f32 %v1035, %v1084
    %1093 = vset.pattern.permute.xlu0 0
    %1094 = vperm.xlu0 %1093, %v1087
    %v1095 = vpop.permute.xlu0 %1094
    %1096 = vset.pattern.permute.xlu0 0
    %1097 = vperm.xlu0 %1096, %v1088
    %v1098 = vpop.permute.xlu0 %1097
    %v1099 = vlaneseq
    %v1100 = vshrl.u32 %v1099, 7
    %v1101 = vsub.s32 %v292, %v1100
    %v1102 = vrot.slane %v1095, %v1101
    %v1103 = vlaneseq
    %v1104 = vshrl.u32 %v1103, 7
    %v1105 = vsub.s32 %v297, %v1104
    %v1106 = vrot.slane %v1098, %v1105
    %v1107 = vsel %vm302, %v1106, %v1102
    %v1108 = vsel %vm415, %v1107, 0
    %1110 = vmatprep.subr.mxu0 0.0
    %1111 = vmatpush1.msra.mxu0 0.0
    %1112 = vmatprep.subr.mxu0 0.0
    %1113 = vmatpush1.msra.mxu0 0.0
    %1114 = vmatprep.subr.mxu0 0.0
    %1115 = vmatpush1.msra.mxu0 0.0
    %1116 = vmatprep.subr.mxu0 0.0
    %1117 = vmatpush1.msra.mxu0 0.0
    %1118 = vmatprep.subr.mxu0 0.0
    %1119 = vmatpush1.msra.mxu0 0.0
    %1120 = vmatprep.subr.mxu0 0.0
    %1121 = vmatpush1.msra.mxu0 0.0
    %1122 = vmatprep.subr.mxu0 0.0
    %1123 = vmatpush1.msra.mxu0 0.0
    %1124 = vmatprep.subr.mxu0 0.0
    %1125 = vmatpush1.msra.mxu0 0.0
    %1126 = vmatprep.subr.mxu0 0.0
    %1127 = vmatpush1.msra.mxu0 0.0
    %1128 = vmatprep.subr.mxu0 0.0
    %1129 = vmatpush1.msra.mxu0 0.0
    %1130 = vmatprep.subr.mxu0 0.0
    %1131 = vmatpush1.msra.mxu0 0.0
    %1132 = vmatprep.subr.mxu0 0.0
    %1133 = vmatpush1.msra.mxu0 0.0
    %1134 = vmatprep.subr.mxu0 0.0
    %1135 = vmatpush1.msra.mxu0 0.0
    %1136 = vmatprep.subr.mxu0 0.0
    %1137 = vmatpush1.msra.mxu0 0.0
    %1138 = vmatprep.subr.mxu0 0.0
    %1139 = vmatpush1.msra.mxu0 %v104
    %1140 = vmatprep.subr.mxu0 0.0
    %1141 = vmatpush1.msra.mxu0 %v103
    %1142 = vmatprep.subr.mxu0 0.0
    %1143 = vmatpush2.msra.mxu0 0.0
    %1144 = vmatprep.subr.mxu0 0.0
    %1145 = vmatpush2.msra.mxu0 0.0
    %1146 = vmatprep.subr.mxu0 0.0
    %1147 = vmatpush2.msra.mxu0 0.0
    %1148 = vmatprep.subr.mxu0 0.0
    %1149 = vmatpush2.msra.mxu0 0.0
    %1150 = vmatprep.subr.mxu0 0.0
    %1151 = vmatpush2.msra.mxu0 0.0
    %1152 = vmatprep.subr.mxu0 0.0
    %1153 = vmatpush2.msra.mxu0 0.0
    %1154 = vmatprep.subr.mxu0 0.0
    %1155 = vmatpush2.msra.mxu0 0.0
    %1156 = vmatprep.subr.mxu0 0.0
    %1157 = vmatpush2.msra.mxu0 0.0
    %1158 = vmatprep.subr.mxu0 0.0
    %1159 = vmatpush2.msra.mxu0 0.0
    %1160 = vmatprep.subr.mxu0 0.0
    %1161 = vmatpush2.msra.mxu0 0.0
    %1162 = vmatprep.subr.mxu0 0.0
    %1163 = vmatpush2.msra.mxu0 0.0
    %1164 = vmatprep.subr.mxu0 0.0
    %1165 = vmatpush2.msra.mxu0 0.0
    %1166 = vmatprep.subr.mxu0 0.0
    %1167 = vmatpush2.msra.mxu0 0.0
    %1168 = vmatprep.subr.mxu0 0.0
    %1169 = vmatpush2.msra.mxu0 0.0
    %1170 = vmatprep.subr.mxu0 0.0
    %1171 = vmatpush2.msra.mxu0 0.0
    %1172 = vmatprep.subr.mxu0 0.0
    %1173 = vmatpush2.msra.mxu0 0.0
    %1174 = vmatprep.mubr.f32.mxu0 0.0
    %1175 = vmatmul.mubr.f32.gmra.mxu0 %v1108
    %v1176 = vpop.f32.mrf.mxu0
    %v1177 = vadd.f32 0.0, %v1176
    %v1178 = vpop.f32.mrf.mxu0
    %1179 = vdwg.mxu0
    %1182 = vset.pattern.permute.xlu0 0
    %1183 = vperm.xlu0 %1182, %v1089
    %v1184 = vpop.permute.xlu0 %1183
    %1185 = vset.pattern.permute.xlu0 0
    %1186 = vperm.xlu0 %1185, %v1090
    %v1187 = vpop.permute.xlu0 %1186
    %v1188 = vlaneseq
    %v1189 = vshrl.u32 %v1188, 7
    %v1190 = vsub.s32 %v292, %v1189
    %v1191 = vrot.slane %v1184, %v1190
    %v1192 = vlaneseq
    %v1193 = vshrl.u32 %v1192, 7
    %v1194 = vsub.s32 %v297, %v1193
    %v1195 = vrot.slane %v1187, %v1194
    %v1196 = vsel %vm302, %v1195, %v1191
    %v1197 = vsel %vm415, %v1196, 0
    %1199 = vmatprep.subr.mxu0 0.0
    %1200 = vmatpush1.msra.mxu0 0.0
    %1201 = vmatprep.subr.mxu0 0.0
    %1202 = vmatpush1.msra.mxu0 0.0
    %1203 = vmatprep.subr.mxu0 0.0
    %1204 = vmatpush1.msra.mxu0 0.0
    %1205 = vmatprep.subr.mxu0 0.0
    %1206 = vmatpush1.msra.mxu0 0.0
    %1207 = vmatprep.subr.mxu0 0.0
    %1208 = vmatpush1.msra.mxu0 0.0
    %1209 = vmatprep.subr.mxu0 0.0
    %1210 = vmatpush1.msra.mxu0 0.0
    %1211 = vmatprep.subr.mxu0 0.0
    %1212 = vmatpush1.msra.mxu0 0.0
    %1213 = vmatprep.subr.mxu0 0.0
    %1214 = vmatpush1.msra.mxu0 0.0
    %1215 = vmatprep.subr.mxu0 0.0
    %1216 = vmatpush1.msra.mxu0 0.0
    %1217 = vmatprep.subr.mxu0 0.0
    %1218 = vmatpush1.msra.mxu0 0.0
    %1219 = vmatprep.subr.mxu0 0.0
    %1220 = vmatpush1.msra.mxu0 0.0
    %1221 = vmatprep.subr.mxu0 0.0
    %1222 = vmatpush1.msra.mxu0 0.0
    %1223 = vmatprep.subr.mxu0 0.0
    %1224 = vmatpush1.msra.mxu0 0.0
    %1225 = vmatprep.subr.mxu0 0.0
    %1226 = vmatpush1.msra.mxu0 0.0
    %1227 = vmatprep.subr.mxu0 0.0
    %1228 = vmatpush1.msra.mxu0 %v106
    %1229 = vmatprep.subr.mxu0 0.0
    %1230 = vmatpush1.msra.mxu0 %v105
    %1231 = vmatprep.subr.mxu0 0.0
    %1232 = vmatpush2.msra.mxu0 0.0
    %1233 = vmatprep.subr.mxu0 0.0
    %1234 = vmatpush2.msra.mxu0 0.0
    %1235 = vmatprep.subr.mxu0 0.0
    %1236 = vmatpush2.msra.mxu0 0.0
    %1237 = vmatprep.subr.mxu0 0.0
    %1238 = vmatpush2.msra.mxu0 0.0
    %1239 = vmatprep.subr.mxu0 0.0
    %1240 = vmatpush2.msra.mxu0 0.0
    %1241 = vmatprep.subr.mxu0 0.0
    %1242 = vmatpush2.msra.mxu0 0.0
    %1243 = vmatprep.subr.mxu0 0.0
    %1244 = vmatpush2.msra.mxu0 0.0
    %1245 = vmatprep.subr.mxu0 0.0
    %1246 = vmatpush2.msra.mxu0 0.0
    %1247 = vmatprep.subr.mxu0 0.0
    %1248 = vmatpush2.msra.mxu0 0.0
    %1249 = vmatprep.subr.mxu0 0.0
    %1250 = vmatpush2.msra.mxu0 0.0
    %1251 = vmatprep.subr.mxu0 0.0
    %1252 = vmatpush2.msra.mxu0 0.0
    %1253 = vmatprep.subr.mxu0 0.0
    %1254 = vmatpush2.msra.mxu0 0.0
    %1255 = vmatprep.subr.mxu0 0.0
    %1256 = vmatpush2.msra.mxu0 0.0
    %1257 = vmatprep.subr.mxu0 0.0
    %1258 = vmatpush2.msra.mxu0 0.0
    %1259 = vmatprep.subr.mxu0 0.0
    %1260 = vmatpush2.msra.mxu0 0.0
    %1261 = vmatprep.subr.mxu0 0.0
    %1262 = vmatpush2.msra.mxu0 0.0
    %1263 = vmatprep.mubr.f32.mxu0 0.0
    %1264 = vmatmul.mubr.f32.gmra.mxu0 %v1197
    %v1265 = vpop.f32.mrf.mxu0
    %v1266 = vadd.f32 0.0, %v1265
    %v1267 = vpop.f32.mrf.mxu0
    %1268 = vdwg.mxu0
    %s1269 = scalar_lea.vmem [#allocation7], 2
    %v1270 = vld [vmem:[%s1269] sm:$0x3]
    %v1273 = vrot.slane %v1266, 7
    %v1274 = vsel %vm313, %v1273, %v1177
    %v1275 = vsel %vm130, %v1274, 0
    %1277 = vmatprep.subr.mxu0 0.0
    %1278 = vmatpush1.msra.mxu0 0.0
    %1279 = vmatprep.subr.mxu0 0.0
    %1280 = vmatpush1.msra.mxu0 0.0
    %1281 = vmatprep.subr.mxu0 0.0
    %1282 = vmatpush1.msra.mxu0 0.0
    %1283 = vmatprep.subr.mxu0 0.0
    %1284 = vmatpush1.msra.mxu0 0.0
    %1285 = vmatprep.subr.mxu0 0.0
    %1286 = vmatpush1.msra.mxu0 0.0
    %1287 = vmatprep.subr.mxu0 0.0
    %1288 = vmatpush1.msra.mxu0 0.0
    %1289 = vmatprep.subr.mxu0 0.0
    %1290 = vmatpush1.msra.mxu0 0.0
    %1291 = vmatprep.subr.mxu0 0.0
    %1292 = vmatpush1.msra.mxu0 0.0
    %1293 = vmatprep.subr.mxu0 0.0
    %1294 = vmatpush1.msra.mxu0 0.0
    %1295 = vmatprep.subr.mxu0 0.0
    %1296 = vmatpush1.msra.mxu0 0.0
    %1297 = vmatprep.subr.mxu0 0.0
    %1298 = vmatpush1.msra.mxu0 0.0
    %1299 = vmatprep.subr.mxu0 0.0
    %1300 = vmatpush1.msra.mxu0 0.0
    %1301 = vmatprep.subr.mxu0 0.0
    %1302 = vmatpush1.msra.mxu0 %v122
    %1303 = vmatprep.subr.mxu0 0.0
    %1304 = vmatpush1.msra.mxu0 %v121
    %1305 = vmatprep.subr.mxu0 0.0
    %1306 = vmatpush1.msra.mxu0 %v120
    %1307 = vmatprep.subr.mxu0 0.0
    %1308 = vmatpush1.msra.mxu0 %v119
    %1309 = vmatprep.subr.mxu0 0.0
    %1310 = vmatpush2.msra.mxu0 0.0
    %1311 = vmatprep.subr.mxu0 0.0
    %1312 = vmatpush2.msra.mxu0 0.0
    %1313 = vmatprep.subr.mxu0 0.0
    %1314 = vmatpush2.msra.mxu0 0.0
    %1315 = vmatprep.subr.mxu0 0.0
    %1316 = vmatpush2.msra.mxu0 0.0
    %1317 = vmatprep.subr.mxu0 0.0
    %1318 = vmatpush2.msra.mxu0 0.0
    %1319 = vmatprep.subr.mxu0 0.0
    %1320 = vmatpush2.msra.mxu0 0.0
    %1321 = vmatprep.subr.mxu0 0.0
    %1322 = vmatpush2.msra.mxu0 0.0
    %1323 = vmatprep.subr.mxu0 0.0
    %1324 = vmatpush2.msra.mxu0 0.0
    %1325 = vmatprep.subr.mxu0 0.0
    %1326 = vmatpush2.msra.mxu0 0.0
    %1327 = vmatprep.subr.mxu0 0.0
    %1328 = vmatpush2.msra.mxu0 0.0
    %1329 = vmatprep.subr.mxu0 0.0
    %1330 = vmatpush2.msra.mxu0 0.0
    %1331 = vmatprep.subr.mxu0 0.0
    %1332 = vmatpush2.msra.mxu0 0.0
    %1333 = vmatprep.subr.mxu0 0.0
    %1334 = vmatpush2.msra.mxu0 0.0
    %1335 = vmatprep.subr.mxu0 0.0
    %1336 = vmatpush2.msra.mxu0 0.0
    %1337 = vmatprep.subr.mxu0 0.0
    %1338 = vmatpush2.msra.mxu0 0.0
    %1339 = vmatprep.subr.mxu0 0.0
    %1340 = vmatpush2.msra.mxu0 0.0
    %1341 = vmatprep.mubr.f32.mxu0 0.0
    %1342 = vmatmul.mubr.f32.gmra.mxu0 %v1275
    %v1343 = vpop.f32.mrf.mxu0
    %v1344 = vadd.f32 %v1270, %v1343
    %v1345 = vpop.f32.mrf.mxu0
    %1346 = vdwg.mxu0
    %1348 = vrot.lane.b32.xlu0 %v924, 96
    %v1349 = vpop.permute.xlu0 %1348
    %v1351 = vadd.f32 %v1344, %v1349
    %v1352 = vxor.u32 %v1351, 2147483648
    %v1353 = vmul.f32 %v1352, 1.442695
    %v1354 = vpow.pop %v1353
    %v1355 = vadd.f32 %v1354, 1.0
    %v1356 = vrcp.pop %v1355
    %v1357 = vmul.f32 1.0, %v1356
    %1358 = vrot.lane.b32.xlu0 %v924, 32
    %v1359 = vpop.permute.xlu0 %1358
    %v1361 = vmul.f32 %v1357, %v1359
    %1363 = vrot.lane.b32.xlu0 %v1361, 64
    %v1364 = vpop.permute.xlu0 %1363
    %v1366 = vadd.f32 %v1344, %v1364
    %v1367 = vtanh.pop %v1366
    %v1368 = vsub.f32 1.0, %v1357
    %1370 = vrot.lane.b32.xlu0 %v1367, 96
    %v1371 = vpop.permute.xlu0 %1370
    %v1373 = vmul.f32 %v1368, %v1371
    %v1374 = vmul.f32 %v1357, %v685
    %v1375 = vadd.f32 %v1373, %v1374
    %1377 = vrot.lane.b32.xlu0 %v1375, 96
    %v1378 = vpop.permute.xlu0 %1377
    %v1379 = vsel %vm130, %v1378, 0
    %1381 = vmatprep.subr.mxu0 0.0
    %1382 = vmatpush1.msra.mxu0 0.0
    %1383 = vmatprep.subr.mxu0 0.0
    %1384 = vmatpush1.msra.mxu0 0.0
    %1385 = vmatprep.subr.mxu0 0.0
    %1386 = vmatpush1.msra.mxu0 0.0
    %1387 = vmatprep.subr.mxu0 0.0
    %1388 = vmatpush1.msra.mxu0 0.0
    %1389 = vmatprep.subr.mxu0 0.0
    %1390 = vmatpush1.msra.mxu0 0.0
    %1391 = vmatprep.subr.mxu0 0.0
    %1392 = vmatpush1.msra.mxu0 0.0
    %1393 = vmatprep.subr.mxu0 0.0
    %1394 = vmatpush1.msra.mxu0 0.0
    %1395 = vmatprep.subr.mxu0 0.0
    %1396 = vmatpush1.msra.mxu0 0.0
    %1397 = vmatprep.subr.mxu0 0.0
    %1398 = vmatpush1.msra.mxu0 0.0
    %1399 = vmatprep.subr.mxu0 0.0
    %1400 = vmatpush1.msra.mxu0 0.0
    %1401 = vmatprep.subr.mxu0 0.0
    %1402 = vmatpush1.msra.mxu0 0.0
    %1403 = vmatprep.subr.mxu0 0.0
    %1404 = vmatpush1.msra.mxu0 0.0
    %1405 = vmatprep.subr.mxu0 0.0
    %1406 = vmatpush1.msra.mxu0 %v117
    %1407 = vmatprep.subr.mxu0 0.0
    %1408 = vmatpush1.msra.mxu0 %v114
    %1409 = vmatprep.subr.mxu0 0.0
    %1410 = vmatpush1.msra.mxu0 %v111
    %1411 = vmatprep.subr.mxu0 0.0
    %1412 = vmatpush1.msra.mxu0 %v108
    %1413 = vmatprep.subr.mxu0 0.0
    %1414 = vmatpush2.msra.mxu0 0.0
    %1415 = vmatprep.subr.mxu0 0.0
    %1416 = vmatpush2.msra.mxu0 0.0
    %1417 = vmatprep.subr.mxu0 0.0
    %1418 = vmatpush2.msra.mxu0 0.0
    %1419 = vmatprep.subr.mxu0 0.0
    %1420 = vmatpush2.msra.mxu0 0.0
    %1421 = vmatprep.subr.mxu0 0.0
    %1422 = vmatpush2.msra.mxu0 0.0
    %1423 = vmatprep.subr.mxu0 0.0
    %1424 = vmatpush2.msra.mxu0 0.0
    %1425 = vmatprep.subr.mxu0 0.0
    %1426 = vmatpush2.msra.mxu0 0.0
    %1427 = vmatprep.subr.mxu0 0.0
    %1428 = vmatpush2.msra.mxu0 0.0
    %1429 = vmatprep.subr.mxu0 0.0
    %1430 = vmatpush2.msra.mxu0 0.0
    %1431 = vmatprep.subr.mxu0 0.0
    %1432 = vmatpush2.msra.mxu0 0.0
    %1433 = vmatprep.subr.mxu0 0.0
    %1434 = vmatpush2.msra.mxu0 0.0
    %1435 = vmatprep.subr.mxu0 0.0
    %1436 = vmatpush2.msra.mxu0 0.0
    %1437 = vmatprep.subr.mxu0 0.0
    %1438 = vmatpush2.msra.mxu0 0.0
    %1439 = vmatprep.subr.mxu0 0.0
    %1440 = vmatpush2.msra.mxu0 0.0
    %1441 = vmatprep.subr.mxu0 0.0
    %1442 = vmatpush2.msra.mxu0 0.0
    %1443 = vmatprep.subr.mxu0 0.0
    %1444 = vmatpush2.msra.mxu0 0.0
    %1445 = vmatprep.mubr.f32.mxu0 0.0
    %1446 = vmatmul.mubr.f32.gmra.mxu0 %v1379
    %v1447 = vpop.f32.mrf.mxu0
    %v1448 = vadd.f32 0.0, %v1447
    %v1449 = vpop.f32.mrf.mxu0
    %1450 = vdwg.mxu0
    %v1451 = vadd.f32 %v1448, %v764
    %v1452 = vmax.f32 %v1451, 0.0
    %v1454 = vsel %vm130, %v1452, 0
    %1456 = vmatprep.subr.mxu0 0.0
    %1457 = vmatpush1.msra.mxu0 0.0
    %1458 = vmatprep.subr.mxu0 0.0
    %1459 = vmatpush1.msra.mxu0 0.0
    %1460 = vmatprep.subr.mxu0 0.0
    %1461 = vmatpush1.msra.mxu0 0.0
    %1462 = vmatprep.subr.mxu0 0.0
    %1463 = vmatpush1.msra.mxu0 0.0
    %1464 = vmatprep.subr.mxu0 0.0
    %1465 = vmatpush1.msra.mxu0 0.0
    %1466 = vmatprep.subr.mxu0 0.0
    %1467 = vmatpush1.msra.mxu0 0.0
    %1468 = vmatprep.subr.mxu0 0.0
    %1469 = vmatpush1.msra.mxu0 0.0
    %1470 = vmatprep.subr.mxu0 0.0
    %1471 = vmatpush1.msra.mxu0 0.0
    %1472 = vmatprep.subr.mxu0 0.0
    %1473 = vmatpush1.msra.mxu0 0.0
    %1474 = vmatprep.subr.mxu0 0.0
    %1475 = vmatpush1.msra.mxu0 0.0
    %1476 = vmatprep.subr.mxu0 0.0
    %1477 = vmatpush1.msra.mxu0 0.0
    %1478 = vmatprep.subr.mxu0 0.0
    %1479 = vmatpush1.msra.mxu0 0.0
    %1480 = vmatprep.subr.mxu0 0.0
    %1481 = vmatpush1.msra.mxu0 %v118
    %1482 = vmatprep.subr.mxu0 0.0
    %1483 = vmatpush1.msra.mxu0 %v115
    %1484 = vmatprep.subr.mxu0 0.0
    %1485 = vmatpush1.msra.mxu0 %v112
    %1486 = vmatprep.subr.mxu0 0.0
    %1487 = vmatpush1.msra.mxu0 %v109
    %1488 = vmatprep.subr.mxu0 0.0
    %1489 = vmatpush2.msra.mxu0 0.0
    %1490 = vmatprep.subr.mxu0 0.0
    %1491 = vmatpush2.msra.mxu0 0.0
    %1492 = vmatprep.subr.mxu0 0.0
    %1493 = vmatpush2.msra.mxu0 0.0
    %1494 = vmatprep.subr.mxu0 0.0
    %1495 = vmatpush2.msra.mxu0 0.0
    %1496 = vmatprep.subr.mxu0 0.0
    %1497 = vmatpush2.msra.mxu0 0.0
    %1498 = vmatprep.subr.mxu0 0.0
    %1499 = vmatpush2.msra.mxu0 0.0
    %1500 = vmatprep.subr.mxu0 0.0
    %1501 = vmatpush2.msra.mxu0 0.0
    %1502 = vmatprep.subr.mxu0 0.0
    %1503 = vmatpush2.msra.mxu0 0.0
    %1504 = vmatprep.subr.mxu0 0.0
    %1505 = vmatpush2.msra.mxu0 0.0
    %1506 = vmatprep.subr.mxu0 0.0
    %1507 = vmatpush2.msra.mxu0 0.0
    %1508 = vmatprep.subr.mxu0 0.0
    %1509 = vmatpush2.msra.mxu0 0.0
    %1510 = vmatprep.subr.mxu0 0.0
    %1511 = vmatpush2.msra.mxu0 0.0
    %1512 = vmatprep.subr.mxu0 0.0
    %1513 = vmatpush2.msra.mxu0 0.0
    %1514 = vmatprep.subr.mxu0 0.0
    %1515 = vmatpush2.msra.mxu0 0.0
    %1516 = vmatprep.subr.mxu0 0.0
    %1517 = vmatpush2.msra.mxu0 0.0
    %1518 = vmatprep.subr.mxu0 0.0
    %1519 = vmatpush2.msra.mxu0 0.0
    %1520 = vmatprep.mubr.f32.mxu0 0.0
    %1521 = vmatmul.mubr.f32.gmra.mxu0 %v1454
    %v1522 = vpop.f32.mrf.mxu0
    %v1523 = vadd.f32 0.0, %v1522
    %v1524 = vpop.f32.mrf.mxu0
    %1525 = vdwg.mxu0
    %v1526 = vadd.f32 %v1523, %v843
    %s1527 = scalar_lea.vmem [#allocation11], 2
    %1528 = vst.msk [vmem:[%s1527] sm:$0x3] %vm845, %v1526
    %s1530 = scalar_lea.vmem [#allocation12], 2
    %1531 = vst.msk [vmem:[%s1530] sm:$0x3] %vm848, %v1378
    %v1532 = vsel %vm313, %v1196, %v1107
    %s1534 = scalar_lea.vmem [#allocation14], 2
    %1535 = vst.msk [vmem:[%s1534] sm:$0x3] %vm316, %v1532
    %1536 = vmatprep.subr.mxu0 0.0
    %1537 = vmatpush1.msra.mxu0 0.0
    %1538 = vmatprep.subr.mxu0 0.0
    %1539 = vmatpush1.msra.mxu0 0.0
    %1540 = vmatprep.subr.mxu0 0.0
    %1541 = vmatpush1.msra.mxu0 0.0
    %1542 = vmatprep.subr.mxu0 0.0
    %1543 = vmatpush1.msra.mxu0 0.0
    %1544 = vmatprep.subr.mxu0 0.0
    %1545 = vmatpush1.msra.mxu0 0.0
    %1546 = vmatprep.subr.mxu0 0.0
    %1547 = vmatpush1.msra.mxu0 0.0
    %1548 = vmatprep.subr.mxu0 0.0
    %1549 = vmatpush1.msra.mxu0 0.0
    %1550 = vmatprep.subr.mxu0 0.0
    %1551 = vmatpush1.msra.mxu0 0.0
    %1552 = vmatprep.subr.mxu0 0.0
    %1553 = vmatpush1.msra.mxu0 0.0
    %1554 = vmatprep.subr.mxu0 0.0
    %1555 = vmatpush1.msra.mxu0 0.0
    %1556 = vmatprep.subr.mxu0 0.0
    %1557 = vmatpush1.msra.mxu0 0.0
    %1558 = vmatprep.subr.mxu0 0.0
    %1559 = vmatpush1.msra.mxu0 0.0
    %1560 = vmatprep.subr.mxu0 0.0
    %1561 = vmatpush1.msra.mxu0 %v116
    %1562 = vmatprep.subr.mxu0 0.0
    %1563 = vmatpush1.msra.mxu0 %v113
    %1564 = vmatprep.subr.mxu0 0.0
    %1565 = vmatpush1.msra.mxu0 %v110
    %1566 = vmatprep.subr.mxu0 0.0
    %1567 = vmatpush1.msra.mxu0 %v107
    %1568 = vmatprep.subr.mxu0 0.0
    %1569 = vmatpush2.msra.mxu0 0.0
    %1570 = vmatprep.subr.mxu0 0.0
    %1571 = vmatpush2.msra.mxu0 0.0
    %1572 = vmatprep.subr.mxu0 0.0
    %1573 = vmatpush2.msra.mxu0 0.0
    %1574 = vmatprep.subr.mxu0 0.0
    %1575 = vmatpush2.msra.mxu0 0.0
    %1576 = vmatprep.subr.mxu0 0.0
    %1577 = vmatpush2.msra.mxu0 0.0
    %1578 = vmatprep.subr.mxu0 0.0
    %1579 = vmatpush2.msra.mxu0 0.0
    %1580 = vmatprep.subr.mxu0 0.0
    %1581 = vmatpush2.msra.mxu0 0.0
    %1582 = vmatprep.subr.mxu0 0.0
    %1583 = vmatpush2.msra.mxu0 0.0
    %1584 = vmatprep.subr.mxu0 0.0
    %1585 = vmatpush2.msra.mxu0 0.0
    %1586 = vmatprep.subr.mxu0 0.0
    %1587 = vmatpush2.msra.mxu0 0.0
    %1588 = vmatprep.subr.mxu0 0.0
    %1589 = vmatpush2.msra.mxu0 0.0
    %1590 = vmatprep.subr.mxu0 0.0
    %1591 = vmatpush2.msra.mxu0 0.0
    %1592 = vmatprep.subr.mxu0 0.0
    %1593 = vmatpush2.msra.mxu0 0.0
    %1594 = vmatprep.subr.mxu0 0.0
    %1595 = vmatpush2.msra.mxu0 0.0
    %1596 = vmatprep.subr.mxu0 0.0
    %1597 = vmatpush2.msra.mxu0 0.0
    %1598 = vmatprep.subr.mxu0 0.0
    %1599 = vmatpush2.msra.mxu0 0.0
    %1600 = vmatprep.mubr.f32.mxu0 0.0
    %1601 = vmatmul.mubr.f32.gmra.mxu0 %v1379
    %v1602 = vpop.f32.mrf.mxu0
    %v1603 = vadd.f32 0.0, %v1602
    %v1604 = vpop.f32.mrf.mxu0
    %1605 = vdwg.mxu0
    %v1606 = vadd.f32 %v1603, %v207
    %v1607 = vadd.f32 %v1603, %v215
    %v1610 = vunpack.c.l.s4 1966171168
    %v1611 = vunpack.c.0.s8 %v1610
    %v1612 = vlaneseq
    %v1613 = vshrl.u32 %v1612, 7
    %v1614 = vsub.s32 %v1611, %v1613
    %v1615 = vrot.slane %v1606, %v1614
    %v1616 = vcombine.high %v1615, %v1615
    %v1618 = vunpack.c.l.s4 1966171168
    %v1619 = vunpack.c.0.s8 %v1618
    %v1620 = vlaneseq
    %v1621 = vshrl.u32 %v1620, 7
    %v1622 = vsub.s32 %v1619, %v1621
    %v1623 = vrot.slane %v1615, %v1622
    %v1625 = vunpack.c.l.s4 1966171168
    %v1626 = vunpack.c.0.s8 %v1625
    %v1627 = vlaneseq
    %v1628 = vshrl.u32 %v1627, 7
    %v1629 = vsub.s32 %v1626, %v1628
    %v1630 = vrot.slane %v1616, %v1629
    %v1631 = vlaneseq
    %v1632 = vshrl.u32 %v1631, 7
    %v1633 = vsub.s32 0, %v1632
    %v1634 = vrot.slane %v1623, %v1633
    %v1635 = vlaneseq
    %v1636 = vshrl.u32 %v1635, 7
    %v1637 = vsub.s32 0, %v1636
    %v1638 = vrot.slane %v1630, %v1637
    %v1641 = vadd.f32 %v99, %v1634
    %v1642 = vadd.f32 %v100, %v1634
    %v1643 = vadd.f32 %v101, %v1638
    %v1644 = vadd.f32 %v102, %v1638
    %v1645 = vtanh.pop %v1641
    %v1646 = vtanh.pop %v1642
    %v1647 = vtanh.pop %v1643
    %v1648 = vtanh.pop %v1644
    %v1649 = vmul.f32 %v1645, %v262
    %v1650 = vmul.f32 %v1646, %v262
    %v1651 = vmul.f32 %v1647, %v262
    %v1652 = vmul.f32 %v1648, %v262
    %v1653 = vsel %vm130, %v1649, 0.0
    %1654 = vadd.xlane.f32.xlu0 %v1653
    %v1655 = vpop.xlane.xlu0 %1654
    %v1656 = vsel %vm130, %v1650, 0.0
    %1657 = vadd.xlane.f32.xlu0 %v1656
    %v1658 = vpop.xlane.xlu0 %1657
    %v1659 = vsel %vm130, %v1651, 0.0
    %1660 = vadd.xlane.f32.xlu0 %v1659
    %v1661 = vpop.xlane.xlu0 %1660
    %v1662 = vsel %vm130, %v1652, 0.0
    %1663 = vadd.xlane.f32.xlu0 %v1662
    %v1664 = vpop.xlane.xlu0 %1663
    %v1665 = vadd.f32 %v1655, %v281
    %v1666 = vadd.f32 %v1658, %v281
    %v1667 = vadd.f32 %v1661, %v281
    %v1668 = vadd.f32 %v1664, %v281
    %v1673 = vlaneseq
    %v1674 = vshrl.u32 %v1673, 7
    %v1675 = vsub.s32 %v292, %v1674
    %v1676 = vrot.slane %v1665, %v1675
    %v1677 = vlaneseq
    %v1678 = vshrl.u32 %v1677, 7
    %v1679 = vsub.s32 %v297, %v1678
    %v1680 = vrot.slane %v1666, %v1679
    %v1681 = vsel %vm302, %v1680, %v1676
    %v1682 = vlaneseq
    %v1683 = vshrl.u32 %v1682, 7
    %v1684 = vsub.s32 %v292, %v1683
    %v1685 = vrot.slane %v1667, %v1684
    %v1686 = vlaneseq
    %v1687 = vshrl.u32 %v1686, 7
    %v1688 = vsub.s32 %v297, %v1687
    %v1689 = vrot.slane %v1668, %v1688
    %v1690 = vsel %vm302, %v1689, %v1685
    %v1691 = vsel %vm313, %v1690, %v1681
    %v1693 = vsel %vm316, %v1691, -inf
    %1694 = vmax.xlane.f32.xlu0 %v1693
    %v1695 = vpop.xlane.xlu0 %1694
    %v1697 = vlaneseq
    %v1698 = vshrl.u32 %v1697, 7
    %v1699 = vsub.s32 0, %v1698
    %v1700 = vrot.slane %v1695, %v1699
    %v1701 = vlaneseq
    %v1702 = vshrl.u32 %v1701, 7
    %v1703 = vsub.s32 1, %v1702
    %v1704 = vrot.slane %v1695, %v1703
    %v1707 = vsub.f32 %v1665, %v1700
    %v1708 = vsub.f32 %v1666, %v1700
    %v1709 = vsub.f32 %v1667, %v1704
    %v1710 = vsub.f32 %v1668, %v1704
    %v1711 = vmul.f32 %v1707, 1.442695
    %v1712 = vpow.pop %v1711
    %v1713 = vmul.f32 %v1708, 1.442695
    %v1714 = vpow.pop %v1713
    %v1715 = vmul.f32 %v1709, 1.442695
    %v1716 = vpow.pop %v1715
    %v1717 = vmul.f32 %v1710, 1.442695
    %v1718 = vpow.pop %v1717
    %1723 = vset.pattern.permute.xlu0 0
    %1724 = vperm.xlu0 %1723, %v1712
    %v1725 = vpop.permute.xlu0 %1724
    %1726 = vset.pattern.permute.xlu0 0
    %1727 = vperm.xlu0 %1726, %v1714
    %v1728 = vpop.permute.xlu0 %1727
    %1729 = vset.pattern.permute.xlu0 0
    %1730 = vperm.xlu0 %1729, %v1716
    %v1731 = vpop.permute.xlu0 %1730
    %1732 = vset.pattern.permute.xlu0 0
    %1733 = vperm.xlu0 %1732, %v1718
    %v1734 = vpop.permute.xlu0 %1733
    %v1735 = vlaneseq
    %v1736 = vshrl.u32 %v1735, 7
    %v1737 = vsub.s32 %v292, %v1736
    %v1738 = vrot.slane %v1725, %v1737
    %v1739 = vlaneseq
    %v1740 = vshrl.u32 %v1739, 7
    %v1741 = vsub.s32 %v297, %v1740
    %v1742 = vrot.slane %v1728, %v1741
    %v1743 = vsel %vm302, %v1742, %v1738
    %v1744 = vlaneseq
    %v1745 = vshrl.u32 %v1744, 7
    %v1746 = vsub.s32 %v292, %v1745
    %v1747 = vrot.slane %v1731, %v1746
    %v1748 = vlaneseq
    %v1749 = vshrl.u32 %v1748, 7
    %v1750 = vsub.s32 %v297, %v1749
    %v1751 = vrot.slane %v1734, %v1750
    %v1752 = vsel %vm302, %v1751, %v1747
    %v1753 = vsel %vm313, %v1752, %v1743
    %v1755 = vsel %vm316, %v1753, 0.0
    %1756 = vadd.xlane.f32.xlu0 %v1755
    %v1757 = vpop.xlane.xlu0 %1756
    %v1758 = vrcp.pop %v1757
    %v1760 = vlaneseq
    %v1761 = vshrl.u32 %v1760, 7
    %v1762 = vsub.s32 0, %v1761
    %v1763 = vrot.slane %v1758, %v1762
    %v1764 = vlaneseq
    %v1765 = vshrl.u32 %v1764, 7
    %v1766 = vsub.s32 1, %v1765
    %v1767 = vrot.slane %v1758, %v1766
    %v1770 = vmul.f32 %v1712, %v1763
    %v1771 = vmul.f32 %v1714, %v1763
    %v1772 = vmul.f32 %v1716, %v1767
    %v1773 = vmul.f32 %v1718, %v1767
    %1776 = vset.pattern.permute.xlu0 0
    %1777 = vperm.xlu0 %1776, %v1770
    %v1778 = vpop.permute.xlu0 %1777
    %1779 = vset.pattern.permute.xlu0 0
    %1780 = vperm.xlu0 %1779, %v1771
    %v1781 = vpop.permute.xlu0 %1780
    %v1782 = vlaneseq
    %v1783 = vshrl.u32 %v1782, 7
    %v1784 = vsub.s32 %v292, %v1783
    %v1785 = vrot.slane %v1778, %v1784
    %v1786 = vlaneseq
    %v1787 = vshrl.u32 %v1786, 7
    %v1788 = vsub.s32 %v297, %v1787
    %v1789 = vrot.slane %v1781, %v1788
    %v1790 = vsel %vm302, %v1789, %v1785
    %v1791 = vsel %vm415, %v1790, 0
    %1793 = vmatprep.subr.mxu0 0.0
    %1794 = vmatpush1.msra.mxu0 0.0
    %1795 = vmatprep.subr.mxu0 0.0
    %1796 = vmatpush1.msra.mxu0 0.0
    %1797 = vmatprep.subr.mxu0 0.0
    %1798 = vmatpush1.msra.mxu0 0.0
    %1799 = vmatprep.subr.mxu0 0.0
    %1800 = vmatpush1.msra.mxu0 0.0
    %1801 = vmatprep.subr.mxu0 0.0
    %1802 = vmatpush1.msra.mxu0 0.0
    %1803 = vmatprep.subr.mxu0 0.0
    %1804 = vmatpush1.msra.mxu0 0.0
    %1805 = vmatprep.subr.mxu0 0.0
    %1806 = vmatpush1.msra.mxu0 0.0
    %1807 = vmatprep.subr.mxu0 0.0
    %1808 = vmatpush1.msra.mxu0 0.0
    %1809 = vmatprep.subr.mxu0 0.0
    %1810 = vmatpush1.msra.mxu0 0.0
    %1811 = vmatprep.subr.mxu0 0.0
    %1812 = vmatpush1.msra.mxu0 0.0
    %1813 = vmatprep.subr.mxu0 0.0
    %1814 = vmatpush1.msra.mxu0 0.0
    %1815 = vmatprep.subr.mxu0 0.0
    %1816 = vmatpush1.msra.mxu0 0.0
    %1817 = vmatprep.subr.mxu0 0.0
    %1818 = vmatpush1.msra.mxu0 0.0
    %1819 = vmatprep.subr.mxu0 0.0
    %1820 = vmatpush1.msra.mxu0 0.0
    %1821 = vmatprep.subr.mxu0 0.0
    %1822 = vmatpush1.msra.mxu0 %v104
    %1823 = vmatprep.subr.mxu0 0.0
    %1824 = vmatpush1.msra.mxu0 %v103
    %1825 = vmatprep.subr.mxu0 0.0
    %1826 = vmatpush2.msra.mxu0 0.0
    %1827 = vmatprep.subr.mxu0 0.0
    %1828 = vmatpush2.msra.mxu0 0.0
    %1829 = vmatprep.subr.mxu0 0.0
    %1830 = vmatpush2.msra.mxu0 0.0
    %1831 = vmatprep.subr.mxu0 0.0
    %1832 = vmatpush2.msra.mxu0 0.0
    %1833 = vmatprep.subr.mxu0 0.0
    %1834 = vmatpush2.msra.mxu0 0.0
    %1835 = vmatprep.subr.mxu0 0.0
    %1836 = vmatpush2.msra.mxu0 0.0
    %1837 = vmatprep.subr.mxu0 0.0
    %1838 = vmatpush2.msra.mxu0 0.0
    %1839 = vmatprep.subr.mxu0 0.0
    %1840 = vmatpush2.msra.mxu0 0.0
    %1841 = vmatprep.subr.mxu0 0.0
    %1842 = vmatpush2.msra.mxu0 0.0
    %1843 = vmatprep.subr.mxu0 0.0
    %1844 = vmatpush2.msra.mxu0 0.0
    %1845 = vmatprep.subr.mxu0 0.0
    %1846 = vmatpush2.msra.mxu0 0.0
    %1847 = vmatprep.subr.mxu0 0.0
    %1848 = vmatpush2.msra.mxu0 0.0
    %1849 = vmatprep.subr.mxu0 0.0
    %1850 = vmatpush2.msra.mxu0 0.0
    %1851 = vmatprep.subr.mxu0 0.0
    %1852 = vmatpush2.msra.mxu0 0.0
    %1853 = vmatprep.subr.mxu0 0.0
    %1854 = vmatpush2.msra.mxu0 0.0
    %1855 = vmatprep.subr.mxu0 0.0
    %1856 = vmatpush2.msra.mxu0 0.0
    %1857 = vmatprep.mubr.f32.mxu0 0.0
    %1858 = vmatmul.mubr.f32.gmra.mxu0 %v1791
    %v1859 = vpop.f32.mrf.mxu0
    %v1860 = vadd.f32 0.0, %v1859
    %v1861 = vpop.f32.mrf.mxu0
    %1862 = vdwg.mxu0
    %1865 = vset.pattern.permute.xlu0 0
    %1866 = vperm.xlu0 %1865, %v1772
    %v1867 = vpop.permute.xlu0 %1866
    %1868 = vset.pattern.permute.xlu0 0
    %1869 = vperm.xlu0 %1868, %v1773
    %v1870 = vpop.permute.xlu0 %1869
    %v1871 = vlaneseq
    %v1872 = vshrl.u32 %v1871, 7
    %v1873 = vsub.s32 %v292, %v1872
    %v1874 = vrot.slane %v1867, %v1873
    %v1875 = vlaneseq
    %v1876 = vshrl.u32 %v1875, 7
    %v1877 = vsub.s32 %v297, %v1876
    %v1878 = vrot.slane %v1870, %v1877
    %v1879 = vsel %vm302, %v1878, %v1874
    %v1880 = vsel %vm415, %v1879, 0
    %1882 = vmatprep.subr.mxu0 0.0
    %1883 = vmatpush1.msra.mxu0 0.0
    %1884 = vmatprep.subr.mxu0 0.0
    %1885 = vmatpush1.msra.mxu0 0.0
    %1886 = vmatprep.subr.mxu0 0.0
    %1887 = vmatpush1.msra.mxu0 0.0
    %1888 = vmatprep.subr.mxu0 0.0
    %1889 = vmatpush1.msra.mxu0 0.0
    %1890 = vmatprep.subr.mxu0 0.0
    %1891 = vmatpush1.msra.mxu0 0.0
    %1892 = vmatprep.subr.mxu0 0.0
    %1893 = vmatpush1.msra.mxu0 0.0
    %1894 = vmatprep.subr.mxu0 0.0
    %1895 = vmatpush1.msra.mxu0 0.0
    %1896 = vmatprep.subr.mxu0 0.0
    %1897 = vmatpush1.msra.mxu0 0.0
    %1898 = vmatprep.subr.mxu0 0.0
    %1899 = vmatpush1.msra.mxu0 0.0
    %1900 = vmatprep.subr.mxu0 0.0
    %1901 = vmatpush1.msra.mxu0 0.0
    %1902 = vmatprep.subr.mxu0 0.0
    %1903 = vmatpush1.msra.mxu0 0.0
    %1904 = vmatprep.subr.mxu0 0.0
    %1905 = vmatpush1.msra.mxu0 0.0
    %1906 = vmatprep.subr.mxu0 0.0
    %1907 = vmatpush1.msra.mxu0 0.0
    %1908 = vmatprep.subr.mxu0 0.0
    %1909 = vmatpush1.msra.mxu0 0.0
    %1910 = vmatprep.subr.mxu0 0.0
    %1911 = vmatpush1.msra.mxu0 %v106
    %1912 = vmatprep.subr.mxu0 0.0
    %1913 = vmatpush1.msra.mxu0 %v105
    %1914 = vmatprep.subr.mxu0 0.0
    %1915 = vmatpush2.msra.mxu0 0.0
    %1916 = vmatprep.subr.mxu0 0.0
    %1917 = vmatpush2.msra.mxu0 0.0
    %1918 = vmatprep.subr.mxu0 0.0
    %1919 = vmatpush2.msra.mxu0 0.0
    %1920 = vmatprep.subr.mxu0 0.0
    %1921 = vmatpush2.msra.mxu0 0.0
    %1922 = vmatprep.subr.mxu0 0.0
    %1923 = vmatpush2.msra.mxu0 0.0
    %1924 = vmatprep.subr.mxu0 0.0
    %1925 = vmatpush2.msra.mxu0 0.0
    %1926 = vmatprep.subr.mxu0 0.0
    %1927 = vmatpush2.msra.mxu0 0.0
    %1928 = vmatprep.subr.mxu0 0.0
    %1929 = vmatpush2.msra.mxu0 0.0
    %1930 = vmatprep.subr.mxu0 0.0
    %1931 = vmatpush2.msra.mxu0 0.0
    %1932 = vmatprep.subr.mxu0 0.0
    %1933 = vmatpush2.msra.mxu0 0.0
    %1934 = vmatprep.subr.mxu0 0.0
    %1935 = vmatpush2.msra.mxu0 0.0
    %1936 = vmatprep.subr.mxu0 0.0
    %1937 = vmatpush2.msra.mxu0 0.0
    %1938 = vmatprep.subr.mxu0 0.0
    %1939 = vmatpush2.msra.mxu0 0.0
    %1940 = vmatprep.subr.mxu0 0.0
    %1941 = vmatpush2.msra.mxu0 0.0
    %1942 = vmatprep.subr.mxu0 0.0
    %1943 = vmatpush2.msra.mxu0 0.0
    %1944 = vmatprep.subr.mxu0 0.0
    %1945 = vmatpush2.msra.mxu0 0.0
    %1946 = vmatprep.mubr.f32.mxu0 0.0
    %1947 = vmatmul.mubr.f32.gmra.mxu0 %v1880
    %v1948 = vpop.f32.mrf.mxu0
    %v1949 = vadd.f32 0.0, %v1948
    %v1950 = vpop.f32.mrf.mxu0
    %1951 = vdwg.mxu0
    %s1952 = scalar_lea.vmem [#allocation7], 4
    %v1953 = vld [vmem:[%s1952] sm:$0x3]
    %v1956 = vrot.slane %v1949, 7
    %v1957 = vsel %vm313, %v1956, %v1860
    %v1958 = vsel %vm130, %v1957, 0
    %1960 = vmatprep.subr.mxu0 0.0
    %1961 = vmatpush1.msra.mxu0 0.0
    %1962 = vmatprep.subr.mxu0 0.0
    %1963 = vmatpush1.msra.mxu0 0.0
    %1964 = vmatprep.subr.mxu0 0.0
    %1965 = vmatpush1.msra.mxu0 0.0
    %1966 = vmatprep.subr.mxu0 0.0
    %1967 = vmatpush1.msra.mxu0 0.0
    %1968 = vmatprep.subr.mxu0 0.0
    %1969 = vmatpush1.msra.mxu0 0.0
    %1970 = vmatprep.subr.mxu0 0.0
    %1971 = vmatpush1.msra.mxu0 0.0
    %1972 = vmatprep.subr.mxu0 0.0
    %1973 = vmatpush1.msra.mxu0 0.0
    %1974 = vmatprep.subr.mxu0 0.0
    %1975 = vmatpush1.msra.mxu0 0.0
    %1976 = vmatprep.subr.mxu0 0.0
    %1977 = vmatpush1.msra.mxu0 0.0
    %1978 = vmatprep.subr.mxu0 0.0
    %1979 = vmatpush1.msra.mxu0 0.0
    %1980 = vmatprep.subr.mxu0 0.0
    %1981 = vmatpush1.msra.mxu0 0.0
    %1982 = vmatprep.subr.mxu0 0.0
    %1983 = vmatpush1.msra.mxu0 0.0
    %1984 = vmatprep.subr.mxu0 0.0
    %1985 = vmatpush1.msra.mxu0 %v122
    %1986 = vmatprep.subr.mxu0 0.0
    %1987 = vmatpush1.msra.mxu0 %v121
    %1988 = vmatprep.subr.mxu0 0.0
    %1989 = vmatpush1.msra.mxu0 %v120
    %1990 = vmatprep.subr.mxu0 0.0
    %1991 = vmatpush1.msra.mxu0 %v119
    %1992 = vmatprep.subr.mxu0 0.0
    %1993 = vmatpush2.msra.mxu0 0.0
    %1994 = vmatprep.subr.mxu0 0.0
    %1995 = vmatpush2.msra.mxu0 0.0
    %1996 = vmatprep.subr.mxu0 0.0
    %1997 = vmatpush2.msra.mxu0 0.0
    %1998 = vmatprep.subr.mxu0 0.0
    %1999 = vmatpush2.msra.mxu0 0.0
    %2000 = vmatprep.subr.mxu0 0.0
    %2001 = vmatpush2.msra.mxu0 0.0
    %2002 = vmatprep.subr.mxu0 0.0
    %2003 = vmatpush2.msra.mxu0 0.0
    %2004 = vmatprep.subr.mxu0 0.0
    %2005 = vmatpush2.msra.mxu0 0.0
    %2006 = vmatprep.subr.mxu0 0.0
    %2007 = vmatpush2.msra.mxu0 0.0
    %2008 = vmatprep.subr.mxu0 0.0
    %2009 = vmatpush2.msra.mxu0 0.0
    %2010 = vmatprep.subr.mxu0 0.0
    %2011 = vmatpush2.msra.mxu0 0.0
    %2012 = vmatprep.subr.mxu0 0.0
    %2013 = vmatpush2.msra.mxu0 0.0
    %2014 = vmatprep.subr.mxu0 0.0
    %2015 = vmatpush2.msra.mxu0 0.0
    %2016 = vmatprep.subr.mxu0 0.0
    %2017 = vmatpush2.msra.mxu0 0.0
    %2018 = vmatprep.subr.mxu0 0.0
    %2019 = vmatpush2.msra.mxu0 0.0
    %2020 = vmatprep.subr.mxu0 0.0
    %2021 = vmatpush2.msra.mxu0 0.0
    %2022 = vmatprep.subr.mxu0 0.0
    %2023 = vmatpush2.msra.mxu0 0.0
    %2024 = vmatprep.mubr.f32.mxu0 0.0
    %2025 = vmatmul.mubr.f32.gmra.mxu0 %v1958
    %v2026 = vpop.f32.mrf.mxu0
    %v2027 = vadd.f32 %v1953, %v2026
    %v2028 = vpop.f32.mrf.mxu0
    %2029 = vdwg.mxu0
    %2031 = vrot.lane.b32.xlu0 %v1607, 96
    %v2032 = vpop.permute.xlu0 %2031
    %v2034 = vadd.f32 %v2027, %v2032
    %v2035 = vxor.u32 %v2034, 2147483648
    %v2036 = vmul.f32 %v2035, 1.442695
    %v2037 = vpow.pop %v2036
    %v2038 = vadd.f32 %v2037, 1.0
    %v2039 = vrcp.pop %v2038
    %v2040 = vmul.f32 1.0, %v2039
    %2041 = vrot.lane.b32.xlu0 %v1607, 32
    %v2042 = vpop.permute.xlu0 %2041
    %v2044 = vmul.f32 %v2040, %v2042
    %2046 = vrot.lane.b32.xlu0 %v2044, 64
    %v2047 = vpop.permute.xlu0 %2046
    %v2049 = vadd.f32 %v2027, %v2047
    %v2050 = vtanh.pop %v2049
    %v2051 = vsub.f32 1.0, %v2040
    %2053 = vrot.lane.b32.xlu0 %v2050, 96
    %v2054 = vpop.permute.xlu0 %2053
    %v2056 = vmul.f32 %v2051, %v2054
    %v2057 = vmul.f32 %v2040, %v1375
    %v2058 = vadd.f32 %v2056, %v2057
    %2060 = vrot.lane.b32.xlu0 %v2058, 96
    %v2061 = vpop.permute.xlu0 %2060
    %v2062 = vsel %vm130, %v2061, 0
    %2064 = vmatprep.subr.mxu0 0.0
    %2065 = vmatpush1.msra.mxu0 0.0
    %2066 = vmatprep.subr.mxu0 0.0
    %2067 = vmatpush1.msra.mxu0 0.0
    %2068 = vmatprep.subr.mxu0 0.0
    %2069 = vmatpush1.msra.mxu0 0.0
    %2070 = vmatprep.subr.mxu0 0.0
    %2071 = vmatpush1.msra.mxu0 0.0
    %2072 = vmatprep.subr.mxu0 0.0
    %2073 = vmatpush1.msra.mxu0 0.0
    %2074 = vmatprep.subr.mxu0 0.0
    %2075 = vmatpush1.msra.mxu0 0.0
    %2076 = vmatprep.subr.mxu0 0.0
    %2077 = vmatpush1.msra.mxu0 0.0
    %2078 = vmatprep.subr.mxu0 0.0
    %2079 = vmatpush1.msra.mxu0 0.0
    %2080 = vmatprep.subr.mxu0 0.0
    %2081 = vmatpush1.msra.mxu0 0.0
    %2082 = vmatprep.subr.mxu0 0.0
    %2083 = vmatpush1.msra.mxu0 0.0
    %2084 = vmatprep.subr.mxu0 0.0
    %2085 = vmatpush1.msra.mxu0 0.0
    %2086 = vmatprep.subr.mxu0 0.0
    %2087 = vmatpush1.msra.mxu0 0.0
    %2088 = vmatprep.subr.mxu0 0.0
    %2089 = vmatpush1.msra.mxu0 %v117
    %2090 = vmatprep.subr.mxu0 0.0
    %2091 = vmatpush1.msra.mxu0 %v114
    %2092 = vmatprep.subr.mxu0 0.0
    %2093 = vmatpush1.msra.mxu0 %v111
    %2094 = vmatprep.subr.mxu0 0.0
    %2095 = vmatpush1.msra.mxu0 %v108
    %2096 = vmatprep.subr.mxu0 0.0
    %2097 = vmatpush2.msra.mxu0 0.0
    %2098 = vmatprep.subr.mxu0 0.0
    %2099 = vmatpush2.msra.mxu0 0.0
    %2100 = vmatprep.subr.mxu0 0.0
    %2101 = vmatpush2.msra.mxu0 0.0
    %2102 = vmatprep.subr.mxu0 0.0
    %2103 = vmatpush2.msra.mxu0 0.0
    %2104 = vmatprep.subr.mxu0 0.0
    %2105 = vmatpush2.msra.mxu0 0.0
    %2106 = vmatprep.subr.mxu0 0.0
    %2107 = vmatpush2.msra.mxu0 0.0
    %2108 = vmatprep.subr.mxu0 0.0
    %2109 = vmatpush2.msra.mxu0 0.0
    %2110 = vmatprep.subr.mxu0 0.0
    %2111 = vmatpush2.msra.mxu0 0.0
    %2112 = vmatprep.subr.mxu0 0.0
    %2113 = vmatpush2.msra.mxu0 0.0
    %2114 = vmatprep.subr.mxu0 0.0
    %2115 = vmatpush2.msra.mxu0 0.0
    %2116 = vmatprep.subr.mxu0 0.0
    %2117 = vmatpush2.msra.mxu0 0.0
    %2118 = vmatprep.subr.mxu0 0.0
    %2119 = vmatpush2.msra.mxu0 0.0
    %2120 = vmatprep.subr.mxu0 0.0
    %2121 = vmatpush2.msra.mxu0 0.0
    %2122 = vmatprep.subr.mxu0 0.0
    %2123 = vmatpush2.msra.mxu0 0.0
    %2124 = vmatprep.subr.mxu0 0.0
    %2125 = vmatpush2.msra.mxu0 0.0
    %2126 = vmatprep.subr.mxu0 0.0
    %2127 = vmatpush2.msra.mxu0 0.0
    %2128 = vmatprep.mubr.f32.mxu0 0.0
    %2129 = vmatmul.mubr.f32.gmra.mxu0 %v2062
    %v2130 = vpop.f32.mrf.mxu0
    %v2131 = vadd.f32 0.0, %v2130
    %v2132 = vpop.f32.mrf.mxu0
    %2133 = vdwg.mxu0
    %v2134 = vadd.f32 %v2131, %v764
    %v2135 = vmax.f32 %v2134, 0.0
    %v2137 = vsel %vm130, %v2135, 0
    %2139 = vmatprep.subr.mxu0 0.0
    %2140 = vmatpush1.msra.mxu0 0.0
    %2141 = vmatprep.subr.mxu0 0.0
    %2142 = vmatpush1.msra.mxu0 0.0
    %2143 = vmatprep.subr.mxu0 0.0
    %2144 = vmatpush1.msra.mxu0 0.0
    %2145 = vmatprep.subr.mxu0 0.0
    %2146 = vmatpush1.msra.mxu0 0.0
    %2147 = vmatprep.subr.mxu0 0.0
    %2148 = vmatpush1.msra.mxu0 0.0
    %2149 = vmatprep.subr.mxu0 0.0
    %2150 = vmatpush1.msra.mxu0 0.0
    %2151 = vmatprep.subr.mxu0 0.0
    %2152 = vmatpush1.msra.mxu0 0.0
    %2153 = vmatprep.subr.mxu0 0.0
    %2154 = vmatpush1.msra.mxu0 0.0
    %2155 = vmatprep.subr.mxu0 0.0
    %2156 = vmatpush1.msra.mxu0 0.0
    %2157 = vmatprep.subr.mxu0 0.0
    %2158 = vmatpush1.msra.mxu0 0.0
    %2159 = vmatprep.subr.mxu0 0.0
    %2160 = vmatpush1.msra.mxu0 0.0
    %2161 = vmatprep.subr.mxu0 0.0
    %2162 = vmatpush1.msra.mxu0 0.0
    %2163 = vmatprep.subr.mxu0 0.0
    %2164 = vmatpush1.msra.mxu0 %v118
    %2165 = vmatprep.subr.mxu0 0.0
    %2166 = vmatpush1.msra.mxu0 %v115
    %2167 = vmatprep.subr.mxu0 0.0
    %2168 = vmatpush1.msra.mxu0 %v112
    %2169 = vmatprep.subr.mxu0 0.0
    %2170 = vmatpush1.msra.mxu0 %v109
    %2171 = vmatprep.subr.mxu0 0.0
    %2172 = vmatpush2.msra.mxu0 0.0
    %2173 = vmatprep.subr.mxu0 0.0
    %2174 = vmatpush2.msra.mxu0 0.0
    %2175 = vmatprep.subr.mxu0 0.0
    %2176 = vmatpush2.msra.mxu0 0.0
    %2177 = vmatprep.subr.mxu0 0.0
    %2178 = vmatpush2.msra.mxu0 0.0
    %2179 = vmatprep.subr.mxu0 0.0
    %2180 = vmatpush2.msra.mxu0 0.0
    %2181 = vmatprep.subr.mxu0 0.0
    %2182 = vmatpush2.msra.mxu0 0.0
    %2183 = vmatprep.subr.mxu0 0.0
    %2184 = vmatpush2.msra.mxu0 0.0
    %2185 = vmatprep.subr.mxu0 0.0
    %2186 = vmatpush2.msra.mxu0 0.0
    %2187 = vmatprep.subr.mxu0 0.0
    %2188 = vmatpush2.msra.mxu0 0.0
    %2189 = vmatprep.subr.mxu0 0.0
    %2190 = vmatpush2.msra.mxu0 0.0
    %2191 = vmatprep.subr.mxu0 0.0
    %2192 = vmatpush2.msra.mxu0 0.0
    %2193 = vmatprep.subr.mxu0 0.0
    %2194 = vmatpush2.msra.mxu0 0.0
    %2195 = vmatprep.subr.mxu0 0.0
    %2196 = vmatpush2.msra.mxu0 0.0
    %2197 = vmatprep.subr.mxu0 0.0
    %2198 = vmatpush2.msra.mxu0 0.0
    %2199 = vmatprep.subr.mxu0 0.0
    %2200 = vmatpush2.msra.mxu0 0.0
    %2201 = vmatprep.subr.mxu0 0.0
    %2202 = vmatpush2.msra.mxu0 0.0
    %2203 = vmatprep.mubr.f32.mxu0 0.0
    %2204 = vmatmul.mubr.f32.gmra.mxu0 %v2137
    %v2205 = vpop.f32.mrf.mxu0
    %v2206 = vadd.f32 0.0, %v2205
    %v2207 = vpop.f32.mrf.mxu0
    %2208 = vdwg.mxu0
    %v2209 = vadd.f32 %v2206, %v843
    %s2210 = scalar_lea.vmem [#allocation11], 4
    %2211 = vst.msk [vmem:[%s2210] sm:$0x3] %vm845, %v2209
    %s2213 = scalar_lea.vmem [#allocation12], 4
    %2214 = vst.msk [vmem:[%s2213] sm:$0x3] %vm848, %v2061
    %v2215 = vsel %vm313, %v1879, %v1790
    %s2217 = scalar_lea.vmem [#allocation14], 4
    %2218 = vst.msk [vmem:[%s2217] sm:$0x3] %vm316, %v2215
    %2219 = vmatprep.subr.mxu0 0.0
    %2220 = vmatpush1.msra.mxu0 0.0
    %2221 = vmatprep.subr.mxu0 0.0
    %2222 = vmatpush1.msra.mxu0 0.0
    %2223 = vmatprep.subr.mxu0 0.0
    %2224 = vmatpush1.msra.mxu0 0.0
    %2225 = vmatprep.subr.mxu0 0.0
    %2226 = vmatpush1.msra.mxu0 0.0
    %2227 = vmatprep.subr.mxu0 0.0
    %2228 = vmatpush1.msra.mxu0 0.0
    %2229 = vmatprep.subr.mxu0 0.0
    %2230 = vmatpush1.msra.mxu0 0.0
    %2231 = vmatprep.subr.mxu0 0.0
    %2232 = vmatpush1.msra.mxu0 0.0
    %2233 = vmatprep.subr.mxu0 0.0
    %2234 = vmatpush1.msra.mxu0 0.0
    %2235 = vmatprep.subr.mxu0 0.0
    %2236 = vmatpush1.msra.mxu0 0.0
    %2237 = vmatprep.subr.mxu0 0.0
    %2238 = vmatpush1.msra.mxu0 0.0
    %2239 = vmatprep.subr.mxu0 0.0
    %2240 = vmatpush1.msra.mxu0 0.0
    %2241 = vmatprep.subr.mxu0 0.0
    %2242 = vmatpush1.msra.mxu0 0.0
    %2243 = vmatprep.subr.mxu0 0.0
    %2244 = vmatpush1.msra.mxu0 %v116
    %2245 = vmatprep.subr.mxu0 0.0
    %2246 = vmatpush1.msra.mxu0 %v113
    %2247 = vmatprep.subr.mxu0 0.0
    %2248 = vmatpush1.msra.mxu0 %v110
    %2249 = vmatprep.subr.mxu0 0.0
    %2250 = vmatpush1.msra.mxu0 %v107
    %2251 = vmatprep.subr.mxu0 0.0
    %2252 = vmatpush2.msra.mxu0 0.0
    %2253 = vmatprep.subr.mxu0 0.0
    %2254 = vmatpush2.msra.mxu0 0.0
    %2255 = vmatprep.subr.mxu0 0.0
    %2256 = vmatpush2.msra.mxu0 0.0
    %2257 = vmatprep.subr.mxu0 0.0
    %2258 = vmatpush2.msra.mxu0 0.0
    %2259 = vmatprep.subr.mxu0 0.0
    %2260 = vmatpush2.msra.mxu0 0.0
    %2261 = vmatprep.subr.mxu0 0.0
    %2262 = vmatpush2.msra.mxu0 0.0
    %2263 = vmatprep.subr.mxu0 0.0
    %2264 = vmatpush2.msra.mxu0 0.0
    %2265 = vmatprep.subr.mxu0 0.0
    %2266 = vmatpush2.msra.mxu0 0.0
    %2267 = vmatprep.subr.mxu0 0.0
    %2268 = vmatpush2.msra.mxu0 0.0
    %2269 = vmatprep.subr.mxu0 0.0
    %2270 = vmatpush2.msra.mxu0 0.0
    %2271 = vmatprep.subr.mxu0 0.0
    %2272 = vmatpush2.msra.mxu0 0.0
    %2273 = vmatprep.subr.mxu0 0.0
    %2274 = vmatpush2.msra.mxu0 0.0
    %2275 = vmatprep.subr.mxu0 0.0
    %2276 = vmatpush2.msra.mxu0 0.0
    %2277 = vmatprep.subr.mxu0 0.0
    %2278 = vmatpush2.msra.mxu0 0.0
    %2279 = vmatprep.subr.mxu0 0.0
    %2280 = vmatpush2.msra.mxu0 0.0
    %2281 = vmatprep.subr.mxu0 0.0
    %2282 = vmatpush2.msra.mxu0 0.0
    %2283 = vmatprep.mubr.f32.mxu0 0.0
    %2284 = vmatmul.mubr.f32.gmra.mxu0 %v2062
    %v2285 = vpop.f32.mrf.mxu0
    %v2286 = vadd.f32 0.0, %v2285
    %v2287 = vpop.f32.mrf.mxu0
    %2288 = vdwg.mxu0
    %v2289 = vadd.f32 %v2286, %v207
    %v2290 = vadd.f32 %v2286, %v215
    %v2293 = vunpack.c.l.s4 1966171168
    %v2294 = vunpack.c.0.s8 %v2293
    %v2295 = vlaneseq
    %v2296 = vshrl.u32 %v2295, 7
    %v2297 = vsub.s32 %v2294, %v2296
    %v2298 = vrot.slane %v2289, %v2297
    %v2299 = vcombine.high %v2298, %v2298
    %v2301 = vunpack.c.l.s4 1966171168
    %v2302 = vunpack.c.0.s8 %v2301
    %v2303 = vlaneseq
    %v2304 = vshrl.u32 %v2303, 7
    %v2305 = vsub.s32 %v2302, %v2304
    %v2306 = vrot.slane %v2298, %v2305
    %v2308 = vunpack.c.l.s4 1966171168
    %v2309 = vunpack.c.0.s8 %v2308
    %v2310 = vlaneseq
    %v2311 = vshrl.u32 %v2310, 7
    %v2312 = vsub.s32 %v2309, %v2311
    %v2313 = vrot.slane %v2299, %v2312
    %v2314 = vlaneseq
    %v2315 = vshrl.u32 %v2314, 7
    %v2316 = vsub.s32 0, %v2315
    %v2317 = vrot.slane %v2306, %v2316
    %v2318 = vlaneseq
    %v2319 = vshrl.u32 %v2318, 7
    %v2320 = vsub.s32 0, %v2319
    %v2321 = vrot.slane %v2313, %v2320
    %v2324 = vadd.f32 %v99, %v2317
    %v2325 = vadd.f32 %v100, %v2317
    %v2326 = vadd.f32 %v101, %v2321
    %v2327 = vadd.f32 %v102, %v2321
    %v2328 = vtanh.pop %v2324
    %v2329 = vtanh.pop %v2325
    %v2330 = vtanh.pop %v2326
    %v2331 = vtanh.pop %v2327
    %v2332 = vmul.f32 %v2328, %v262
    %v2333 = vmul.f32 %v2329, %v262
    %v2334 = vmul.f32 %v2330, %v262
    %v2335 = vmul.f32 %v2331, %v262
    %v2336 = vsel %vm130, %v2332, 0.0
    %2337 = vadd.xlane.f32.xlu0 %v2336
    %v2338 = vpop.xlane.xlu0 %2337
    %v2339 = vsel %vm130, %v2333, 0.0
    %2340 = vadd.xlane.f32.xlu0 %v2339
    %v2341 = vpop.xlane.xlu0 %2340
    %v2342 = vsel %vm130, %v2334, 0.0
    %2343 = vadd.xlane.f32.xlu0 %v2342
    %v2344 = vpop.xlane.xlu0 %2343
    %v2345 = vsel %vm130, %v2335, 0.0
    %2346 = vadd.xlane.f32.xlu0 %v2345
    %v2347 = vpop.xlane.xlu0 %2346
    %v2348 = vadd.f32 %v2338, %v281
    %v2349 = vadd.f32 %v2341, %v281
    %v2350 = vadd.f32 %v2344, %v281
    %v2351 = vadd.f32 %v2347, %v281
    %v2356 = vlaneseq
    %v2357 = vshrl.u32 %v2356, 7
    %v2358 = vsub.s32 %v292, %v2357
    %v2359 = vrot.slane %v2348, %v2358
    %v2360 = vlaneseq
    %v2361 = vshrl.u32 %v2360, 7
    %v2362 = vsub.s32 %v297, %v2361
    %v2363 = vrot.slane %v2349, %v2362
    %v2364 = vsel %vm302, %v2363, %v2359
    %v2365 = vlaneseq
    %v2366 = vshrl.u32 %v2365, 7
    %v2367 = vsub.s32 %v292, %v2366
    %v2368 = vrot.slane %v2350, %v2367
    %v2369 = vlaneseq
    %v2370 = vshrl.u32 %v2369, 7
    %v2371 = vsub.s32 %v297, %v2370
    %v2372 = vrot.slane %v2351, %v2371
    %v2373 = vsel %vm302, %v2372, %v2368
    %v2374 = vsel %vm313, %v2373, %v2364
    %v2376 = vsel %vm316, %v2374, -inf
    %2377 = vmax.xlane.f32.xlu0 %v2376
    %v2378 = vpop.xlane.xlu0 %2377
    %v2380 = vlaneseq
    %v2381 = vshrl.u32 %v2380, 7
    %v2382 = vsub.s32 0, %v2381
    %v2383 = vrot.slane %v2378, %v2382
    %v2384 = vlaneseq
    %v2385 = vshrl.u32 %v2384, 7
    %v2386 = vsub.s32 1, %v2385
    %v2387 = vrot.slane %v2378, %v2386
    %v2390 = vsub.f32 %v2348, %v2383
    %v2391 = vsub.f32 %v2349, %v2383
    %v2392 = vsub.f32 %v2350, %v2387
    %v2393 = vsub.f32 %v2351, %v2387
    %v2394 = vmul.f32 %v2390, 1.442695
    %v2395 = vpow.pop %v2394
    %v2396 = vmul.f32 %v2391, 1.442695
    %v2397 = vpow.pop %v2396
    %v2398 = vmul.f32 %v2392, 1.442695
    %v2399 = vpow.pop %v2398
    %v2400 = vmul.f32 %v2393, 1.442695
    %v2401 = vpow.pop %v2400
    %2406 = vset.pattern.permute.xlu0 0
    %2407 = vperm.xlu0 %2406, %v2395
    %v2408 = vpop.permute.xlu0 %2407
    %2409 = vset.pattern.permute.xlu0 0
    %2410 = vperm.xlu0 %2409, %v2397
    %v2411 = vpop.permute.xlu0 %2410
    %2412 = vset.pattern.permute.xlu0 0
    %2413 = vperm.xlu0 %2412, %v2399
    %v2414 = vpop.permute.xlu0 %2413
    %2415 = vset.pattern.permute.xlu0 0
    %2416 = vperm.xlu0 %2415, %v2401
    %v2417 = vpop.permute.xlu0 %2416
    %v2418 = vlaneseq
    %v2419 = vshrl.u32 %v2418, 7
    %v2420 = vsub.s32 %v292, %v2419
    %v2421 = vrot.slane %v2408, %v2420
    %v2422 = vlaneseq
    %v2423 = vshrl.u32 %v2422, 7
    %v2424 = vsub.s32 %v297, %v2423
    %v2425 = vrot.slane %v2411, %v2424
    %v2426 = vsel %vm302, %v2425, %v2421
    %v2427 = vlaneseq
    %v2428 = vshrl.u32 %v2427, 7
    %v2429 = vsub.s32 %v292, %v2428
    %v2430 = vrot.slane %v2414, %v2429
    %v2431 = vlaneseq
    %v2432 = vshrl.u32 %v2431, 7
    %v2433 = vsub.s32 %v297, %v2432
    %v2434 = vrot.slane %v2417, %v2433
    %v2435 = vsel %vm302, %v2434, %v2430
    %v2436 = vsel %vm313, %v2435, %v2426
    %v2438 = vsel %vm316, %v2436, 0.0
    %2439 = vadd.xlane.f32.xlu0 %v2438
    %v2440 = vpop.xlane.xlu0 %2439
    %v2441 = vrcp.pop %v2440
    %v2443 = vlaneseq
    %v2444 = vshrl.u32 %v2443, 7
    %v2445 = vsub.s32 0, %v2444
    %v2446 = vrot.slane %v2441, %v2445
    %v2447 = vlaneseq
    %v2448 = vshrl.u32 %v2447, 7
    %v2449 = vsub.s32 1, %v2448
    %v2450 = vrot.slane %v2441, %v2449
    %v2453 = vmul.f32 %v2395, %v2446
    %v2454 = vmul.f32 %v2397, %v2446
    %v2455 = vmul.f32 %v2399, %v2450
    %v2456 = vmul.f32 %v2401, %v2450
    %2459 = vset.pattern.permute.xlu0 0
    %2460 = vperm.xlu0 %2459, %v2453
    %v2461 = vpop.permute.xlu0 %2460
    %2462 = vset.pattern.permute.xlu0 0
    %2463 = vperm.xlu0 %2462, %v2454
    %v2464 = vpop.permute.xlu0 %2463
    %v2465 = vlaneseq
    %v2466 = vshrl.u32 %v2465, 7
    %v2467 = vsub.s32 %v292, %v2466
    %v2468 = vrot.slane %v2461, %v2467
    %v2469 = vlaneseq
    %v2470 = vshrl.u32 %v2469, 7
    %v2471 = vsub.s32 %v297, %v2470
    %v2472 = vrot.slane %v2464, %v2471
    %v2473 = vsel %vm302, %v2472, %v2468
    %v2474 = vsel %vm415, %v2473, 0
    %2476 = vmatprep.subr.mxu0 0.0
    %2477 = vmatpush1.msra.mxu0 0.0
    %2478 = vmatprep.subr.mxu0 0.0
    %2479 = vmatpush1.msra.mxu0 0.0
    %2480 = vmatprep.subr.mxu0 0.0
    %2481 = vmatpush1.msra.mxu0 0.0
    %2482 = vmatprep.subr.mxu0 0.0
    %2483 = vmatpush1.msra.mxu0 0.0
    %2484 = vmatprep.subr.mxu0 0.0
    %2485 = vmatpush1.msra.mxu0 0.0
    %2486 = vmatprep.subr.mxu0 0.0
    %2487 = vmatpush1.msra.mxu0 0.0
    %2488 = vmatprep.subr.mxu0 0.0
    %2489 = vmatpush1.msra.mxu0 0.0
    %2490 = vmatprep.subr.mxu0 0.0
    %2491 = vmatpush1.msra.mxu0 0.0
    %2492 = vmatprep.subr.mxu0 0.0
    %2493 = vmatpush1.msra.mxu0 0.0
    %2494 = vmatprep.subr.mxu0 0.0
    %2495 = vmatpush1.msra.mxu0 0.0
    %2496 = vmatprep.subr.mxu0 0.0
    %2497 = vmatpush1.msra.mxu0 0.0
    %2498 = vmatprep.subr.mxu0 0.0
    %2499 = vmatpush1.msra.mxu0 0.0
    %2500 = vmatprep.subr.mxu0 0.0
    %2501 = vmatpush1.msra.mxu0 0.0
    %2502 = vmatprep.subr.mxu0 0.0
    %2503 = vmatpush1.msra.mxu0 0.0
    %2504 = vmatprep.subr.mxu0 0.0
    %2505 = vmatpush1.msra.mxu0 %v104
    %2506 = vmatprep.subr.mxu0 0.0
    %2507 = vmatpush1.msra.mxu0 %v103
    %2508 = vmatprep.subr.mxu0 0.0
    %2509 = vmatpush2.msra.mxu0 0.0
    %2510 = vmatprep.subr.mxu0 0.0
    %2511 = vmatpush2.msra.mxu0 0.0
    %2512 = vmatprep.subr.mxu0 0.0
    %2513 = vmatpush2.msra.mxu0 0.0
    %2514 = vmatprep.subr.mxu0 0.0
    %2515 = vmatpush2.msra.mxu0 0.0
    %2516 = vmatprep.subr.mxu0 0.0
    %2517 = vmatpush2.msra.mxu0 0.0
    %2518 = vmatprep.subr.mxu0 0.0
    %2519 = vmatpush2.msra.mxu0 0.0
    %2520 = vmatprep.subr.mxu0 0.0
    %2521 = vmatpush2.msra.mxu0 0.0
    %2522 = vmatprep.subr.mxu0 0.0
    %2523 = vmatpush2.msra.mxu0 0.0
    %2524 = vmatprep.subr.mxu0 0.0
    %2525 = vmatpush2.msra.mxu0 0.0
    %2526 = vmatprep.subr.mxu0 0.0
    %2527 = vmatpush2.msra.mxu0 0.0
    %2528 = vmatprep.subr.mxu0 0.0
    %2529 = vmatpush2.msra.mxu0 0.0
    %2530 = vmatprep.subr.mxu0 0.0
    %2531 = vmatpush2.msra.mxu0 0.0
    %2532 = vmatprep.subr.mxu0 0.0
    %2533 = vmatpush2.msra.mxu0 0.0
    %2534 = vmatprep.subr.mxu0 0.0
    %2535 = vmatpush2.msra.mxu0 0.0
    %2536 = vmatprep.subr.mxu0 0.0
    %2537 = vmatpush2.msra.mxu0 0.0
    %2538 = vmatprep.subr.mxu0 0.0
    %2539 = vmatpush2.msra.mxu0 0.0
    %2540 = vmatprep.mubr.f32.mxu0 0.0
    %2541 = vmatmul.mubr.f32.gmra.mxu0 %v2474
    %v2542 = vpop.f32.mrf.mxu0
    %v2543 = vadd.f32 0.0, %v2542
    %v2544 = vpop.f32.mrf.mxu0
    %2545 = vdwg.mxu0
    %2548 = vset.pattern.permute.xlu0 0
    %2549 = vperm.xlu0 %2548, %v2455
    %v2550 = vpop.permute.xlu0 %2549
    %2551 = vset.pattern.permute.xlu0 0
    %2552 = vperm.xlu0 %2551, %v2456
    %v2553 = vpop.permute.xlu0 %2552
    %v2554 = vlaneseq
    %v2555 = vshrl.u32 %v2554, 7
    %v2556 = vsub.s32 %v292, %v2555
    %v2557 = vrot.slane %v2550, %v2556
    %v2558 = vlaneseq
    %v2559 = vshrl.u32 %v2558, 7
    %v2560 = vsub.s32 %v297, %v2559
    %v2561 = vrot.slane %v2553, %v2560
    %v2562 = vsel %vm302, %v2561, %v2557
    %v2563 = vsel %vm415, %v2562, 0
    %2565 = vmatprep.subr.mxu0 0.0
    %2566 = vmatpush1.msra.mxu0 0.0
    %2567 = vmatprep.subr.mxu0 0.0
    %2568 = vmatpush1.msra.mxu0 0.0
    %2569 = vmatprep.subr.mxu0 0.0
    %2570 = vmatpush1.msra.mxu0 0.0
    %2571 = vmatprep.subr.mxu0 0.0
    %2572 = vmatpush1.msra.mxu0 0.0
    %2573 = vmatprep.subr.mxu0 0.0
    %2574 = vmatpush1.msra.mxu0 0.0
    %2575 = vmatprep.subr.mxu0 0.0
    %2576 = vmatpush1.msra.mxu0 0.0
    %2577 = vmatprep.subr.mxu0 0.0
    %2578 = vmatpush1.msra.mxu0 0.0
    %2579 = vmatprep.subr.mxu0 0.0
    %2580 = vmatpush1.msra.mxu0 0.0
    %2581 = vmatprep.subr.mxu0 0.0
    %2582 = vmatpush1.msra.mxu0 0.0
    %2583 = vmatprep.subr.mxu0 0.0
    %2584 = vmatpush1.msra.mxu0 0.0
    %2585 = vmatprep.subr.mxu0 0.0
    %2586 = vmatpush1.msra.mxu0 0.0
    %2587 = vmatprep.subr.mxu0 0.0
    %2588 = vmatpush1.msra.mxu0 0.0
    %2589 = vmatprep.subr.mxu0 0.0
    %2590 = vmatpush1.msra.mxu0 0.0
    %2591 = vmatprep.subr.mxu0 0.0
    %2592 = vmatpush1.msra.mxu0 0.0
    %2593 = vmatprep.subr.mxu0 0.0
    %2594 = vmatpush1.msra.mxu0 %v106
    %2595 = vmatprep.subr.mxu0 0.0
    %2596 = vmatpush1.msra.mxu0 %v105
    %2597 = vmatprep.subr.mxu0 0.0
    %2598 = vmatpush2.msra.mxu0 0.0
    %2599 = vmatprep.subr.mxu0 0.0
    %2600 = vmatpush2.msra.mxu0 0.0
    %2601 = vmatprep.subr.mxu0 0.0
    %2602 = vmatpush2.msra.mxu0 0.0
    %2603 = vmatprep.subr.mxu0 0.0
    %2604 = vmatpush2.msra.mxu0 0.0
    %2605 = vmatprep.subr.mxu0 0.0
    %2606 = vmatpush2.msra.mxu0 0.0
    %2607 = vmatprep.subr.mxu0 0.0
    %2608 = vmatpush2.msra.mxu0 0.0
    %2609 = vmatprep.subr.mxu0 0.0
    %2610 = vmatpush2.msra.mxu0 0.0
    %2611 = vmatprep.subr.mxu0 0.0
    %2612 = vmatpush2.msra.mxu0 0.0
    %2613 = vmatprep.subr.mxu0 0.0
    %2614 = vmatpush2.msra.mxu0 0.0
    %2615 = vmatprep.subr.mxu0 0.0
    %2616 = vmatpush2.msra.mxu0 0.0
    %2617 = vmatprep.subr.mxu0 0.0
    %2618 = vmatpush2.msra.mxu0 0.0
    %2619 = vmatprep.subr.mxu0 0.0
    %2620 = vmatpush2.msra.mxu0 0.0
    %2621 = vmatprep.subr.mxu0 0.0
    %2622 = vmatpush2.msra.mxu0 0.0
    %2623 = vmatprep.subr.mxu0 0.0
    %2624 = vmatpush2.msra.mxu0 0.0
    %2625 = vmatprep.subr.mxu0 0.0
    %2626 = vmatpush2.msra.mxu0 0.0
    %2627 = vmatprep.subr.mxu0 0.0
    %2628 = vmatpush2.msra.mxu0 0.0
    %2629 = vmatprep.mubr.f32.mxu0 0.0
    %2630 = vmatmul.mubr.f32.gmra.mxu0 %v2563
    %v2631 = vpop.f32.mrf.mxu0
    %v2632 = vadd.f32 0.0, %v2631
    %v2633 = vpop.f32.mrf.mxu0
    %2634 = vdwg.mxu0
    %s2635 = scalar_lea.vmem [#allocation7], 6
    %v2636 = vld [vmem:[%s2635] sm:$0x3]
    %v2639 = vrot.slane %v2632, 7
    %v2640 = vsel %vm313, %v2639, %v2543
    %v2641 = vsel %vm130, %v2640, 0
    %2643 = vmatprep.subr.mxu0 0.0
    %2644 = vmatpush1.msra.mxu0 0.0
    %2645 = vmatprep.subr.mxu0 0.0
    %2646 = vmatpush1.msra.mxu0 0.0
    %2647 = vmatprep.subr.mxu0 0.0
    %2648 = vmatpush1.msra.mxu0 0.0
    %2649 = vmatprep.subr.mxu0 0.0
    %2650 = vmatpush1.msra.mxu0 0.0
    %2651 = vmatprep.subr.mxu0 0.0
    %2652 = vmatpush1.msra.mxu0 0.0
    %2653 = vmatprep.subr.mxu0 0.0
    %2654 = vmatpush1.msra.mxu0 0.0
    %2655 = vmatprep.subr.mxu0 0.0
    %2656 = vmatpush1.msra.mxu0 0.0
    %2657 = vmatprep.subr.mxu0 0.0
    %2658 = vmatpush1.msra.mxu0 0.0
    %2659 = vmatprep.subr.mxu0 0.0
    %2660 = vmatpush1.msra.mxu0 0.0
    %2661 = vmatprep.subr.mxu0 0.0
    %2662 = vmatpush1.msra.mxu0 0.0
    %2663 = vmatprep.subr.mxu0 0.0
    %2664 = vmatpush1.msra.mxu0 0.0
    %2665 = vmatprep.subr.mxu0 0.0
    %2666 = vmatpush1.msra.mxu0 0.0
    %2667 = vmatprep.subr.mxu0 0.0
    %2668 = vmatpush1.msra.mxu0 %v122
    %2669 = vmatprep.subr.mxu0 0.0
    %2670 = vmatpush1.msra.mxu0 %v121
    %2671 = vmatprep.subr.mxu0 0.0
    %2672 = vmatpush1.msra.mxu0 %v120
    %2673 = vmatprep.subr.mxu0 0.0
    %2674 = vmatpush1.msra.mxu0 %v119
    %2675 = vmatprep.subr.mxu0 0.0
    %2676 = vmatpush2.msra.mxu0 0.0
    %2677 = vmatprep.subr.mxu0 0.0
    %2678 = vmatpush2.msra.mxu0 0.0
    %2679 = vmatprep.subr.mxu0 0.0
    %2680 = vmatpush2.msra.mxu0 0.0
    %2681 = vmatprep.subr.mxu0 0.0
    %2682 = vmatpush2.msra.mxu0 0.0
    %2683 = vmatprep.subr.mxu0 0.0
    %2684 = vmatpush2.msra.mxu0 0.0
    %2685 = vmatprep.subr.mxu0 0.0
    %2686 = vmatpush2.msra.mxu0 0.0
    %2687 = vmatprep.subr.mxu0 0.0
    %2688 = vmatpush2.msra.mxu0 0.0
    %2689 = vmatprep.subr.mxu0 0.0
    %2690 = vmatpush2.msra.mxu0 0.0
    %2691 = vmatprep.subr.mxu0 0.0
    %2692 = vmatpush2.msra.mxu0 0.0
    %2693 = vmatprep.subr.mxu0 0.0
    %2694 = vmatpush2.msra.mxu0 0.0
    %2695 = vmatprep.subr.mxu0 0.0
    %2696 = vmatpush2.msra.mxu0 0.0
    %2697 = vmatprep.subr.mxu0 0.0
    %2698 = vmatpush2.msra.mxu0 0.0
    %2699 = vmatprep.subr.mxu0 0.0
    %2700 = vmatpush2.msra.mxu0 0.0
    %2701 = vmatprep.subr.mxu0 0.0
    %2702 = vmatpush2.msra.mxu0 0.0
    %2703 = vmatprep.subr.mxu0 0.0
    %2704 = vmatpush2.msra.mxu0 0.0
    %2705 = vmatprep.subr.mxu0 0.0
    %2706 = vmatpush2.msra.mxu0 0.0
    %2707 = vmatprep.mubr.f32.mxu0 0.0
    %2708 = vmatmul.mubr.f32.gmra.mxu0 %v2641
    %v2709 = vpop.f32.mrf.mxu0
    %v2710 = vadd.f32 %v2636, %v2709
    %v2711 = vpop.f32.mrf.mxu0
    %2712 = vdwg.mxu0
    %2714 = vrot.lane.b32.xlu0 %v2290, 96
    %v2715 = vpop.permute.xlu0 %2714
    %v2717 = vadd.f32 %v2710, %v2715
    %v2718 = vxor.u32 %v2717, 2147483648
    %v2719 = vmul.f32 %v2718, 1.442695
    %v2720 = vpow.pop %v2719
    %v2721 = vadd.f32 %v2720, 1.0
    %v2722 = vrcp.pop %v2721
    %v2723 = vmul.f32 1.0, %v2722
    %2724 = vrot.lane.b32.xlu0 %v2290, 32
    %v2725 = vpop.permute.xlu0 %2724
    %v2727 = vmul.f32 %v2723, %v2725
    %2729 = vrot.lane.b32.xlu0 %v2727, 64
    %v2730 = vpop.permute.xlu0 %2729
    %v2732 = vadd.f32 %v2710, %v2730
    %v2733 = vtanh.pop %v2732
    %v2734 = vsub.f32 1.0, %v2723
    %2736 = vrot.lane.b32.xlu0 %v2733, 96
    %v2737 = vpop.permute.xlu0 %2736
    %v2739 = vmul.f32 %v2734, %v2737
    %v2740 = vmul.f32 %v2723, %v2058
    %v2741 = vadd.f32 %v2739, %v2740
    %2743 = vrot.lane.b32.xlu0 %v2741, 96
    %v2744 = vpop.permute.xlu0 %2743
    %v2745 = vsel %vm130, %v2744, 0
    %2747 = vmatprep.subr.mxu0 0.0
    %2748 = vmatpush1.msra.mxu0 0.0
    %2749 = vmatprep.subr.mxu0 0.0
    %2750 = vmatpush1.msra.mxu0 0.0
    %2751 = vmatprep.subr.mxu0 0.0
    %2752 = vmatpush1.msra.mxu0 0.0
    %2753 = vmatprep.subr.mxu0 0.0
    %2754 = vmatpush1.msra.mxu0 0.0
    %2755 = vmatprep.subr.mxu0 0.0
    %2756 = vmatpush1.msra.mxu0 0.0
    %2757 = vmatprep.subr.mxu0 0.0
    %2758 = vmatpush1.msra.mxu0 0.0
    %2759 = vmatprep.subr.mxu0 0.0
    %2760 = vmatpush1.msra.mxu0 0.0
    %2761 = vmatprep.subr.mxu0 0.0
    %2762 = vmatpush1.msra.mxu0 0.0
    %2763 = vmatprep.subr.mxu0 0.0
    %2764 = vmatpush1.msra.mxu0 0.0
    %2765 = vmatprep.subr.mxu0 0.0
    %2766 = vmatpush1.msra.mxu0 0.0
    %2767 = vmatprep.subr.mxu0 0.0
    %2768 = vmatpush1.msra.mxu0 0.0
    %2769 = vmatprep.subr.mxu0 0.0
    %2770 = vmatpush1.msra.mxu0 0.0
    %2771 = vmatprep.subr.mxu0 0.0
    %2772 = vmatpush1.msra.mxu0 %v117
    %2773 = vmatprep.subr.mxu0 0.0
    %2774 = vmatpush1.msra.mxu0 %v114
    %2775 = vmatprep.subr.mxu0 0.0
    %2776 = vmatpush1.msra.mxu0 %v111
    %2777 = vmatprep.subr.mxu0 0.0
    %2778 = vmatpush1.msra.mxu0 %v108
    %2779 = vmatprep.subr.mxu0 0.0
    %2780 = vmatpush2.msra.mxu0 0.0
    %2781 = vmatprep.subr.mxu0 0.0
    %2782 = vmatpush2.msra.mxu0 0.0
    %2783 = vmatprep.subr.mxu0 0.0
    %2784 = vmatpush2.msra.mxu0 0.0
    %2785 = vmatprep.subr.mxu0 0.0
    %2786 = vmatpush2.msra.mxu0 0.0
    %2787 = vmatprep.subr.mxu0 0.0
    %2788 = vmatpush2.msra.mxu0 0.0
    %2789 = vmatprep.subr.mxu0 0.0
    %2790 = vmatpush2.msra.mxu0 0.0
    %2791 = vmatprep.subr.mxu0 0.0
    %2792 = vmatpush2.msra.mxu0 0.0
    %2793 = vmatprep.subr.mxu0 0.0
    %2794 = vmatpush2.msra.mxu0 0.0
    %2795 = vmatprep.subr.mxu0 0.0
    %2796 = vmatpush2.msra.mxu0 0.0
    %2797 = vmatprep.subr.mxu0 0.0
    %2798 = vmatpush2.msra.mxu0 0.0
    %2799 = vmatprep.subr.mxu0 0.0
    %2800 = vmatpush2.msra.mxu0 0.0
    %2801 = vmatprep.subr.mxu0 0.0
    %2802 = vmatpush2.msra.mxu0 0.0
    %2803 = vmatprep.subr.mxu0 0.0
    %2804 = vmatpush2.msra.mxu0 0.0
    %2805 = vmatprep.subr.mxu0 0.0
    %2806 = vmatpush2.msra.mxu0 0.0
    %2807 = vmatprep.subr.mxu0 0.0
    %2808 = vmatpush2.msra.mxu0 0.0
    %2809 = vmatprep.subr.mxu0 0.0
    %2810 = vmatpush2.msra.mxu0 0.0
    %2811 = vmatprep.mubr.f32.mxu0 0.0
    %2812 = vmatmul.mubr.f32.gmra.mxu0 %v2745
    %v2813 = vpop.f32.mrf.mxu0
    %v2814 = vadd.f32 0.0, %v2813
    %v2815 = vpop.f32.mrf.mxu0
    %2816 = vdwg.mxu0
    %v2817 = vadd.f32 %v2814, %v764
    %v2818 = vmax.f32 %v2817, 0.0
    %v2820 = vsel %vm130, %v2818, 0
    %2822 = vmatprep.subr.mxu0 0.0
    %2823 = vmatpush1.msra.mxu0 0.0
    %2824 = vmatprep.subr.mxu0 0.0
    %2825 = vmatpush1.msra.mxu0 0.0
    %2826 = vmatprep.subr.mxu0 0.0
    %2827 = vmatpush1.msra.mxu0 0.0
    %2828 = vmatprep.subr.mxu0 0.0
    %2829 = vmatpush1.msra.mxu0 0.0
    %2830 = vmatprep.subr.mxu0 0.0
    %2831 = vmatpush1.msra.mxu0 0.0
    %2832 = vmatprep.subr.mxu0 0.0
    %2833 = vmatpush1.msra.mxu0 0.0
    %2834 = vmatprep.subr.mxu0 0.0
    %2835 = vmatpush1.msra.mxu0 0.0
    %2836 = vmatprep.subr.mxu0 0.0
    %2837 = vmatpush1.msra.mxu0 0.0
    %2838 = vmatprep.subr.mxu0 0.0
    %2839 = vmatpush1.msra.mxu0 0.0
    %2840 = vmatprep.subr.mxu0 0.0
    %2841 = vmatpush1.msra.mxu0 0.0
    %2842 = vmatprep.subr.mxu0 0.0
    %2843 = vmatpush1.msra.mxu0 0.0
    %2844 = vmatprep.subr.mxu0 0.0
    %2845 = vmatpush1.msra.mxu0 0.0
    %2846 = vmatprep.subr.mxu0 0.0
    %2847 = vmatpush1.msra.mxu0 %v118
    %2848 = vmatprep.subr.mxu0 0.0
    %2849 = vmatpush1.msra.mxu0 %v115
    %2850 = vmatprep.subr.mxu0 0.0
    %2851 = vmatpush1.msra.mxu0 %v112
    %2852 = vmatprep.subr.mxu0 0.0
    %2853 = vmatpush1.msra.mxu0 %v109
    %2854 = vmatprep.subr.mxu0 0.0
    %2855 = vmatpush2.msra.mxu0 0.0
    %2856 = vmatprep.subr.mxu0 0.0
    %2857 = vmatpush2.msra.mxu0 0.0
    %2858 = vmatprep.subr.mxu0 0.0
    %2859 = vmatpush2.msra.mxu0 0.0
    %2860 = vmatprep.subr.mxu0 0.0
    %2861 = vmatpush2.msra.mxu0 0.0
    %2862 = vmatprep.subr.mxu0 0.0
    %2863 = vmatpush2.msra.mxu0 0.0
    %2864 = vmatprep.subr.mxu0 0.0
    %2865 = vmatpush2.msra.mxu0 0.0
    %2866 = vmatprep.subr.mxu0 0.0
    %2867 = vmatpush2.msra.mxu0 0.0
    %2868 = vmatprep.subr.mxu0 0.0
    %2869 = vmatpush2.msra.mxu0 0.0
    %2870 = vmatprep.subr.mxu0 0.0
    %2871 = vmatpush2.msra.mxu0 0.0
    %2872 = vmatprep.subr.mxu0 0.0
    %2873 = vmatpush2.msra.mxu0 0.0
    %2874 = vmatprep.subr.mxu0 0.0
    %2875 = vmatpush2.msra.mxu0 0.0
    %2876 = vmatprep.subr.mxu0 0.0
    %2877 = vmatpush2.msra.mxu0 0.0
    %2878 = vmatprep.subr.mxu0 0.0
    %2879 = vmatpush2.msra.mxu0 0.0
    %2880 = vmatprep.subr.mxu0 0.0
    %2881 = vmatpush2.msra.mxu0 0.0
    %2882 = vmatprep.subr.mxu0 0.0
    %2883 = vmatpush2.msra.mxu0 0.0
    %2884 = vmatprep.subr.mxu0 0.0
    %2885 = vmatpush2.msra.mxu0 0.0
    %2886 = vmatprep.mubr.f32.mxu0 0.0
    %2887 = vmatmul.mubr.f32.gmra.mxu0 %v2820
    %v2888 = vpop.f32.mrf.mxu0
    %v2889 = vadd.f32 0.0, %v2888
    %v2890 = vpop.f32.mrf.mxu0
    %2891 = vdwg.mxu0
    %v2892 = vadd.f32 %v2889, %v843
    %s2893 = scalar_lea.vmem [#allocation11], 6
    %2894 = vst.msk [vmem:[%s2893] sm:$0x3] %vm845, %v2892
    %s2896 = scalar_lea.vmem [#allocation12], 6
    %2897 = vst.msk [vmem:[%s2896] sm:$0x3] %vm848, %v2744
    %v2898 = vsel %vm313, %v2562, %v2473
    %s2900 = scalar_lea.vmem [#allocation14], 6
    %2901 = vst.msk [vmem:[%s2900] sm:$0x3] %vm316, %v2898
    // Predicated region
    $region50: #{tpu_custom_call.1} parent=1 // pred_check
      _
    $region51: #{tpu_custom_call.1} parent=1 // pred_check_branch
      %2903 = sbr.rel (0) target = $region53
    $region52: #{tpu_custom_call.1} parent=1 // pred_region
      %s2905 = ssub.s32 128, 128
      %2906 = vsyncadd [#allocation4], %s2905
      %s2907 = sshll.u32 [#allocation11], 4
      %s2908 = int_to_ptr.vmem [resolvable:$true] %s2907
      %2913 = dma.vmem_to_hbm [thread:$0]  %s2908, 128, %s7, [#allocation4], 32, 32, 2
    $region53: #{tpu_custom_call.1} parent=1 // pred_fallthru
      _
    // Predicated region
    $region54: #{tpu_custom_call.1} parent=1 // pred_check
      _
    $region55: #{tpu_custom_call.1} parent=1 // pred_check_branch
      %2915 = sbr.rel (0) target = $region57
    $region56: #{tpu_custom_call.1} parent=1 // pred_region
      %s2917 = ssub.s32 128, 128
      %2918 = vsyncadd [#allocation13], %s2917
      %s2919 = sshll.u32 [#allocation12], 4
      %s2920 = int_to_ptr.vmem [resolvable:$true] %s2919
      %2925 = dma.vmem_to_hbm [thread:$0]  %s2920, 128, %s8, [#allocation13], 32, 32, 2
    $region57: #{tpu_custom_call.1} parent=1 // pred_fallthru
      _
    // Predicated region
    $region58: #{tpu_custom_call.1} parent=1 // pred_check
      _
    $region59: #{tpu_custom_call.1} parent=1 // pred_check_branch
      %2927 = sbr.rel (0) target = $region61
    $region60: #{tpu_custom_call.1} parent=1 // pred_region
      %s2929 = ssub.s32 128, 128
      %2930 = vsyncadd [#allocation13], %s2929
      %s2931 = sshll.u32 [#allocation14], 4
      %s2932 = int_to_ptr.vmem [resolvable:$true] %s2931
      %2937 = dma.vmem_to_hbm [thread:$0]  %s2932, 128, %s9, [#allocation13], 32, 32, 2
    $region61: #{tpu_custom_call.1} parent=1 // pred_fallthru
      _
    // Predicated region
    $region62: #{tpu_custom_call.1} parent=1 // pred_check
      _
    $region63: #{tpu_custom_call.1} parent=1 // pred_check_branch
      %2939 = sbr.rel (0) target = $region65
    $region64: #{tpu_custom_call.1} parent=1 // pred_region
      %2940 = dma.done [#allocation4], 128
    $region65: #{tpu_custom_call.1} parent=1 // pred_fallthru
      _
    // Predicated region
    $region66: #{tpu_custom_call.1} parent=1 // pred_check
      _
    $region67: #{tpu_custom_call.1} parent=1 // pred_check_branch
      %2942 = sbr.rel (0) target = $region69
    $region68: #{tpu_custom_call.1} parent=1 // pred_region
      %2943 = dma.done [#allocation13], 128
    $region69: #{tpu_custom_call.1} parent=1 // pred_fallthru
      _
    // Predicated region
    $region70: #{tpu_custom_call.1} parent=1 // pred_check
      _
    $region71: #{tpu_custom_call.1} parent=1 // pred_check_branch
      %2945 = sbr.rel (0) target = $region73
    $region72: #{tpu_custom_call.1} parent=1 // pred_region
      %2946 = dma.done [#allocation13], 128
    $region73: #{tpu_custom_call.1} parent=1 // pred_fallthru
      _
    %2947 = vsyncpa [#allocation3], 1
    %2948 = vsyncpa [#allocation6], 1
    %2949 = vsyncpa [#allocation9], 1
    %2950 = vsyncpa [#allocation4], 1
    %2951 = vsyncpa [#allocation13], 1

</llo_original>
